<compile_context>
chip_gen: v5e
topology: v5e:2x2
jax: 0.10.0
libtpu: 0.0.40
codegen_flags: <defaults>
</compile_context>

<pallas_src>
import numpy as np
import jax
import jax.numpy as jnp
from jax import lax
from jax.experimental import pallas as pl
from jax.experimental.pallas import tpu as pltpu

GRAY_W = (0.114, 0.587, 0.299)   # weights for (b, g, r); channel_input='bgr'
HIDDEN = 64                      # hidden_channel_num
OUT_DIM = 512                    # ResNet2D hidden_channels[-1]
KT, KH, KW = 5, 7, 7             # Conv3d kernel; stride (1, 2, 2); pad (2, 3, 3)
NTAPS2D = KH * KW                # 49 spatial taps per temporal tap
QROWS = 64                       # 49 -> 64 rows: sublane-aligned Q slabs
TT = 8                           # output frames processed per grid step
NEG = -1.0e30                    # "-inf" for excluded maxpool neighbours


# --------------------------------------------------------------------------- #
# Fused kernel: Conv3d (MXU) + BN + ReLU + MaxPool3d + GAP + 64->512 proj      #
# --------------------------------------------------------------------------- #
def _make_kernel(Tt, Wo, mpad):
    def kernel(xs_ref, w_ref, wp_ref, bias_ref, msk_ref, o_ref, g_scr):
        # Resident small operands (hoisted out of the frame loop).
        msk = msk_ref[...]                      # (3, mpad) f32
        left_neg = msk[0:1, :]                  # -1e30 where wo == 0
        up_neg = msk[1:2, :]                    # -1e30 where ho == 0
        cscale = msk[2:3, :]                    # 1/(Hp*Wp) at pool centres else 0
        bias = bias_ref[...]                    # (64, 1) folded BN shift
        wk = [w_ref[kt] for kt in range(KT)]    # 5 x (64, 64) bf16

        for j in range(Tt):
            # Conv3d as sum over kt of (64,64)x(64,mpad) bf16 MXU matmuls on
            # prebuilt Q slabs (each slab reused by up to KT output frames).
            acc = jnp.dot(wk[0], xs_ref[j], preferred_element_type=jnp.float32)
            for kt in range(1, KT):
                acc = acc + jnp.dot(wk[kt], xs_ref[j + kt],
                                    preferred_element_type=jnp.float32)

            # MaxPool3d (1,3,3)/(1,2,2)/pad (0,1,1): only even (ho, wo) pool
            # centres feed the GAP; out-of-image neighbours are excluded with
            # precomputed -1e30 masks (no in-kernel iota / div / mod).
            mw = jnp.maximum(acc, pltpu.roll(acc, mpad - 1, 1))       # wo + 1
            mw = jnp.maximum(mw, pltpu.roll(acc, 1, 1) + left_neg)    # wo - 1
            mh = jnp.maximum(mw, pltpu.roll(mw, mpad - Wo, 1))        # ho + 1
            mh = jnp.maximum(mh, pltpu.roll(mw, Wo, 1) + up_neg)      # ho - 1
            # BN shift + ReLU commute with the per-channel max.
            pooled = jnp.maximum(mh + bias, 0.0)
            # Global average pool over the Hp*Wp pool centres -> (64,)
            g_scr[j, :] = jnp.sum(pooled * cscale, axis=1)

        # Fused 64 -> 512 projection; lane-dense (Tt, 512) output block.
        o_ref[...] = jnp.dot(g_scr[...], wp_ref[...],
                             preferred_element_type=jnp.float32)

    return kernel


# --------------------------------------------------------------------------- #
# Full forward                                                                 #
# --------------------------------------------------------------------------- #
def video_frontend(x, x_len, params, crop):
    """x: (B, T, H, W, 3) f32 'bgr' video -> ((B, T, 512) f32, x_len)."""
    B, T, H, W, C = x.shape
    assert C == 3 and crop % 4 == 0  # even Ho/Wo needed by the pooling masks

    # ---- XLA prep: grayscale + CenterCrop + zero pad + im2col Q slabs ------
    top = int(round((H - crop) / 2.0))
    left = int(round((W - crop) / 2.0))
    xc = x[:, :, top:top + crop, left:left + crop, :]
    gray = (GRAY_W[0] * xc[..., 0] + GRAY_W[1] * xc[..., 1]
            + GRAY_W[2] * xc[..., 2])                       # (B, T, crop, crop)

    Tt = TT
    nT = -(-T // Tt)
    T_eff = nT * Tt
    gray = jnp.pad(gray, ((0, 0), (0, T_eff - T), (0, 0), (0, 0)))
    gp = jnp.pad(gray, ((0, 0), (2, 2), (3, 3), (3, 3)))    # Conv3d zero pad
    Tp, Hpad = T_eff + 4, crop + 6
    Ho = (Hpad - KH) // 2 + 1
    Wo = (Hpad - KW) // 2 + 1
    Hp, Wp = Ho // 2, Wo // 2
    mvalid = Ho * Wo
    mpad = -(-mvalid // 128) * 128

    # Q[b, tp, kh*KW+kw, ho*Wo+wo] = gp[b, tp, 2*ho+kh, 2*wo+kw]
    slabs = [gp[:, :, kh:kh + 2 * Ho:2, kw:kw + 2 * Wo:2].reshape(B, Tp, mvalid)
             for kh in range(KH) for kw in range(KW)]
    q = jnp.stack(slabs, axis=2)                            # (B, Tp, 49, mvalid)
    q = jnp.pad(q, ((0, 0), (0, 0), (0, QROWS - NTAPS2D), (0, mpad - mvalid)))
    q = q.astype(jnp.bfloat16)
    # Halo-duplicated time windows: block i needs frames i*Tt .. i*Tt + Tt+3.
    idx = jnp.arange(nT)[:, None] * Tt + jnp.arange(Tt + KT - 1)[None, :]
    xs = q[:, idx]                                          # (B, nT, Tt+4, 64, mpad)

    # Conv weight (O,1,KT,KH,KW): BN scale folded, per-kt (64,64) bf16 slabs.
    w = params["wconv"][:, 0] * params["bn_scale"][:, None, None, None]
    w = jnp.transpose(w, (1, 0, 2, 3)).reshape(KT, HIDDEN, NTAPS2D)
    w = jnp.pad(w, ((0, 0), (0, 0), (0, QROWS - NTAPS2D))).astype(jnp.bfloat16)
    bias = params["bn_bias"].reshape(HIDDEN, 1).astype(jnp.float32)
    wproj = params["wproj"].astype(jnp.float32)

    # Precomputed pooling masks (tiny resident input; no per-step iota work).
    m = np.arange(mpad)
    wo_i, ho_i = m % Wo, m // Wo
    left_neg = np.where(wo_i == 0, NEG, 0.0)
    up_neg = np.where(ho_i == 0, NEG, 0.0)
    center = (m < mvalid) & (wo_i % 2 == 0) & (ho_i % 2 == 0)
    cscale = np.where(center, 1.0 / (Hp * Wp), 0.0)
    masks = jnp.asarray(np.stack([left_neg, up_neg, cscale]), jnp.float32)

    kernel = _make_kernel(Tt, Wo, mpad)
    out = pl.pallas_call(
        kernel,
        out_shape=jax.ShapeDtypeStruct((B, T_eff, OUT_DIM), jnp.float32),
        grid=(B, nT),
        in_specs=[
            pl.BlockSpec((None, None, Tt + KT - 1, QROWS, mpad),
                         lambda b, i: (b, i, 0, 0, 0)),
            pl.BlockSpec((KT, HIDDEN, QROWS), lambda b, i: (0, 0, 0)),
            pl.BlockSpec((HIDDEN, OUT_DIM), lambda b, i: (0, 0)),
            pl.BlockSpec((HIDDEN, 1), lambda b, i: (0, 0)),
            pl.BlockSpec((3, mpad), lambda b, i: (0, 0)),
        ],
        out_specs=pl.BlockSpec((None, Tt, OUT_DIM), lambda b, i: (b, i, 0)),
        scratch_shapes=[pltpu.VMEM((Tt, HIDDEN), jnp.float32)],
        compiler_params=pltpu.CompilerParams(
            dimension_semantics=("parallel", "parallel"),
            vmem_limit_bytes=32 * 1024 * 1024),
    )(xs, w, wproj, bias, masks)

    return out[:, :T], x_len                # downsampling=False: lengths unchanged


def init_params(key):
    k1, k2, k3, k4, k5, k6 = jax.random.split(key, 6)
    # torch Conv3d weight layout (O, I=1, D, H, W)
    wconv = 0.05 * jax.random.normal(k1, (HIDDEN, 1, KT, KH, KW), jnp.float32)
    gamma = 1.0 + 0.1 * jax.random.normal(k2, (HIDDEN,), jnp.float32)
    beta = 0.1 * jax.random.normal(k3, (HIDDEN,), jnp.float32)
    rmean = 0.1 * jax.random.normal(k4, (HIDDEN,), jnp.float32)
    rvar = 1.0 + jax.random.uniform(k5, (HIDDEN,), jnp.float32)
    eps = 1e-5
    scale = gamma / jnp.sqrt(rvar + eps)
    bias = beta - rmean * scale
    wproj = 0.1 * jax.random.normal(k6, (HIDDEN, OUT_DIM), jnp.float32)
    return dict(wconv=wconv, bn_scale=scale, bn_bias=bias, wproj=wproj)


def reference(x, params, crop):
    """Plain-JAX reference with identical (eval-mode) semantics."""
    B, T, H, W, _ = x.shape
    gray = (GRAY_W[0] * x[..., 0] + GRAY_W[1] * x[..., 1]
            + GRAY_W[2] * x[..., 2])
    top = int(round((H - crop) / 2.0))
    left = int(round((W - crop) / 2.0))
    gray = gray[:, :, top:top + crop, left:left + crop]
    conv = lax.conv_general_dilated(
        gray[:, None], params["wconv"], window_strides=(1, 2, 2),
        padding=((2, 2), (3, 3), (3, 3)),
        dimension_numbers=("NCDHW", "OIDHW", "NCDHW"),
        precision=lax.Precision.HIGHEST)
    s = params["bn_scale"][None, :, None, None, None]
    b = params["bn_bias"][None, :, None, None, None]
    r = jnp.maximum(conv * s + b, 0.0)
    pooled = lax.reduce_window(r, -jnp.inf, lax.max,
                               (1, 1, 1, 3, 3), (1, 1, 1, 2, 2),
                               ((0, 0), (0, 0), (0, 0), (1, 1), (1, 1)))
    N = B * T
    pooled = jnp.transpose(pooled, (0, 2, 1, 3, 4)).reshape(N, HIDDEN, -1)
    gap = pooled.mean(axis=2)
    proj = jnp.dot(gap, params["wproj"], precision=lax.Precision.HIGHEST)
    return proj.reshape(B, T, OUT_DIM)


if __name__ == "__main__":
    key = jax.random.PRNGKey(0)
    kx, kp = jax.random.split(key)
    # small stand-ins for the real (B, T, 88, 88, 3) -> crop 80 shapes
    B, T, H, W, crop = 2, 8, 20, 20, 16
    x = jax.random.uniform(kx, (B, T, H, W, 3), jnp.float32)
    x_len = jnp.array([T, T - 2], jnp.int32)
    params = init_params(kp)

    fwd = jax.jit(video_frontend, static_argnames=("crop",))
    out, out_len = fwd(x, x_len, params, crop=crop)
    out = jax.block_until_ready(out)
    assert out.shape == (B, T, OUT_DIM) and out_len.shape == (B,)

    ref = reference(x, params, crop)
    np.testing.assert_allclose(np.asarray(out), np.asarray(ref),
                               rtol=1e-2, atol=1e-2)
    print("KERNEL_OK")
</pallas_src>

<mosaic_0001>
module attributes {stable_mosaic.version = 11 : i64} {
  func.func @kernel(%arg0: i32, %arg1: i32, %arg2: memref<1x1x12x64x128xbf16, #tpu.memory_space<vmem>>, %arg3: memref<5x64x64xbf16, #tpu.memory_space<vmem>>, %arg4: memref<64x512xf32, #tpu.memory_space<vmem>>, %arg5: memref<64x1xf32, #tpu.memory_space<vmem>>, %arg6: memref<3x128xf32, #tpu.memory_space<vmem>>, %arg7: memref<1x8x512xf32, #tpu.memory_space<vmem>>, %arg8: memref<8x64xf32, #tpu.memory_space<vmem>>) attributes {dimension_semantics = [#tpu.dimension_semantics<parallel>, #tpu.dimension_semantics<parallel>], iteration_bounds = array<i64: 2, 1>, scalar_prefetch = 0 : i64, scratch_operands = 1 : i64, tpu.core_type = #tpu.core_type<tc>, window_params = [{transform_indices = @transform_0, window_bounds = array<i64: 1, 1, 12, 64, 128>}, {pipeline_mode = #tpu.pipeline_mode<synchronous>, transform_indices = @transform_1, window_bounds = array<i64: 5, 64, 64>}, {pipeline_mode = #tpu.pipeline_mode<synchronous>, transform_indices = @transform_2, window_bounds = array<i64: 64, 512>}, {pipeline_mode = #tpu.pipeline_mode<synchronous>, transform_indices = @transform_3, window_bounds = array<i64: 64, 1>}, {pipeline_mode = #tpu.pipeline_mode<synchronous>, transform_indices = @transform_4, window_bounds = array<i64: 3, 128>}, {transform_indices = @transform_5, window_bounds = array<i64: 1, 8, 512>}]} {
    %c0 = arith.constant 0 : index
    %c0_0 = arith.constant 0 : index
    %0 = vector.load %arg6[%c0, %c0_0] : memref<3x128xf32, #tpu.memory_space<vmem>>, vector<3x128xf32>
    %1 = vector.extract_strided_slice %0 {offsets = [0, 0], sizes = [1, 128], strides = [1, 1]} : vector<3x128xf32> to vector<1x128xf32>
    %2 = vector.extract_strided_slice %0 {offsets = [1, 0], sizes = [1, 128], strides = [1, 1]} : vector<3x128xf32> to vector<1x128xf32>
    %3 = vector.extract_strided_slice %0 {offsets = [2, 0], sizes = [1, 128], strides = [1, 1]} : vector<3x128xf32> to vector<1x128xf32>
    %c0_1 = arith.constant 0 : index
    %c0_2 = arith.constant 0 : index
    %4 = vector.load %arg5[%c0_1, %c0_2] : memref<64x1xf32, #tpu.memory_space<vmem>>, vector<64x1xf32>
    %c0_3 = arith.constant 0 : index
    %c0_4 = arith.constant 0 : index
    %c0_5 = arith.constant 0 : index
    %5 = vector.load %arg3[%c0_3, %c0_4, %c0_5] : memref<5x64x64xbf16, #tpu.memory_space<vmem>>, vector<1x64x64xbf16>
    %6 = vector.shape_cast %5 : vector<1x64x64xbf16> to vector<64x64xbf16>
    %c1 = arith.constant 1 : index
    %c0_6 = arith.constant 0 : index
    %c0_7 = arith.constant 0 : index
    %7 = vector.load %arg3[%c1, %c0_6, %c0_7] : memref<5x64x64xbf16, #tpu.memory_space<vmem>>, vector<1x64x64xbf16>
    %8 = vector.shape_cast %7 : vector<1x64x64xbf16> to vector<64x64xbf16>
    %c2 = arith.constant 2 : index
    %c0_8 = arith.constant 0 : index
    %c0_9 = arith.constant 0 : index
    %9 = vector.load %arg3[%c2, %c0_8, %c0_9] : memref<5x64x64xbf16, #tpu.memory_space<vmem>>, vector<1x64x64xbf16>
    %10 = vector.shape_cast %9 : vector<1x64x64xbf16> to vector<64x64xbf16>
    %c3 = arith.constant 3 : index
    %c0_10 = arith.constant 0 : index
    %c0_11 = arith.constant 0 : index
    %11 = vector.load %arg3[%c3, %c0_10, %c0_11] : memref<5x64x64xbf16, #tpu.memory_space<vmem>>, vector<1x64x64xbf16>
    %12 = vector.shape_cast %11 : vector<1x64x64xbf16> to vector<64x64xbf16>
    %c4 = arith.constant 4 : index
    %c0_12 = arith.constant 0 : index
    %c0_13 = arith.constant 0 : index
    %13 = vector.load %arg3[%c4, %c0_12, %c0_13] : memref<5x64x64xbf16, #tpu.memory_space<vmem>>, vector<1x64x64xbf16>
    %14 = vector.shape_cast %13 : vector<1x64x64xbf16> to vector<64x64xbf16>
    %c0_14 = arith.constant 0 : index
    %c0_15 = arith.constant 0 : index
    %c0_16 = arith.constant 0 : index
    %c0_17 = arith.constant 0 : index
    %c0_18 = arith.constant 0 : index
    %15 = vector.load %arg2[%c0_14, %c0_15, %c0_16, %c0_17, %c0_18] : memref<1x1x12x64x128xbf16, #tpu.memory_space<vmem>>, vector<1x1x1x64x128xbf16>
    %16 = vector.shape_cast %15 : vector<1x1x1x64x128xbf16> to vector<64x128xbf16>
    %cst = arith.constant dense<0.000000e+00> : vector<64x128xf32>
    %17 = tpu.matmul %6, %16, %cst {dimension_numbers = #tpu.dot_dimension_numbers<[1], [0], [0], [1], [0, 0, 1, 1], [], []>} : vector<64x64xbf16>, vector<64x128xbf16>, vector<64x128xf32> -> vector<64x128xf32>
    %c0_19 = arith.constant 0 : index
    %c0_20 = arith.constant 0 : index
    %c1_21 = arith.constant 1 : index
    %c0_22 = arith.constant 0 : index
    %c0_23 = arith.constant 0 : index
    %18 = vector.load %arg2[%c0_19, %c0_20, %c1_21, %c0_22, %c0_23] : memref<1x1x12x64x128xbf16, #tpu.memory_space<vmem>>, vector<1x1x1x64x128xbf16>
    %19 = vector.shape_cast %18 : vector<1x1x1x64x128xbf16> to vector<64x128xbf16>
    %cst_24 = arith.constant dense<0.000000e+00> : vector<64x128xf32>
    %20 = tpu.matmul %8, %19, %cst_24 {dimension_numbers = #tpu.dot_dimension_numbers<[1], [0], [0], [1], [0, 0, 1, 1], [], []>} : vector<64x64xbf16>, vector<64x128xbf16>, vector<64x128xf32> -> vector<64x128xf32>
    %21 = arith.addf %17, %20 : vector<64x128xf32>
    %c0_25 = arith.constant 0 : index
    %c0_26 = arith.constant 0 : index
    %c2_27 = arith.constant 2 : index
    %c0_28 = arith.constant 0 : index
    %c0_29 = arith.constant 0 : index
    %22 = vector.load %arg2[%c0_25, %c0_26, %c2_27, %c0_28, %c0_29] : memref<1x1x12x64x128xbf16, #tpu.memory_space<vmem>>, vector<1x1x1x64x128xbf16>
    %23 = vector.shape_cast %22 : vector<1x1x1x64x128xbf16> to vector<64x128xbf16>
    %cst_30 = arith.constant dense<0.000000e+00> : vector<64x128xf32>
    %24 = tpu.matmul %10, %23, %cst_30 {dimension_numbers = #tpu.dot_dimension_numbers<[1], [0], [0], [1], [0, 0, 1, 1], [], []>} : vector<64x64xbf16>, vector<64x128xbf16>, vector<64x128xf32> -> vector<64x128xf32>
    %25 = arith.addf %21, %24 : vector<64x128xf32>
    %c0_31 = arith.constant 0 : index
    %c0_32 = arith.constant 0 : index
    %c3_33 = arith.constant 3 : index
    %c0_34 = arith.constant 0 : index
    %c0_35 = arith.constant 0 : index
    %26 = vector.load %arg2[%c0_31, %c0_32, %c3_33, %c0_34, %c0_35] : memref<1x1x12x64x128xbf16, #tpu.memory_space<vmem>>, vector<1x1x1x64x128xbf16>
    %27 = vector.shape_cast %26 : vector<1x1x1x64x128xbf16> to vector<64x128xbf16>
    %cst_36 = arith.constant dense<0.000000e+00> : vector<64x128xf32>
    %28 = tpu.matmul %12, %27, %cst_36 {dimension_numbers = #tpu.dot_dimension_numbers<[1], [0], [0], [1], [0, 0, 1, 1], [], []>} : vector<64x64xbf16>, vector<64x128xbf16>, vector<64x128xf32> -> vector<64x128xf32>
    %29 = arith.addf %25, %28 : vector<64x128xf32>
    %c0_37 = arith.constant 0 : index
    %c0_38 = arith.constant 0 : index
    %c4_39 = arith.constant 4 : index
    %c0_40 = arith.constant 0 : index
    %c0_41 = arith.constant 0 : index
    %30 = vector.load %arg2[%c0_37, %c0_38, %c4_39, %c0_40, %c0_41] : memref<1x1x12x64x128xbf16, #tpu.memory_space<vmem>>, vector<1x1x1x64x128xbf16>
    %31 = vector.shape_cast %30 : vector<1x1x1x64x128xbf16> to vector<64x128xbf16>
    %cst_42 = arith.constant dense<0.000000e+00> : vector<64x128xf32>
    %32 = tpu.matmul %14, %31, %cst_42 {dimension_numbers = #tpu.dot_dimension_numbers<[1], [0], [0], [1], [0, 0, 1, 1], [], []>} : vector<64x64xbf16>, vector<64x128xbf16>, vector<64x128xf32> -> vector<64x128xf32>
    %33 = arith.addf %29, %32 : vector<64x128xf32>
    %c127_i32 = arith.constant 127 : i32
    %34 = tpu.dynamic_rotate %33 by %c127_i32 dim 1 : vector<64x128xf32>, i32 -> vector<64x128xf32>
    %35 = arith.maximumf %33, %34 : vector<64x128xf32>
    %c1_i32 = arith.constant 1 : i32
    %36 = tpu.dynamic_rotate %33 by %c1_i32 dim 1 : vector<64x128xf32>, i32 -> vector<64x128xf32>
    %37 = vector.broadcast %1 : vector<1x128xf32> to vector<64x128xf32>
    %38 = arith.addf %36, %37 : vector<64x128xf32>
    %39 = arith.maximumf %35, %38 : vector<64x128xf32>
    %c120_i32 = arith.constant 120 : i32
    %40 = tpu.dynamic_rotate %39 by %c120_i32 dim 1 : vector<64x128xf32>, i32 -> vector<64x128xf32>
    %41 = arith.maximumf %39, %40 : vector<64x128xf32>
    %c8_i32 = arith.constant 8 : i32
    %42 = tpu.dynamic_rotate %39 by %c8_i32 dim 1 : vector<64x128xf32>, i32 -> vector<64x128xf32>
    %43 = vector.broadcast %2 : vector<1x128xf32> to vector<64x128xf32>
    %44 = arith.addf %42, %43 : vector<64x128xf32>
    %45 = arith.maximumf %41, %44 : vector<64x128xf32>
    %46 = vector.broadcast %4 : vector<64x1xf32> to vector<64x128xf32>
    %47 = arith.addf %45, %46 : vector<64x128xf32>
    %cst_43 = arith.constant 0.000000e+00 : f32
    %48 = vector.broadcast %cst_43 : f32 to vector<64x128xf32>
    %49 = arith.maximumf %47, %48 : vector<64x128xf32>
    %50 = vector.broadcast %3 : vector<1x128xf32> to vector<64x128xf32>
    %51 = arith.mulf %49, %50 : vector<64x128xf32>
    %cst_44 = arith.constant dense<0.000000e+00> : vector<64xf32>
    %52 = vector.multi_reduction <add>, %51, %cst_44 [1] : vector<64x128xf32> to vector<64xf32>
    %c0_45 = arith.constant 0 : index
    %c0_46 = arith.constant 0 : index
    %53 = vector.load %arg8[%c0_45, %c0_46] : memref<8x64xf32, #tpu.memory_space<vmem>>, vector<1x64xf32>
    %54 = vector.shape_cast %53 : vector<1x64xf32> to vector<64xf32>
    %55 = vector.shape_cast %52 : vector<64xf32> to vector<1x64xf32>
    tpu.vector_store %arg8[%c0_45, %c0_46], %55 {strides = array<i32>} : memref<8x64xf32, #tpu.memory_space<vmem>>, vector<1x64xf32>,
    %c0_47 = arith.constant 0 : index
    %c0_48 = arith.constant 0 : index
    %c1_49 = arith.constant 1 : index
    %c0_50 = arith.constant 0 : index
    %c0_51 = arith.constant 0 : index
    %56 = vector.load %arg2[%c0_47, %c0_48, %c1_49, %c0_50, %c0_51] : memref<1x1x12x64x128xbf16, #tpu.memory_space<vmem>>, vector<1x1x1x64x128xbf16>
    %57 = vector.shape_cast %56 : vector<1x1x1x64x128xbf16> to vector<64x128xbf16>
    %cst_52 = arith.constant dense<0.000000e+00> : vector<64x128xf32>
    %58 = tpu.matmul %6, %57, %cst_52 {dimension_numbers = #tpu.dot_dimension_numbers<[1], [0], [0], [1], [0, 0, 1, 1], [], []>} : vector<64x64xbf16>, vector<64x128xbf16>, vector<64x128xf32> -> vector<64x128xf32>
    %c0_53 = arith.constant 0 : index
    %c0_54 = arith.constant 0 : index
    %c2_55 = arith.constant 2 : index
    %c0_56 = arith.constant 0 : index
    %c0_57 = arith.constant 0 : index
    %59 = vector.load %arg2[%c0_53, %c0_54, %c2_55, %c0_56, %c0_57] : memref<1x1x12x64x128xbf16, #tpu.memory_space<vmem>>, vector<1x1x1x64x128xbf16>
    %60 = vector.shape_cast %59 : vector<1x1x1x64x128xbf16> to vector<64x128xbf16>
    %cst_58 = arith.constant dense<0.000000e+00> : vector<64x128xf32>
    %61 = tpu.matmul %8, %60, %cst_58 {dimension_numbers = #tpu.dot_dimension_numbers<[1], [0], [0], [1], [0, 0, 1, 1], [], []>} : vector<64x64xbf16>, vector<64x128xbf16>, vector<64x128xf32> -> vector<64x128xf32>
    %62 = arith.addf %58, %61 : vector<64x128xf32>
    %c0_59 = arith.constant 0 : index
    %c0_60 = arith.constant 0 : index
    %c3_61 = arith.constant 3 : index
    %c0_62 = arith.constant 0 : index
    %c0_63 = arith.constant 0 : index
    %63 = vector.load %arg2[%c0_59, %c0_60, %c3_61, %c0_62, %c0_63] : memref<1x1x12x64x128xbf16, #tpu.memory_space<vmem>>, vector<1x1x1x64x128xbf16>
    %64 = vector.shape_cast %63 : vector<1x1x1x64x128xbf16> to vector<64x128xbf16>
    %cst_64 = arith.constant dense<0.000000e+00> : vector<64x128xf32>
    %65 = tpu.matmul %10, %64, %cst_64 {dimension_numbers = #tpu.dot_dimension_numbers<[1], [0], [0], [1], [0, 0, 1, 1], [], []>} : vector<64x64xbf16>, vector<64x128xbf16>, vector<64x128xf32> -> vector<64x128xf32>
    %66 = arith.addf %62, %65 : vector<64x128xf32>
    %c0_65 = arith.constant 0 : index
    %c0_66 = arith.constant 0 : index
    %c4_67 = arith.constant 4 : index
    %c0_68 = arith.constant 0 : index
    %c0_69 = arith.constant 0 : index
    %67 = vector.load %arg2[%c0_65, %c0_66, %c4_67, %c0_68, %c0_69] : memref<1x1x12x64x128xbf16, #tpu.memory_space<vmem>>, vector<1x1x1x64x128xbf16>
    %68 = vector.shape_cast %67 : vector<1x1x1x64x128xbf16> to vector<64x128xbf16>
    %cst_70 = arith.constant dense<0.000000e+00> : vector<64x128xf32>
    %69 = tpu.matmul %12, %68, %cst_70 {dimension_numbers = #tpu.dot_dimension_numbers<[1], [0], [0], [1], [0, 0, 1, 1], [], []>} : vector<64x64xbf16>, vector<64x128xbf16>, vector<64x128xf32> -> vector<64x128xf32>
    %70 = arith.addf %66, %69 : vector<64x128xf32>
    %c0_71 = arith.constant 0 : index
    %c0_72 = arith.constant 0 : index
    %c5 = arith.constant 5 : index
    %c0_73 = arith.constant 0 : index
    %c0_74 = arith.constant 0 : index
    %71 = vector.load %arg2[%c0_71, %c0_72, %c5, %c0_73, %c0_74] : memref<1x1x12x64x128xbf16, #tpu.memory_space<vmem>>, vector<1x1x1x64x128xbf16>
    %72 = vector.shape_cast %71 : vector<1x1x1x64x128xbf16> to vector<64x128xbf16>
    %cst_75 = arith.constant dense<0.000000e+00> : vector<64x128xf32>
    %73 = tpu.matmul %14, %72, %cst_75 {dimension_numbers = #tpu.dot_dimension_numbers<[1], [0], [0], [1], [0, 0, 1, 1], [], []>} : vector<64x64xbf16>, vector<64x128xbf16>, vector<64x128xf32> -> vector<64x128xf32>
    %74 = arith.addf %70, %73 : vector<64x128xf32>
    %c127_i32_76 = arith.constant 127 : i32
    %75 = tpu.dynamic_rotate %74 by %c127_i32_76 dim 1 : vector<64x128xf32>, i32 -> vector<64x128xf32>
    %76 = arith.maximumf %74, %75 : vector<64x128xf32>
    %c1_i32_77 = arith.constant 1 : i32
    %77 = tpu.dynamic_rotate %74 by %c1_i32_77 dim 1 : vector<64x128xf32>, i32 -> vector<64x128xf32>
    %78 = vector.broadcast %1 : vector<1x128xf32> to vector<64x128xf32>
    %79 = arith.addf %77, %78 : vector<64x128xf32>
    %80 = arith.maximumf %76, %79 : vector<64x128xf32>
    %c120_i32_78 = arith.constant 120 : i32
    %81 = tpu.dynamic_rotate %80 by %c120_i32_78 dim 1 : vector<64x128xf32>, i32 -> vector<64x128xf32>
    %82 = arith.maximumf %80, %81 : vector<64x128xf32>
    %c8_i32_79 = arith.constant 8 : i32
    %83 = tpu.dynamic_rotate %80 by %c8_i32_79 dim 1 : vector<64x128xf32>, i32 -> vector<64x128xf32>
    %84 = vector.broadcast %2 : vector<1x128xf32> to vector<64x128xf32>
    %85 = arith.addf %83, %84 : vector<64x128xf32>
    %86 = arith.maximumf %82, %85 : vector<64x128xf32>
    %87 = vector.broadcast %4 : vector<64x1xf32> to vector<64x128xf32>
    %88 = arith.addf %86, %87 : vector<64x128xf32>
    %cst_80 = arith.constant 0.000000e+00 : f32
    %89 = vector.broadcast %cst_80 : f32 to vector<64x128xf32>
    %90 = arith.maximumf %88, %89 : vector<64x128xf32>
    %91 = vector.broadcast %3 : vector<1x128xf32> to vector<64x128xf32>
    %92 = arith.mulf %90, %91 : vector<64x128xf32>
    %cst_81 = arith.constant dense<0.000000e+00> : vector<64xf32>
    %93 = vector.multi_reduction <add>, %92, %cst_81 [1] : vector<64x128xf32> to vector<64xf32>
    %c1_82 = arith.constant 1 : index
    %c0_83 = arith.constant 0 : index
    %94 = vector.load %arg8[%c1_82, %c0_83] : memref<8x64xf32, #tpu.memory_space<vmem>>, vector<1x64xf32>
    %95 = vector.shape_cast %94 : vector<1x64xf32> to vector<64xf32>
    %96 = vector.shape_cast %93 : vector<64xf32> to vector<1x64xf32>
    tpu.vector_store %arg8[%c1_82, %c0_83], %96 {strides = array<i32>} : memref<8x64xf32, #tpu.memory_space<vmem>>, vector<1x64xf32>,
    %c0_84 = arith.constant 0 : index
    %c0_85 = arith.constant 0 : index
    %c2_86 = arith.constant 2 : index
    %c0_87 = arith.constant 0 : index
    %c0_88 = arith.constant 0 : index
    %97 = vector.load %arg2[%c0_84, %c0_85, %c2_86, %c0_87, %c0_88] : memref<1x1x12x64x128xbf16, #tpu.memory_space<vmem>>, vector<1x1x1x64x128xbf16>
    %98 = vector.shape_cast %97 : vector<1x1x1x64x128xbf16> to vector<64x128xbf16>
    %cst_89 = arith.constant dense<0.000000e+00> : vector<64x128xf32>
    %99 = tpu.matmul %6, %98, %cst_89 {dimension_numbers = #tpu.dot_dimension_numbers<[1], [0], [0], [1], [0, 0, 1, 1], [], []>} : vector<64x64xbf16>, vector<64x128xbf16>, vector<64x128xf32> -> vector<64x128xf32>
    %c0_90 = arith.constant 0 : index
    %c0_91 = arith.constant 0 : index
    %c3_92 = arith.constant 3 : index
    %c0_93 = arith.constant 0 : index
    %c0_94 = arith.constant 0 : index
    %100 = vector.load %arg2[%c0_90, %c0_91, %c3_92, %c0_93, %c0_94] : memref<1x1x12x64x128xbf16, #tpu.memory_space<vmem>>, vector<1x1x1x64x128xbf16>
    %101 = vector.shape_cast %100 : vector<1x1x1x64x128xbf16> to vector<64x128xbf16>
    %cst_95 = arith.constant dense<0.000000e+00> : vector<64x128xf32>
    %102 = tpu.matmul %8, %101, %cst_95 {dimension_numbers = #tpu.dot_dimension_numbers<[1], [0], [0], [1], [0, 0, 1, 1], [], []>} : vector<64x64xbf16>, vector<64x128xbf16>, vector<64x128xf32> -> vector<64x128xf32>
    %103 = arith.addf %99, %102 : vector<64x128xf32>
    %c0_96 = arith.constant 0 : index
    %c0_97 = arith.constant 0 : index
    %c4_98 = arith.constant 4 : index
    %c0_99 = arith.constant 0 : index
    %c0_100 = arith.constant 0 : index
    %104 = vector.load %arg2[%c0_96, %c0_97, %c4_98, %c0_99, %c0_100] : memref<1x1x12x64x128xbf16, #tpu.memory_space<vmem>>, vector<1x1x1x64x128xbf16>
    %105 = vector.shape_cast %104 : vector<1x1x1x64x128xbf16> to vector<64x128xbf16>
    %cst_101 = arith.constant dense<0.000000e+00> : vector<64x128xf32>
    %106 = tpu.matmul %10, %105, %cst_101 {dimension_numbers = #tpu.dot_dimension_numbers<[1], [0], [0], [1], [0, 0, 1, 1], [], []>} : vector<64x64xbf16>, vector<64x128xbf16>, vector<64x128xf32> -> vector<64x128xf32>
    %107 = arith.addf %103, %106 : vector<64x128xf32>
    %c0_102 = arith.constant 0 : index
    %c0_103 = arith.constant 0 : index
    %c5_104 = arith.constant 5 : index
    %c0_105 = arith.constant 0 : index
    %c0_106 = arith.constant 0 : index
    %108 = vector.load %arg2[%c0_102, %c0_103, %c5_104, %c0_105, %c0_106] : memref<1x1x12x64x128xbf16, #tpu.memory_space<vmem>>, vector<1x1x1x64x128xbf16>
    %109 = vector.shape_cast %108 : vector<1x1x1x64x128xbf16> to vector<64x128xbf16>
    %cst_107 = arith.constant dense<0.000000e+00> : vector<64x128xf32>
    %110 = tpu.matmul %12, %109, %cst_107 {dimension_numbers = #tpu.dot_dimension_numbers<[1], [0], [0], [1], [0, 0, 1, 1], [], []>} : vector<64x64xbf16>, vector<64x128xbf16>, vector<64x128xf32> -> vector<64x128xf32>
    %111 = arith.addf %107, %110 : vector<64x128xf32>
    %c0_108 = arith.constant 0 : index
    %c0_109 = arith.constant 0 : index
    %c6 = arith.constant 6 : index
    %c0_110 = arith.constant 0 : index
    %c0_111 = arith.constant 0 : index
    %112 = vector.load %arg2[%c0_108, %c0_109, %c6, %c0_110, %c0_111] : memref<1x1x12x64x128xbf16, #tpu.memory_space<vmem>>, vector<1x1x1x64x128xbf16>
    %113 = vector.shape_cast %112 : vector<1x1x1x64x128xbf16> to vector<64x128xbf16>
    %cst_112 = arith.constant dense<0.000000e+00> : vector<64x128xf32>
    %114 = tpu.matmul %14, %113, %cst_112 {dimension_numbers = #tpu.dot_dimension_numbers<[1], [0], [0], [1], [0, 0, 1, 1], [], []>} : vector<64x64xbf16>, vector<64x128xbf16>, vector<64x128xf32> -> vector<64x128xf32>
    %115 = arith.addf %111, %114 : vector<64x128xf32>
    %c127_i32_113 = arith.constant 127 : i32
    %116 = tpu.dynamic_rotate %115 by %c127_i32_113 dim 1 : vector<64x128xf32>, i32 -> vector<64x128xf32>
    %117 = arith.maximumf %115, %116 : vector<64x128xf32>
    %c1_i32_114 = arith.constant 1 : i32
    %118 = tpu.dynamic_rotate %115 by %c1_i32_114 dim 1 : vector<64x128xf32>, i32 -> vector<64x128xf32>
    %119 = vector.broadcast %1 : vector<1x128xf32> to vector<64x128xf32>
    %120 = arith.addf %118, %119 : vector<64x128xf32>
    %121 = arith.maximumf %117, %120 : vector<64x128xf32>
    %c120_i32_115 = arith.constant 120 : i32
    %122 = tpu.dynamic_rotate %121 by %c120_i32_115 dim 1 : vector<64x128xf32>, i32 -> vector<64x128xf32>
    %123 = arith.maximumf %121, %122 : vector<64x128xf32>
    %c8_i32_116 = arith.constant 8 : i32
    %124 = tpu.dynamic_rotate %121 by %c8_i32_116 dim 1 : vector<64x128xf32>, i32 -> vector<64x128xf32>
    %125 = vector.broadcast %2 : vector<1x128xf32> to vector<64x128xf32>
    %126 = arith.addf %124, %125 : vector<64x128xf32>
    %127 = arith.maximumf %123, %126 : vector<64x128xf32>
    %128 = vector.broadcast %4 : vector<64x1xf32> to vector<64x128xf32>
    %129 = arith.addf %127, %128 : vector<64x128xf32>
    %cst_117 = arith.constant 0.000000e+00 : f32
    %130 = vector.broadcast %cst_117 : f32 to vector<64x128xf32>
    %131 = arith.maximumf %129, %130 : vector<64x128xf32>
    %132 = vector.broadcast %3 : vector<1x128xf32> to vector<64x128xf32>
    %133 = arith.mulf %131, %132 : vector<64x128xf32>
    %cst_118 = arith.constant dense<0.000000e+00> : vector<64xf32>
    %134 = vector.multi_reduction <add>, %133, %cst_118 [1] : vector<64x128xf32> to vector<64xf32>
    %c2_119 = arith.constant 2 : index
    %c0_120 = arith.constant 0 : index
    %135 = vector.load %arg8[%c2_119, %c0_120] : memref<8x64xf32, #tpu.memory_space<vmem>>, vector<1x64xf32>
    %136 = vector.shape_cast %135 : vector<1x64xf32> to vector<64xf32>
    %137 = vector.shape_cast %134 : vector<64xf32> to vector<1x64xf32>
    tpu.vector_store %arg8[%c2_119, %c0_120], %137 {strides = array<i32>} : memref<8x64xf32, #tpu.memory_space<vmem>>, vector<1x64xf32>,
    %c0_121 = arith.constant 0 : index
    %c0_122 = arith.constant 0 : index
    %c3_123 = arith.constant 3 : index
    %c0_124 = arith.constant 0 : index
    %c0_125 = arith.constant 0 : index
    %138 = vector.load %arg2[%c0_121, %c0_122, %c3_123, %c0_124, %c0_125] : memref<1x1x12x64x128xbf16, #tpu.memory_space<vmem>>, vector<1x1x1x64x128xbf16>
    %139 = vector.shape_cast %138 : vector<1x1x1x64x128xbf16> to vector<64x128xbf16>
    %cst_126 = arith.constant dense<0.000000e+00> : vector<64x128xf32>
    %140 = tpu.matmul %6, %139, %cst_126 {dimension_numbers = #tpu.dot_dimension_numbers<[1], [0], [0], [1], [0, 0, 1, 1], [], []>} : vector<64x64xbf16>, vector<64x128xbf16>, vector<64x128xf32> -> vector<64x128xf32>
    %c0_127 = arith.constant 0 : index
    %c0_128 = arith.constant 0 : index
    %c4_129 = arith.constant 4 : index
    %c0_130 = arith.constant 0 : index
    %c0_131 = arith.constant 0 : index
    %141 = vector.load %arg2[%c0_127, %c0_128, %c4_129, %c0_130, %c0_131] : memref<1x1x12x64x128xbf16, #tpu.memory_space<vmem>>, vector<1x1x1x64x128xbf16>
    %142 = vector.shape_cast %141 : vector<1x1x1x64x128xbf16> to vector<64x128xbf16>
    %cst_132 = arith.constant dense<0.000000e+00> : vector<64x128xf32>
    %143 = tpu.matmul %8, %142, %cst_132 {dimension_numbers = #tpu.dot_dimension_numbers<[1], [0], [0], [1], [0, 0, 1, 1], [], []>} : vector<64x64xbf16>, vector<64x128xbf16>, vector<64x128xf32> -> vector<64x128xf32>
    %144 = arith.addf %140, %143 : vector<64x128xf32>
    %c0_133 = arith.constant 0 : index
    %c0_134 = arith.constant 0 : index
    %c5_135 = arith.constant 5 : index
    %c0_136 = arith.constant 0 : index
    %c0_137 = arith.constant 0 : index
    %145 = vector.load %arg2[%c0_133, %c0_134, %c5_135, %c0_136, %c0_137] : memref<1x1x12x64x128xbf16, #tpu.memory_space<vmem>>, vector<1x1x1x64x128xbf16>
    %146 = vector.shape_cast %145 : vector<1x1x1x64x128xbf16> to vector<64x128xbf16>
    %cst_138 = arith.constant dense<0.000000e+00> : vector<64x128xf32>
    %147 = tpu.matmul %10, %146, %cst_138 {dimension_numbers = #tpu.dot_dimension_numbers<[1], [0], [0], [1], [0, 0, 1, 1], [], []>} : vector<64x64xbf16>, vector<64x128xbf16>, vector<64x128xf32> -> vector<64x128xf32>
    %148 = arith.addf %144, %147 : vector<64x128xf32>
    %c0_139 = arith.constant 0 : index
    %c0_140 = arith.constant 0 : index
    %c6_141 = arith.constant 6 : index
    %c0_142 = arith.constant 0 : index
    %c0_143 = arith.constant 0 : index
    %149 = vector.load %arg2[%c0_139, %c0_140, %c6_141, %c0_142, %c0_143] : memref<1x1x12x64x128xbf16, #tpu.memory_space<vmem>>, vector<1x1x1x64x128xbf16>
    %150 = vector.shape_cast %149 : vector<1x1x1x64x128xbf16> to vector<64x128xbf16>
    %cst_144 = arith.constant dense<0.000000e+00> : vector<64x128xf32>
    %151 = tpu.matmul %12, %150, %cst_144 {dimension_numbers = #tpu.dot_dimension_numbers<[1], [0], [0], [1], [0, 0, 1, 1], [], []>} : vector<64x64xbf16>, vector<64x128xbf16>, vector<64x128xf32> -> vector<64x128xf32>
    %152 = arith.addf %148, %151 : vector<64x128xf32>
    %c0_145 = arith.constant 0 : index
    %c0_146 = arith.constant 0 : index
    %c7 = arith.constant 7 : index
    %c0_147 = arith.constant 0 : index
    %c0_148 = arith.constant 0 : index
    %153 = vector.load %arg2[%c0_145, %c0_146, %c7, %c0_147, %c0_148] : memref<1x1x12x64x128xbf16, #tpu.memory_space<vmem>>, vector<1x1x1x64x128xbf16>
    %154 = vector.shape_cast %153 : vector<1x1x1x64x128xbf16> to vector<64x128xbf16>
    %cst_149 = arith.constant dense<0.000000e+00> : vector<64x128xf32>
    %155 = tpu.matmul %14, %154, %cst_149 {dimension_numbers = #tpu.dot_dimension_numbers<[1], [0], [0], [1], [0, 0, 1, 1], [], []>} : vector<64x64xbf16>, vector<64x128xbf16>, vector<64x128xf32> -> vector<64x128xf32>
    %156 = arith.addf %152, %155 : vector<64x128xf32>
    %c127_i32_150 = arith.constant 127 : i32
    %157 = tpu.dynamic_rotate %156 by %c127_i32_150 dim 1 : vector<64x128xf32>, i32 -> vector<64x128xf32>
    %158 = arith.maximumf %156, %157 : vector<64x128xf32>
    %c1_i32_151 = arith.constant 1 : i32
    %159 = tpu.dynamic_rotate %156 by %c1_i32_151 dim 1 : vector<64x128xf32>, i32 -> vector<64x128xf32>
    %160 = vector.broadcast %1 : vector<1x128xf32> to vector<64x128xf32>
    %161 = arith.addf %159, %160 : vector<64x128xf32>
    %162 = arith.maximumf %158, %161 : vector<64x128xf32>
    %c120_i32_152 = arith.constant 120 : i32
    %163 = tpu.dynamic_rotate %162 by %c120_i32_152 dim 1 : vector<64x128xf32>, i32 -> vector<64x128xf32>
    %164 = arith.maximumf %162, %163 : vector<64x128xf32>
    %c8_i32_153 = arith.constant 8 : i32
    %165 = tpu.dynamic_rotate %162 by %c8_i32_153 dim 1 : vector<64x128xf32>, i32 -> vector<64x128xf32>
    %166 = vector.broadcast %2 : vector<1x128xf32> to vector<64x128xf32>
    %167 = arith.addf %165, %166 : vector<64x128xf32>
    %168 = arith.maximumf %164, %167 : vector<64x128xf32>
    %169 = vector.broadcast %4 : vector<64x1xf32> to vector<64x128xf32>
    %170 = arith.addf %168, %169 : vector<64x128xf32>
    %cst_154 = arith.constant 0.000000e+00 : f32
    %171 = vector.broadcast %cst_154 : f32 to vector<64x128xf32>
    %172 = arith.maximumf %170, %171 : vector<64x128xf32>
    %173 = vector.broadcast %3 : vector<1x128xf32> to vector<64x128xf32>
    %174 = arith.mulf %172, %173 : vector<64x128xf32>
    %cst_155 = arith.constant dense<0.000000e+00> : vector<64xf32>
    %175 = vector.multi_reduction <add>, %174, %cst_155 [1] : vector<64x128xf32> to vector<64xf32>
    %c3_156 = arith.constant 3 : index
    %c0_157 = arith.constant 0 : index
    %176 = vector.load %arg8[%c3_156, %c0_157] : memref<8x64xf32, #tpu.memory_space<vmem>>, vector<1x64xf32>
    %177 = vector.shape_cast %176 : vector<1x64xf32> to vector<64xf32>
    %178 = vector.shape_cast %175 : vector<64xf32> to vector<1x64xf32>
    tpu.vector_store %arg8[%c3_156, %c0_157], %178 {strides = array<i32>} : memref<8x64xf32, #tpu.memory_space<vmem>>, vector<1x64xf32>,
    %c0_158 = arith.constant 0 : index
    %c0_159 = arith.constant 0 : index
    %c4_160 = arith.constant 4 : index
    %c0_161 = arith.constant 0 : index
    %c0_162 = arith.constant 0 : index
    %179 = vector.load %arg2[%c0_158, %c0_159, %c4_160, %c0_161, %c0_162] : memref<1x1x12x64x128xbf16, #tpu.memory_space<vmem>>, vector<1x1x1x64x128xbf16>
    %180 = vector.shape_cast %179 : vector<1x1x1x64x128xbf16> to vector<64x128xbf16>
    %cst_163 = arith.constant dense<0.000000e+00> : vector<64x128xf32>
    %181 = tpu.matmul %6, %180, %cst_163 {dimension_numbers = #tpu.dot_dimension_numbers<[1], [0], [0], [1], [0, 0, 1, 1], [], []>} : vector<64x64xbf16>, vector<64x128xbf16>, vector<64x128xf32> -> vector<64x128xf32>
    %c0_164 = arith.constant 0 : index
    %c0_165 = arith.constant 0 : index
    %c5_166 = arith.constant 5 : index
    %c0_167 = arith.constant 0 : index
    %c0_168 = arith.constant 0 : index
    %182 = vector.load %arg2[%c0_164, %c0_165, %c5_166, %c0_167, %c0_168] : memref<1x1x12x64x128xbf16, #tpu.memory_space<vmem>>, vector<1x1x1x64x128xbf16>
    %183 = vector.shape_cast %182 : vector<1x1x1x64x128xbf16> to vector<64x128xbf16>
    %cst_169 = arith.constant dense<0.000000e+00> : vector<64x128xf32>
    %184 = tpu.matmul %8, %183, %cst_169 {dimension_numbers = #tpu.dot_dimension_numbers<[1], [0], [0], [1], [0, 0, 1, 1], [], []>} : vector<64x64xbf16>, vector<64x128xbf16>, vector<64x128xf32> -> vector<64x128xf32>
    %185 = arith.addf %181, %184 : vector<64x128xf32>
    %c0_170 = arith.constant 0 : index
    %c0_171 = arith.constant 0 : index
    %c6_172 = arith.constant 6 : index
    %c0_173 = arith.constant 0 : index
    %c0_174 = arith.constant 0 : index
    %186 = vector.load %arg2[%c0_170, %c0_171, %c6_172, %c0_173, %c0_174] : memref<1x1x12x64x128xbf16, #tpu.memory_space<vmem>>, vector<1x1x1x64x128xbf16>
    %187 = vector.shape_cast %186 : vector<1x1x1x64x128xbf16> to vector<64x128xbf16>
    %cst_175 = arith.constant dense<0.000000e+00> : vector<64x128xf32>
    %188 = tpu.matmul %10, %187, %cst_175 {dimension_numbers = #tpu.dot_dimension_numbers<[1], [0], [0], [1], [0, 0, 1, 1], [], []>} : vector<64x64xbf16>, vector<64x128xbf16>, vector<64x128xf32> -> vector<64x128xf32>
    %189 = arith.addf %185, %188 : vector<64x128xf32>
    %c0_176 = arith.constant 0 : index
    %c0_177 = arith.constant 0 : index
    %c7_178 = arith.constant 7 : index
    %c0_179 = arith.constant 0 : index
    %c0_180 = arith.constant 0 : index
    %190 = vector.load %arg2[%c0_176, %c0_177, %c7_178, %c0_179, %c0_180] : memref<1x1x12x64x128xbf16, #tpu.memory_space<vmem>>, vector<1x1x1x64x128xbf16>
    %191 = vector.shape_cast %190 : vector<1x1x1x64x128xbf16> to vector<64x128xbf16>
    %cst_181 = arith.constant dense<0.000000e+00> : vector<64x128xf32>
    %192 = tpu.matmul %12, %191, %cst_181 {dimension_numbers = #tpu.dot_dimension_numbers<[1], [0], [0], [1], [0, 0, 1, 1], [], []>} : vector<64x64xbf16>, vector<64x128xbf16>, vector<64x128xf32> -> vector<64x128xf32>
    %193 = arith.addf %189, %192 : vector<64x128xf32>
    %c0_182 = arith.constant 0 : index
    %c0_183 = arith.constant 0 : index
    %c8 = arith.constant 8 : index
    %c0_184 = arith.constant 0 : index
    %c0_185 = arith.constant 0 : index
    %194 = vector.load %arg2[%c0_182, %c0_183, %c8, %c0_184, %c0_185] : memref<1x1x12x64x128xbf16, #tpu.memory_space<vmem>>, vector<1x1x1x64x128xbf16>
    %195 = vector.shape_cast %194 : vector<1x1x1x64x128xbf16> to vector<64x128xbf16>
    %cst_186 = arith.constant dense<0.000000e+00> : vector<64x128xf32>
    %196 = tpu.matmul %14, %195, %cst_186 {dimension_numbers = #tpu.dot_dimension_numbers<[1], [0], [0], [1], [0, 0, 1, 1], [], []>} : vector<64x64xbf16>, vector<64x128xbf16>, vector<64x128xf32> -> vector<64x128xf32>
    %197 = arith.addf %193, %196 : vector<64x128xf32>
    %c127_i32_187 = arith.constant 127 : i32
    %198 = tpu.dynamic_rotate %197 by %c127_i32_187 dim 1 : vector<64x128xf32>, i32 -> vector<64x128xf32>
    %199 = arith.maximumf %197, %198 : vector<64x128xf32>
    %c1_i32_188 = arith.constant 1 : i32
    %200 = tpu.dynamic_rotate %197 by %c1_i32_188 dim 1 : vector<64x128xf32>, i32 -> vector<64x128xf32>
    %201 = vector.broadcast %1 : vector<1x128xf32> to vector<64x128xf32>
    %202 = arith.addf %200, %201 : vector<64x128xf32>
    %203 = arith.maximumf %199, %202 : vector<64x128xf32>
    %c120_i32_189 = arith.constant 120 : i32
    %204 = tpu.dynamic_rotate %203 by %c120_i32_189 dim 1 : vector<64x128xf32>, i32 -> vector<64x128xf32>
    %205 = arith.maximumf %203, %204 : vector<64x128xf32>
    %c8_i32_190 = arith.constant 8 : i32
    %206 = tpu.dynamic_rotate %203 by %c8_i32_190 dim 1 : vector<64x128xf32>, i32 -> vector<64x128xf32>
    %207 = vector.broadcast %2 : vector<1x128xf32> to vector<64x128xf32>
    %208 = arith.addf %206, %207 : vector<64x128xf32>
    %209 = arith.maximumf %205, %208 : vector<64x128xf32>
    %210 = vector.broadcast %4 : vector<64x1xf32> to vector<64x128xf32>
    %211 = arith.addf %209, %210 : vector<64x128xf32>
    %cst_191 = arith.constant 0.000000e+00 : f32
    %212 = vector.broadcast %cst_191 : f32 to vector<64x128xf32>
    %213 = arith.maximumf %211, %212 : vector<64x128xf32>
    %214 = vector.broadcast %3 : vector<1x128xf32> to vector<64x128xf32>
    %215 = arith.mulf %213, %214 : vector<64x128xf32>
    %cst_192 = arith.constant dense<0.000000e+00> : vector<64xf32>
    %216 = vector.multi_reduction <add>, %215, %cst_192 [1] : vector<64x128xf32> to vector<64xf32>
    %c4_193 = arith.constant 4 : index
    %c0_194 = arith.constant 0 : index
    %217 = vector.load %arg8[%c4_193, %c0_194] : memref<8x64xf32, #tpu.memory_space<vmem>>, vector<1x64xf32>
    %218 = vector.shape_cast %217 : vector<1x64xf32> to vector<64xf32>
    %219 = vector.shape_cast %216 : vector<64xf32> to vector<1x64xf32>
    tpu.vector_store %arg8[%c4_193, %c0_194], %219 {strides = array<i32>} : memref<8x64xf32, #tpu.memory_space<vmem>>, vector<1x64xf32>,
    %c0_195 = arith.constant 0 : index
    %c0_196 = arith.constant 0 : index
    %c5_197 = arith.constant 5 : index
    %c0_198 = arith.constant 0 : index
    %c0_199 = arith.constant 0 : index
    %220 = vector.load %arg2[%c0_195, %c0_196, %c5_197, %c0_198, %c0_199] : memref<1x1x12x64x128xbf16, #tpu.memory_space<vmem>>, vector<1x1x1x64x128xbf16>
    %221 = vector.shape_cast %220 : vector<1x1x1x64x128xbf16> to vector<64x128xbf16>
    %cst_200 = arith.constant dense<0.000000e+00> : vector<64x128xf32>
    %222 = tpu.matmul %6, %221, %cst_200 {dimension_numbers = #tpu.dot_dimension_numbers<[1], [0], [0], [1], [0, 0, 1, 1], [], []>} : vector<64x64xbf16>, vector<64x128xbf16>, vector<64x128xf32> -> vector<64x128xf32>
    %c0_201 = arith.constant 0 : index
    %c0_202 = arith.constant 0 : index
    %c6_203 = arith.constant 6 : index
    %c0_204 = arith.constant 0 : index
    %c0_205 = arith.constant 0 : index
    %223 = vector.load %arg2[%c0_201, %c0_202, %c6_203, %c0_204, %c0_205] : memref<1x1x12x64x128xbf16, #tpu.memory_space<vmem>>, vector<1x1x1x64x128xbf16>
    %224 = vector.shape_cast %223 : vector<1x1x1x64x128xbf16> to vector<64x128xbf16>
    %cst_206 = arith.constant dense<0.000000e+00> : vector<64x128xf32>
    %225 = tpu.matmul %8, %224, %cst_206 {dimension_numbers = #tpu.dot_dimension_numbers<[1], [0], [0], [1], [0, 0, 1, 1], [], []>} : vector<64x64xbf16>, vector<64x128xbf16>, vector<64x128xf32> -> vector<64x128xf32>
    %226 = arith.addf %222, %225 : vector<64x128xf32>
    %c0_207 = arith.constant 0 : index
    %c0_208 = arith.constant 0 : index
    %c7_209 = arith.constant 7 : index
    %c0_210 = arith.constant 0 : index
    %c0_211 = arith.constant 0 : index
    %227 = vector.load %arg2[%c0_207, %c0_208, %c7_209, %c0_210, %c0_211] : memref<1x1x12x64x128xbf16, #tpu.memory_space<vmem>>, vector<1x1x1x64x128xbf16>
    %228 = vector.shape_cast %227 : vector<1x1x1x64x128xbf16> to vector<64x128xbf16>
    %cst_212 = arith.constant dense<0.000000e+00> : vector<64x128xf32>
    %229 = tpu.matmul %10, %228, %cst_212 {dimension_numbers = #tpu.dot_dimension_numbers<[1], [0], [0], [1], [0, 0, 1, 1], [], []>} : vector<64x64xbf16>, vector<64x128xbf16>, vector<64x128xf32> -> vector<64x128xf32>
    %230 = arith.addf %226, %229 : vector<64x128xf32>
    %c0_213 = arith.constant 0 : index
    %c0_214 = arith.constant 0 : index
    %c8_215 = arith.constant 8 : index
    %c0_216 = arith.constant 0 : index
    %c0_217 = arith.constant 0 : index
    %231 = vector.load %arg2[%c0_213, %c0_214, %c8_215, %c0_216, %c0_217] : memref<1x1x12x64x128xbf16, #tpu.memory_space<vmem>>, vector<1x1x1x64x128xbf16>
    %232 = vector.shape_cast %231 : vector<1x1x1x64x128xbf16> to vector<64x128xbf16>
    %cst_218 = arith.constant dense<0.000000e+00> : vector<64x128xf32>
    %233 = tpu.matmul %12, %232, %cst_218 {dimension_numbers = #tpu.dot_dimension_numbers<[1], [0], [0], [1], [0, 0, 1, 1], [], []>} : vector<64x64xbf16>, vector<64x128xbf16>, vector<64x128xf32> -> vector<64x128xf32>
    %234 = arith.addf %230, %233 : vector<64x128xf32>
    %c0_219 = arith.constant 0 : index
    %c0_220 = arith.constant 0 : index
    %c9 = arith.constant 9 : index
    %c0_221 = arith.constant 0 : index
    %c0_222 = arith.constant 0 : index
    %235 = vector.load %arg2[%c0_219, %c0_220, %c9, %c0_221, %c0_222] : memref<1x1x12x64x128xbf16, #tpu.memory_space<vmem>>, vector<1x1x1x64x128xbf16>
    %236 = vector.shape_cast %235 : vector<1x1x1x64x128xbf16> to vector<64x128xbf16>
    %cst_223 = arith.constant dense<0.000000e+00> : vector<64x128xf32>
    %237 = tpu.matmul %14, %236, %cst_223 {dimension_numbers = #tpu.dot_dimension_numbers<[1], [0], [0], [1], [0, 0, 1, 1], [], []>} : vector<64x64xbf16>, vector<64x128xbf16>, vector<64x128xf32> -> vector<64x128xf32>
    %238 = arith.addf %234, %237 : vector<64x128xf32>
    %c127_i32_224 = arith.constant 127 : i32
    %239 = tpu.dynamic_rotate %238 by %c127_i32_224 dim 1 : vector<64x128xf32>, i32 -> vector<64x128xf32>
    %240 = arith.maximumf %238, %239 : vector<64x128xf32>
    %c1_i32_225 = arith.constant 1 : i32
    %241 = tpu.dynamic_rotate %238 by %c1_i32_225 dim 1 : vector<64x128xf32>, i32 -> vector<64x128xf32>
    %242 = vector.broadcast %1 : vector<1x128xf32> to vector<64x128xf32>
    %243 = arith.addf %241, %242 : vector<64x128xf32>
    %244 = arith.maximumf %240, %243 : vector<64x128xf32>
    %c120_i32_226 = arith.constant 120 : i32
    %245 = tpu.dynamic_rotate %244 by %c120_i32_226 dim 1 : vector<64x128xf32>, i32 -> vector<64x128xf32>
    %246 = arith.maximumf %244, %245 : vector<64x128xf32>
    %c8_i32_227 = arith.constant 8 : i32
    %247 = tpu.dynamic_rotate %244 by %c8_i32_227 dim 1 : vector<64x128xf32>, i32 -> vector<64x128xf32>
    %248 = vector.broadcast %2 : vector<1x128xf32> to vector<64x128xf32>
    %249 = arith.addf %247, %248 : vector<64x128xf32>
    %250 = arith.maximumf %246, %249 : vector<64x128xf32>
    %251 = vector.broadcast %4 : vector<64x1xf32> to vector<64x128xf32>
    %252 = arith.addf %250, %251 : vector<64x128xf32>
    %cst_228 = arith.constant 0.000000e+00 : f32
    %253 = vector.broadcast %cst_228 : f32 to vector<64x128xf32>
    %254 = arith.maximumf %252, %253 : vector<64x128xf32>
    %255 = vector.broadcast %3 : vector<1x128xf32> to vector<64x128xf32>
    %256 = arith.mulf %254, %255 : vector<64x128xf32>
    %cst_229 = arith.constant dense<0.000000e+00> : vector<64xf32>
    %257 = vector.multi_reduction <add>, %256, %cst_229 [1] : vector<64x128xf32> to vector<64xf32>
    %c5_230 = arith.constant 5 : index
    %c0_231 = arith.constant 0 : index
    %258 = vector.load %arg8[%c5_230, %c0_231] : memref<8x64xf32, #tpu.memory_space<vmem>>, vector<1x64xf32>
    %259 = vector.shape_cast %258 : vector<1x64xf32> to vector<64xf32>
    %260 = vector.shape_cast %257 : vector<64xf32> to vector<1x64xf32>
    tpu.vector_store %arg8[%c5_230, %c0_231], %260 {strides = array<i32>} : memref<8x64xf32, #tpu.memory_space<vmem>>, vector<1x64xf32>,
    %c0_232 = arith.constant 0 : index
    %c0_233 = arith.constant 0 : index
    %c6_234 = arith.constant 6 : index
    %c0_235 = arith.constant 0 : index
    %c0_236 = arith.constant 0 : index
    %261 = vector.load %arg2[%c0_232, %c0_233, %c6_234, %c0_235, %c0_236] : memref<1x1x12x64x128xbf16, #tpu.memory_space<vmem>>, vector<1x1x1x64x128xbf16>
    %262 = vector.shape_cast %261 : vector<1x1x1x64x128xbf16> to vector<64x128xbf16>
    %cst_237 = arith.constant dense<0.000000e+00> : vector<64x128xf32>
    %263 = tpu.matmul %6, %262, %cst_237 {dimension_numbers = #tpu.dot_dimension_numbers<[1], [0], [0], [1], [0, 0, 1, 1], [], []>} : vector<64x64xbf16>, vector<64x128xbf16>, vector<64x128xf32> -> vector<64x128xf32>
    %c0_238 = arith.constant 0 : index
    %c0_239 = arith.constant 0 : index
    %c7_240 = arith.constant 7 : index
    %c0_241 = arith.constant 0 : index
    %c0_242 = arith.constant 0 : index
    %264 = vector.load %arg2[%c0_238, %c0_239, %c7_240, %c0_241, %c0_242] : memref<1x1x12x64x128xbf16, #tpu.memory_space<vmem>>, vector<1x1x1x64x128xbf16>
    %265 = vector.shape_cast %264 : vector<1x1x1x64x128xbf16> to vector<64x128xbf16>
    %cst_243 = arith.constant dense<0.000000e+00> : vector<64x128xf32>
    %266 = tpu.matmul %8, %265, %cst_243 {dimension_numbers = #tpu.dot_dimension_numbers<[1], [0], [0], [1], [0, 0, 1, 1], [], []>} : vector<64x64xbf16>, vector<64x128xbf16>, vector<64x128xf32> -> vector<64x128xf32>
    %267 = arith.addf %263, %266 : vector<64x128xf32>
    %c0_244 = arith.constant 0 : index
    %c0_245 = arith.constant 0 : index
    %c8_246 = arith.constant 8 : index
    %c0_247 = arith.constant 0 : index
    %c0_248 = arith.constant 0 : index
    %268 = vector.load %arg2[%c0_244, %c0_245, %c8_246, %c0_247, %c0_248] : memref<1x1x12x64x128xbf16, #tpu.memory_space<vmem>>, vector<1x1x1x64x128xbf16>
    %269 = vector.shape_cast %268 : vector<1x1x1x64x128xbf16> to vector<64x128xbf16>
    %cst_249 = arith.constant dense<0.000000e+00> : vector<64x128xf32>
    %270 = tpu.matmul %10, %269, %cst_249 {dimension_numbers = #tpu.dot_dimension_numbers<[1], [0], [0], [1], [0, 0, 1, 1], [], []>} : vector<64x64xbf16>, vector<64x128xbf16>, vector<64x128xf32> -> vector<64x128xf32>
    %271 = arith.addf %267, %270 : vector<64x128xf32>
    %c0_250 = arith.constant 0 : index
    %c0_251 = arith.constant 0 : index
    %c9_252 = arith.constant 9 : index
    %c0_253 = arith.constant 0 : index
    %c0_254 = arith.constant 0 : index
    %272 = vector.load %arg2[%c0_250, %c0_251, %c9_252, %c0_253, %c0_254] : memref<1x1x12x64x128xbf16, #tpu.memory_space<vmem>>, vector<1x1x1x64x128xbf16>
    %273 = vector.shape_cast %272 : vector<1x1x1x64x128xbf16> to vector<64x128xbf16>
    %cst_255 = arith.constant dense<0.000000e+00> : vector<64x128xf32>
    %274 = tpu.matmul %12, %273, %cst_255 {dimension_numbers = #tpu.dot_dimension_numbers<[1], [0], [0], [1], [0, 0, 1, 1], [], []>} : vector<64x64xbf16>, vector<64x128xbf16>, vector<64x128xf32> -> vector<64x128xf32>
    %275 = arith.addf %271, %274 : vector<64x128xf32>
    %c0_256 = arith.constant 0 : index
    %c0_257 = arith.constant 0 : index
    %c10 = arith.constant 10 : index
    %c0_258 = arith.constant 0 : index
    %c0_259 = arith.constant 0 : index
    %276 = vector.load %arg2[%c0_256, %c0_257, %c10, %c0_258, %c0_259] : memref<1x1x12x64x128xbf16, #tpu.memory_space<vmem>>, vector<1x1x1x64x128xbf16>
    %277 = vector.shape_cast %276 : vector<1x1x1x64x128xbf16> to vector<64x128xbf16>
    %cst_260 = arith.constant dense<0.000000e+00> : vector<64x128xf32>
    %278 = tpu.matmul %14, %277, %cst_260 {dimension_numbers = #tpu.dot_dimension_numbers<[1], [0], [0], [1], [0, 0, 1, 1], [], []>} : vector<64x64xbf16>, vector<64x128xbf16>, vector<64x128xf32> -> vector<64x128xf32>
    %279 = arith.addf %275, %278 : vector<64x128xf32>
    %c127_i32_261 = arith.constant 127 : i32
    %280 = tpu.dynamic_rotate %279 by %c127_i32_261 dim 1 : vector<64x128xf32>, i32 -> vector<64x128xf32>
    %281 = arith.maximumf %279, %280 : vector<64x128xf32>
    %c1_i32_262 = arith.constant 1 : i32
    %282 = tpu.dynamic_rotate %279 by %c1_i32_262 dim 1 : vector<64x128xf32>, i32 -> vector<64x128xf32>
    %283 = vector.broadcast %1 : vector<1x128xf32> to vector<64x128xf32>
    %284 = arith.addf %282, %283 : vector<64x128xf32>
    %285 = arith.maximumf %281, %284 : vector<64x128xf32>
    %c120_i32_263 = arith.constant 120 : i32
    %286 = tpu.dynamic_rotate %285 by %c120_i32_263 dim 1 : vector<64x128xf32>, i32 -> vector<64x128xf32>
    %287 = arith.maximumf %285, %286 : vector<64x128xf32>
    %c8_i32_264 = arith.constant 8 : i32
    %288 = tpu.dynamic_rotate %285 by %c8_i32_264 dim 1 : vector<64x128xf32>, i32 -> vector<64x128xf32>
    %289 = vector.broadcast %2 : vector<1x128xf32> to vector<64x128xf32>
    %290 = arith.addf %288, %289 : vector<64x128xf32>
    %291 = arith.maximumf %287, %290 : vector<64x128xf32>
    %292 = vector.broadcast %4 : vector<64x1xf32> to vector<64x128xf32>
    %293 = arith.addf %291, %292 : vector<64x128xf32>
    %cst_265 = arith.constant 0.000000e+00 : f32
    %294 = vector.broadcast %cst_265 : f32 to vector<64x128xf32>
    %295 = arith.maximumf %293, %294 : vector<64x128xf32>
    %296 = vector.broadcast %3 : vector<1x128xf32> to vector<64x128xf32>
    %297 = arith.mulf %295, %296 : vector<64x128xf32>
    %cst_266 = arith.constant dense<0.000000e+00> : vector<64xf32>
    %298 = vector.multi_reduction <add>, %297, %cst_266 [1] : vector<64x128xf32> to vector<64xf32>
    %c6_267 = arith.constant 6 : index
    %c0_268 = arith.constant 0 : index
    %299 = vector.load %arg8[%c6_267, %c0_268] : memref<8x64xf32, #tpu.memory_space<vmem>>, vector<1x64xf32>
    %300 = vector.shape_cast %299 : vector<1x64xf32> to vector<64xf32>
    %301 = vector.shape_cast %298 : vector<64xf32> to vector<1x64xf32>
    tpu.vector_store %arg8[%c6_267, %c0_268], %301 {strides = array<i32>} : memref<8x64xf32, #tpu.memory_space<vmem>>, vector<1x64xf32>,
    %c0_269 = arith.constant 0 : index
    %c0_270 = arith.constant 0 : index
    %c7_271 = arith.constant 7 : index
    %c0_272 = arith.constant 0 : index
    %c0_273 = arith.constant 0 : index
    %302 = vector.load %arg2[%c0_269, %c0_270, %c7_271, %c0_272, %c0_273] : memref<1x1x12x64x128xbf16, #tpu.memory_space<vmem>>, vector<1x1x1x64x128xbf16>
    %303 = vector.shape_cast %302 : vector<1x1x1x64x128xbf16> to vector<64x128xbf16>
    %cst_274 = arith.constant dense<0.000000e+00> : vector<64x128xf32>
    %304 = tpu.matmul %6, %303, %cst_274 {dimension_numbers = #tpu.dot_dimension_numbers<[1], [0], [0], [1], [0, 0, 1, 1], [], []>} : vector<64x64xbf16>, vector<64x128xbf16>, vector<64x128xf32> -> vector<64x128xf32>
    %c0_275 = arith.constant 0 : index
    %c0_276 = arith.constant 0 : index
    %c8_277 = arith.constant 8 : index
    %c0_278 = arith.constant 0 : index
    %c0_279 = arith.constant 0 : index
    %305 = vector.load %arg2[%c0_275, %c0_276, %c8_277, %c0_278, %c0_279] : memref<1x1x12x64x128xbf16, #tpu.memory_space<vmem>>, vector<1x1x1x64x128xbf16>
    %306 = vector.shape_cast %305 : vector<1x1x1x64x128xbf16> to vector<64x128xbf16>
    %cst_280 = arith.constant dense<0.000000e+00> : vector<64x128xf32>
    %307 = tpu.matmul %8, %306, %cst_280 {dimension_numbers = #tpu.dot_dimension_numbers<[1], [0], [0], [1], [0, 0, 1, 1], [], []>} : vector<64x64xbf16>, vector<64x128xbf16>, vector<64x128xf32> -> vector<64x128xf32>
    %308 = arith.addf %304, %307 : vector<64x128xf32>
    %c0_281 = arith.constant 0 : index
    %c0_282 = arith.constant 0 : index
    %c9_283 = arith.constant 9 : index
    %c0_284 = arith.constant 0 : index
    %c0_285 = arith.constant 0 : index
    %309 = vector.load %arg2[%c0_281, %c0_282, %c9_283, %c0_284, %c0_285] : memref<1x1x12x64x128xbf16, #tpu.memory_space<vmem>>, vector<1x1x1x64x128xbf16>
    %310 = vector.shape_cast %309 : vector<1x1x1x64x128xbf16> to vector<64x128xbf16>
    %cst_286 = arith.constant dense<0.000000e+00> : vector<64x128xf32>
    %311 = tpu.matmul %10, %310, %cst_286 {dimension_numbers = #tpu.dot_dimension_numbers<[1], [0], [0], [1], [0, 0, 1, 1], [], []>} : vector<64x64xbf16>, vector<64x128xbf16>, vector<64x128xf32> -> vector<64x128xf32>
    %312 = arith.addf %308, %311 : vector<64x128xf32>
    %c0_287 = arith.constant 0 : index
    %c0_288 = arith.constant 0 : index
    %c10_289 = arith.constant 10 : index
    %c0_290 = arith.constant 0 : index
    %c0_291 = arith.constant 0 : index
    %313 = vector.load %arg2[%c0_287, %c0_288, %c10_289, %c0_290, %c0_291] : memref<1x1x12x64x128xbf16, #tpu.memory_space<vmem>>, vector<1x1x1x64x128xbf16>
    %314 = vector.shape_cast %313 : vector<1x1x1x64x128xbf16> to vector<64x128xbf16>
    %cst_292 = arith.constant dense<0.000000e+00> : vector<64x128xf32>
    %315 = tpu.matmul %12, %314, %cst_292 {dimension_numbers = #tpu.dot_dimension_numbers<[1], [0], [0], [1], [0, 0, 1, 1], [], []>} : vector<64x64xbf16>, vector<64x128xbf16>, vector<64x128xf32> -> vector<64x128xf32>
    %316 = arith.addf %312, %315 : vector<64x128xf32>
    %c0_293 = arith.constant 0 : index
    %c0_294 = arith.constant 0 : index
    %c11 = arith.constant 11 : index
    %c0_295 = arith.constant 0 : index
    %c0_296 = arith.constant 0 : index
    %317 = vector.load %arg2[%c0_293, %c0_294, %c11, %c0_295, %c0_296] : memref<1x1x12x64x128xbf16, #tpu.memory_space<vmem>>, vector<1x1x1x64x128xbf16>
    %318 = vector.shape_cast %317 : vector<1x1x1x64x128xbf16> to vector<64x128xbf16>
    %cst_297 = arith.constant dense<0.000000e+00> : vector<64x128xf32>
    %319 = tpu.matmul %14, %318, %cst_297 {dimension_numbers = #tpu.dot_dimension_numbers<[1], [0], [0], [1], [0, 0, 1, 1], [], []>} : vector<64x64xbf16>, vector<64x128xbf16>, vector<64x128xf32> -> vector<64x128xf32>
    %320 = arith.addf %316, %319 : vector<64x128xf32>
    %c127_i32_298 = arith.constant 127 : i32
    %321 = tpu.dynamic_rotate %320 by %c127_i32_298 dim 1 : vector<64x128xf32>, i32 -> vector<64x128xf32>
    %322 = arith.maximumf %320, %321 : vector<64x128xf32>
    %c1_i32_299 = arith.constant 1 : i32
    %323 = tpu.dynamic_rotate %320 by %c1_i32_299 dim 1 : vector<64x128xf32>, i32 -> vector<64x128xf32>
    %324 = vector.broadcast %1 : vector<1x128xf32> to vector<64x128xf32>
    %325 = arith.addf %323, %324 : vector<64x128xf32>
    %326 = arith.maximumf %322, %325 : vector<64x128xf32>
    %c120_i32_300 = arith.constant 120 : i32
    %327 = tpu.dynamic_rotate %326 by %c120_i32_300 dim 1 : vector<64x128xf32>, i32 -> vector<64x128xf32>
    %328 = arith.maximumf %326, %327 : vector<64x128xf32>
    %c8_i32_301 = arith.constant 8 : i32
    %329 = tpu.dynamic_rotate %326 by %c8_i32_301 dim 1 : vector<64x128xf32>, i32 -> vector<64x128xf32>
    %330 = vector.broadcast %2 : vector<1x128xf32> to vector<64x128xf32>
    %331 = arith.addf %329, %330 : vector<64x128xf32>
    %332 = arith.maximumf %328, %331 : vector<64x128xf32>
    %333 = vector.broadcast %4 : vector<64x1xf32> to vector<64x128xf32>
    %334 = arith.addf %332, %333 : vector<64x128xf32>
    %cst_302 = arith.constant 0.000000e+00 : f32
    %335 = vector.broadcast %cst_302 : f32 to vector<64x128xf32>
    %336 = arith.maximumf %334, %335 : vector<64x128xf32>
    %337 = vector.broadcast %3 : vector<1x128xf32> to vector<64x128xf32>
    %338 = arith.mulf %336, %337 : vector<64x128xf32>
    %cst_303 = arith.constant dense<0.000000e+00> : vector<64xf32>
    %339 = vector.multi_reduction <add>, %338, %cst_303 [1] : vector<64x128xf32> to vector<64xf32>
    %c7_304 = arith.constant 7 : index
    %c0_305 = arith.constant 0 : index
    %340 = vector.load %arg8[%c7_304, %c0_305] : memref<8x64xf32, #tpu.memory_space<vmem>>, vector<1x64xf32>
    %341 = vector.shape_cast %340 : vector<1x64xf32> to vector<64xf32>
    %342 = vector.shape_cast %339 : vector<64xf32> to vector<1x64xf32>
    tpu.vector_store %arg8[%c7_304, %c0_305], %342 {strides = array<i32>} : memref<8x64xf32, #tpu.memory_space<vmem>>, vector<1x64xf32>,
    %c0_306 = arith.constant 0 : index
    %c0_307 = arith.constant 0 : index
    %343 = vector.load %arg8[%c0_306, %c0_307] : memref<8x64xf32, #tpu.memory_space<vmem>>, vector<8x64xf32>
    %c0_308 = arith.constant 0 : index
    %c0_309 = arith.constant 0 : index
    %344 = vector.load %arg4[%c0_308, %c0_309] : memref<64x512xf32, #tpu.memory_space<vmem>>, vector<64x512xf32>
    %cst_310 = arith.constant dense<0.000000e+00> : vector<8x512xf32>
    %345 = tpu.matmul %343, %344, %cst_310 {dimension_numbers = #tpu.dot_dimension_numbers<[1], [0], [0], [1], [0, 0, 1, 1], [], []>} : vector<8x64xf32>, vector<64x512xf32>, vector<8x512xf32> -> vector<8x512xf32>
    %c0_311 = arith.constant 0 : index
    %c0_312 = arith.constant 0 : index
    %c0_313 = arith.constant 0 : index
    %346 = vector.load %arg7[%c0_311, %c0_312, %c0_313] : memref<1x8x512xf32, #tpu.memory_space<vmem>>, vector<1x8x512xf32>
    %347 = vector.shape_cast %346 : vector<1x8x512xf32> to vector<8x512xf32>
    %348 = vector.shape_cast %345 : vector<8x512xf32> to vector<1x8x512xf32>
    tpu.vector_store %arg7[%c0_311, %c0_312, %c0_313], %348 {strides = array<i32>} : memref<1x8x512xf32, #tpu.memory_space<vmem>>, vector<1x8x512xf32>,
    return
  }
  func.func @transform_0(%arg0: i32, %arg1: i32) -> (i32, i32, i32, i32, i32) {
    %c0_i32 = arith.constant 0 : i32
    %c0_i32_0 = arith.constant 0 : i32
    %c0_i32_1 = arith.constant 0 : i32
    %c0_i32_2 = arith.constant 0 : i32
    return %arg0, %arg1, %c0_i32, %c0_i32_0, %c0_i32_1 : i32, i32, i32, i32, i32
  }
  func.func @transform_1(%arg0: i32, %arg1: i32) -> (i32, i32, i32) {
    %c0_i32 = arith.constant 0 : i32
    %c0_i32_0 = arith.constant 0 : i32
    %c0_i32_1 = arith.constant 0 : i32
    %c0_i32_2 = arith.constant 0 : i32
    return %c0_i32, %c0_i32_0, %c0_i32_1 : i32, i32, i32
  }
  func.func @transform_2(%arg0: i32, %arg1: i32) -> (i32, i32) {
    %c0_i32 = arith.constant 0 : i32
    %c0_i32_0 = arith.constant 0 : i32
    %c0_i32_1 = arith.constant 0 : i32
    return %c0_i32, %c0_i32_0 : i32, i32
  }
  func.func @transform_3(%arg0: i32, %arg1: i32) -> (i32, i32) {
    %c0_i32 = arith.constant 0 : i32
    %c0_i32_0 = arith.constant 0 : i32
    %c0_i32_1 = arith.constant 0 : i32
    return %c0_i32, %c0_i32_0 : i32, i32
  }
  func.func @transform_4(%arg0: i32, %arg1: i32) -> (i32, i32) {
    %c0_i32 = arith.constant 0 : i32
    %c0_i32_0 = arith.constant 0 : i32
    %c0_i32_1 = arith.constant 0 : i32
    return %c0_i32, %c0_i32_0 : i32, i32
  }
  func.func @transform_5(%arg0: i32, %arg1: i32) -> (i32, i32, i32) {
    %c0_i32 = arith.constant 0 : i32
    %c0_i32_0 = arith.constant 0 : i32
    return %arg0, %arg1, %c0_i32 : i32, i32, i32
  }
}

</mosaic_0001>

<llo_original>
// kernel: video_frontend.1
$region0: #{video_frontend.1}
  #allocation0 [shape = 'u32[]', space=smem, size = 0x4, offset = 0x4, fixed_abs, tag = 'smem constant byte address 0x4 - core index']
  #allocation1 [shape = 'u32[72,128]{1,0:T(1,128)}', space=vmem, size = 0x9000, scoped, tag = 'internal scratch']
  #allocation2 [shape = 'f32[8,64]{1,0:T(8,128)}', space=vmem, size = 0x1000, scoped, tag = 'scratch operand']
  %s0 = inlined_call_operand.vmem [shape: bf16[2,1,12,64,128], index: 0, kind: input, shape index: {}]
  %s1 = inlined_call_operand.vmem [shape: bf16[5,64,64], index: 1, kind: input, shape index: {}]
  %s2 = inlined_call_operand.vmem [shape: f32[64,512], index: 2, kind: input, shape index: {}]
  %s3 = inlined_call_operand.vmem [shape: f32[64,1], index: 3, kind: input, shape index: {}]
  %s4 = inlined_call_operand.vmem [shape: f32[3,128], index: 4, kind: input, shape index: {}]
  %s5 = inlined_call_operand.hbm [shape: f32[2,8,512], index: 5, kind: output, shape index: {}]
  %s6 = sld [smem:[#allocation0]]
  $region53: #{video_frontend.1} parent=0
    _
  %s8 = ssub.s32 1, %s6
  %s9 = scalar_select 0, %s8, %s6
  $region1: #{video_frontend.1} parent=0
    #allocation3 [shape = 'u8[32768]{0}', space=vmem, size = 0x8000, scoped, tag = 'output window, operand 0']
    #allocation4 [shape = 's32[2]{0}', space=sflag, size = 0x8, scoped, tag = 'scoped memory for video_frontend.1']
    %10 = vsyncpa [#allocation4], 0
    %s11 = scalar_lea.sflag [#allocation4], 1
    %12 = vsyncpa %s11, 0
    loop: start=0, step=1, limit=4
    $region2: #{video_frontend.1} parent=1 // loop_pre_header
      _
    $region3: #{video_frontend.1} parent=1 // loop_header
      %s14 = sphi 0, %s18
      %p15 = scmp.ge.s32.totalorder %s14, 4
      %s21 = sphi 0, %s33
      %s22 = sphi 0, %s29
      %s23 = sphi 0, %s21
      %s24 = sphi 0, %s22
      %s25 = sphi 0, %s23
      %s26 = sphi 0, %s24
      %s38 = sphi 0, %s40
      %s41 = sphi 0, %s38
      %s42 = sphi 0, %s41
      %s58 = sphi 0, %s42
      %s62 = sphi 0, %s62
      %s64 = sphi 0, %s62
      %s65 = sphi 0, %s64
      %s79 = sphi 0, %s65
      %s83 = sphi 0, %s83
      %s85 = sphi 0, %s83
      %s86 = sphi 0, %s85
      %s100 = sphi 0, %s86
      %s104 = sphi 0, %s104
      %s106 = sphi 0, %s104
      %s107 = sphi 0, %s106
      %s121 = sphi 0, %s107
      %s125 = sphi 0, %s125
      %s127 = sphi 0, %s125
      %s128 = sphi 0, %s127
      %s142 = sphi 0, %s128
      %s150 = sphi 0, %s152
      %s153 = sphi 0, %s150
      %s154 = sphi 0, %s153
      %s170 = sphi 0, %s154
    $region4: #{video_frontend.1} parent=1 // loop_header_branch
      %17 = sbr.rel (%p15) target = $region8
    $region5: #{video_frontend.1} parent=1 // loop_body
      %s19 = ssub.s32 %s14, 1
      %s20 = ssub.s32 %s14, 2
      %s27 = sadd.s32 1, %s22
      %p28 = scmp.ge.s32.totalorder %s27, 1
      %s29 = scalar_select %p28, 0, %s27
      %s30 = sadd.s32 1, %s21
      %s31 = scalar_select %p28, %s30, %s21
      %p32 = scmp.ge.s32.totalorder %s31, 2
      %s33 = scalar_select %p32, 0, %s31
      %s34 = ssub.s32 %s21, %s33
      %s35 = ssub.s32 %s22, %s29
      %s36 = sor.u32 %s34, %s35
      %p37 = scmp.eq.s32.totalorder %s36, 0
      %s39 = sadd.s32 %s38, 1
      %s40 = scalar_select %p37, %s38, %s39
      %p43 = pneg %p37
      %p44 = scmp.eq.s32.totalorder %s14, 1
      %p45 = por %p43, %p44
      %p46 = scmp.ne.s32.totalorder %s38, %s41
      %p47 = scmp.eq.s32.totalorder %s14, 0
      %p48 = por %p46, %p47
      %p49 = scmp.ne.s32.totalorder %s38, %s41
      %p50 = scmp.eq.s32.totalorder %s19, 1
      %p51 = por %p49, %p50
      %p52 = scmp.ne.s32.totalorder %s41, %s42
      %p53 = scmp.eq.s32.totalorder %s19, 0
      %p54 = por %p52, %p53
      %p55 = scmp.ne.s32.totalorder %s41, %s42
      %p56 = scmp.eq.s32.totalorder %s20, 1
      %p57 = por %p55, %p56
      %p59 = scmp.ne.s32.totalorder %s42, %s58
      %p60 = scmp.eq.s32.totalorder %s20, 0
      %p61 = por %p59, %p60
      %s63 = sadd.s32 %s62, 1
      %p66 = scmp.eq.s32.totalorder %s14, 1
      %p67 = scmp.ne.s32.totalorder %s62, %s64
      %p68 = scmp.eq.s32.totalorder %s14, 0
      %p69 = por %p67, %p68
      %p70 = scmp.ne.s32.totalorder %s62, %s64
      %p71 = scmp.eq.s32.totalorder %s19, 1
      %p72 = por %p70, %p71
      %p73 = scmp.ne.s32.totalorder %s64, %s65
      %p74 = scmp.eq.s32.totalorder %s19, 0
      %p75 = por %p73, %p74
      %p76 = scmp.ne.s32.totalorder %s64, %s65
      %p77 = scmp.eq.s32.totalorder %s20, 1
      %p78 = por %p76, %p77
      %p80 = scmp.ne.s32.totalorder %s65, %s79
      %p81 = scmp.eq.s32.totalorder %s20, 0
      %p82 = por %p80, %p81
      %s84 = sadd.s32 %s83, 1
      %p87 = scmp.eq.s32.totalorder %s14, 1
      %p88 = scmp.ne.s32.totalorder %s83, %s85
      %p89 = scmp.eq.s32.totalorder %s14, 0
      %p90 = por %p88, %p89
      %p91 = scmp.ne.s32.totalorder %s83, %s85
      %p92 = scmp.eq.s32.totalorder %s19, 1
      %p93 = por %p91, %p92
      %p94 = scmp.ne.s32.totalorder %s85, %s86
      %p95 = scmp.eq.s32.totalorder %s19, 0
      %p96 = por %p94, %p95
      %p97 = scmp.ne.s32.totalorder %s85, %s86
      %p98 = scmp.eq.s32.totalorder %s20, 1
      %p99 = por %p97, %p98
      %p101 = scmp.ne.s32.totalorder %s86, %s100
      %p102 = scmp.eq.s32.totalorder %s20, 0
      %p103 = por %p101, %p102
      %s105 = sadd.s32 %s104, 1
      %p108 = scmp.eq.s32.totalorder %s14, 1
      %p109 = scmp.ne.s32.totalorder %s104, %s106
      %p110 = scmp.eq.s32.totalorder %s14, 0
      %p111 = por %p109, %p110
      %p112 = scmp.ne.s32.totalorder %s104, %s106
      %p113 = scmp.eq.s32.totalorder %s19, 1
      %p114 = por %p112, %p113
      %p115 = scmp.ne.s32.totalorder %s106, %s107
      %p116 = scmp.eq.s32.totalorder %s19, 0
      %p117 = por %p115, %p116
      %p118 = scmp.ne.s32.totalorder %s106, %s107
      %p119 = scmp.eq.s32.totalorder %s20, 1
      %p120 = por %p118, %p119
      %p122 = scmp.ne.s32.totalorder %s107, %s121
      %p123 = scmp.eq.s32.totalorder %s20, 0
      %p124 = por %p122, %p123
      %s126 = sadd.s32 %s125, 1
      %p129 = scmp.eq.s32.totalorder %s14, 1
      %p130 = scmp.ne.s32.totalorder %s125, %s127
      %p131 = scmp.eq.s32.totalorder %s14, 0
      %p132 = por %p130, %p131
      %p133 = scmp.ne.s32.totalorder %s125, %s127
      %p134 = scmp.eq.s32.totalorder %s19, 1
      %p135 = por %p133, %p134
      %p136 = scmp.ne.s32.totalorder %s127, %s128
      %p137 = scmp.eq.s32.totalorder %s19, 0
      %p138 = por %p136, %p137
      %p139 = scmp.ne.s32.totalorder %s127, %s128
      %p140 = scmp.eq.s32.totalorder %s20, 1
      %p141 = por %p139, %p140
      %p143 = scmp.ne.s32.totalorder %s128, %s142
      %p144 = scmp.eq.s32.totalorder %s20, 0
      %p145 = por %p143, %p144
      %s146 = ssub.s32 %s21, %s33
      %s147 = ssub.s32 %s22, %s29
      %s148 = sor.u32 %s146, %s147
      %p149 = scmp.eq.s32.totalorder %s148, 0
      %s151 = sadd.s32 %s150, 1
      %s152 = scalar_select %p149, %s150, %s151
      %p155 = pneg %p149
      %p156 = scmp.eq.s32.totalorder %s14, 1
      %p157 = por %p155, %p156
      %p158 = scmp.ne.s32.totalorder %s150, %s153
      %p159 = scmp.eq.s32.totalorder %s14, 0
      %p160 = por %p158, %p159
      %p161 = scmp.ne.s32.totalorder %s150, %s153
      %p162 = scmp.eq.s32.totalorder %s19, 1
      %p163 = por %p161, %p162
      %p164 = scmp.ne.s32.totalorder %s153, %s154
      %p165 = scmp.eq.s32.totalorder %s19, 0
      %p166 = por %p164, %p165
      %p167 = scmp.ne.s32.totalorder %s153, %s154
      %p168 = scmp.eq.s32.totalorder %s20, 1
      %p169 = por %p167, %p168
      %p171 = scmp.ne.s32.totalorder %s154, %s170
      %p172 = scmp.eq.s32.totalorder %s20, 0
      %p173 = por %p171, %p172
      %p174 = scmp.le.s32.totalorder 1, %s14
      %p175 = scmp.lt.s32.totalorder %s14, 3
      %p176 = pnand %p174, %p175
      %p177 = pneg %p176
      // Predicated region
      $region9: #{video_frontend.1} parent=5 // pred_check
        _
      $region10: #{video_frontend.1} parent=5 // pred_check_branch
        %179 = sbr.rel (%p176) target = $region12
      $region11: #{video_frontend.1} parent=5 // pred_region
        %s180 = ssub.s32 %s14, 1
        // Predicated region
        $region13: #{video_frontend.1} parent=11 // pred_check
          %p181 = pneg %p75
        $region14: #{video_frontend.1} parent=11 // pred_check_branch
          %183 = sbr.rel (%p181) target = $region16
        $region15: #{video_frontend.1} parent=11 // pred_region
          _
        $region16: #{video_frontend.1} parent=11 // pred_fallthru
          _
        // Predicated region
        $region17: #{video_frontend.1} parent=11 // pred_check
          %p184 = pneg %p96
        $region18: #{video_frontend.1} parent=11 // pred_check_branch
          %186 = sbr.rel (%p184) target = $region20
        $region19: #{video_frontend.1} parent=11 // pred_region
          _
        $region20: #{video_frontend.1} parent=11 // pred_fallthru
          _
        // Predicated region
        $region21: #{video_frontend.1} parent=11 // pred_check
          %p187 = pneg %p117
        $region22: #{video_frontend.1} parent=11 // pred_check_branch
          %189 = sbr.rel (%p187) target = $region24
        $region23: #{video_frontend.1} parent=11 // pred_region
          _
        $region24: #{video_frontend.1} parent=11 // pred_fallthru
          _
        // Predicated region
        $region25: #{video_frontend.1} parent=11 // pred_check
          %p190 = pneg %p138
        $region26: #{video_frontend.1} parent=11 // pred_check_branch
          %192 = sbr.rel (%p190) target = $region28
        $region27: #{video_frontend.1} parent=11 // pred_region
          _
        $region28: #{video_frontend.1} parent=11 // pred_fallthru
          _
      $region12: #{video_frontend.1} parent=5 // pred_fallthru
        _
      %p193 = scmp.lt.s32.totalorder %s14, 2
      // Predicated region
      $region29: #{video_frontend.1} parent=5 // pred_check
        %p194 = pneg %p193
      $region30: #{video_frontend.1} parent=5 // pred_check_branch
        %196 = sbr.rel (%p194) target = $region32
      $region31: #{video_frontend.1} parent=5 // pred_region
        // Predicated region
        $region33: #{video_frontend.1} parent=31 // pred_check
          %p197 = pneg %p48
        $region34: #{video_frontend.1} parent=31 // pred_check_branch
          %199 = sbr.rel (%p197) target = $region36
        $region35: #{video_frontend.1} parent=31 // pred_region
          %p200 = scmp.lt.s32.totalorder %s21, 1
          %s201 = scalar_select %p200, %s21, 1
          %p202 = scmp.lt.s32.totalorder %s22, 0
          %s203 = scalar_select %p202, %s22, 0
          %s204 = smul.addr %s203, 96
          %s205 = smul.addr %s201, 96
          %s206 = sadd.s32 %s204, %s205
          %s207 = smul.addr %s206, 4
          %s208 = scalar_lea.vmem %s0, %s207
        $region36: #{video_frontend.1} parent=31 // pred_fallthru
          _
      $region32: #{video_frontend.1} parent=5 // pred_fallthru
        _
      %p209 = scmp.le.s32.totalorder 1, %s14
      %p210 = scmp.lt.s32.totalorder %s14, 3
      %p211 = pnand %p209, %p210
      %p212 = pneg %p211
      // Predicated region
      $region37: #{video_frontend.1} parent=5 // pred_check
        _
      $region38: #{video_frontend.1} parent=5 // pred_check_branch
        %214 = sbr.rel (%p211) target = $region40
      $region39: #{video_frontend.1} parent=5 // pred_region
        %s215 = ssub.s32 %s14, 1
        %p216 = scmp.lt.s32.totalorder %s23, 1
        %s217 = scalar_select %p216, %s23, 1
        %p218 = scmp.lt.s32.totalorder %s24, 0
        %s219 = scalar_select %p218, %s24, 0
        %s220 = smul.addr %s219, 96
        %s221 = smul.addr %s217, 96
        %s222 = sadd.s32 %s220, %s221
        %s223 = smul.addr %s222, 4
        %s224 = scalar_lea.vmem %s0, %s223
        %p225 = pneg %p54
        %p226 = pneg %p51
        %p227 = pneg %p75
        %p228 = pneg %p72
        %p229 = pneg %p96
        %p230 = pneg %p93
        %p231 = pneg %p117
        %p232 = pneg %p114
        %p233 = pneg %p138
        %p234 = pneg %p135
        %p235 = pneg %p166
        %p236 = pneg %p163
        %s237 = sand.u32 %s153, 1
        %s238 = scalar_lea.sflag [#allocation4], %s237
        %s239 = sand.u32 %s153, 1
        %s240 = smul.addr %s239, 32
        %s241 = scalar_lea.vmem [#allocation3], %s240
        %p242 = scmp.lt.s32.totalorder %s23, 1
        %s243 = scalar_select %p242, %s23, 1
        %p244 = scmp.lt.s32.totalorder %s24, 0
        %s245 = scalar_select %p244, %s24, 0
        %s246 = smul.addr %s245, 96
        %s247 = smul.addr %s243, 96
        %s248 = sadd.s32 %s246, %s247
        %s249 = smul.addr %s248, 4
        %s250 = scalar_lea.vmem %s0, %s249
        %v252 = vld [vmem:[%s4] sm:$0x7]
        %v253 = vld [vmem:[%s3] sm:$0xff]
        %v254 = vld [vmem:[%s3 + $0x8] sm:$0xff]
        %v255 = vld [vmem:[%s3 + $0x10] sm:$0xff]
        %v256 = vld [vmem:[%s3 + $0x18] sm:$0xff]
        %v257 = vld [vmem:[%s3 + $0x20] sm:$0xff]
        %v258 = vld [vmem:[%s3 + $0x28] sm:$0xff]
        %v259 = vld [vmem:[%s3 + $0x30] sm:$0xff]
        %v260 = vld [vmem:[%s3 + $0x38] sm:$0xff]
        %v261 = vld [vmem:[%s1] sm:$0xf]
        %v262 = vld [vmem:[%s1 + $0x4] sm:$0xf]
        %v263 = vld [vmem:[%s1 + $0x8] sm:$0xf]
        %v264 = vld [vmem:[%s1 + $0xc] sm:$0xf]
        %v265 = vld [vmem:[%s1 + $0x10] sm:$0xf]
        %v266 = vld [vmem:[%s1 + $0x14] sm:$0xf]
        %v267 = vld [vmem:[%s1 + $0x18] sm:$0xf]
        %v268 = vld [vmem:[%s1 + $0x1c] sm:$0xf]
        %s269 = scalar_lea.vmem %s1, 32
        %v270 = vld [vmem:[%s269] sm:$0xf]
        %v271 = vld [vmem:[%s269 + $0x4] sm:$0xf]
        %v272 = vld [vmem:[%s269 + $0x8] sm:$0xf]
        %v273 = vld [vmem:[%s269 + $0xc] sm:$0xf]
        %v274 = vld [vmem:[%s269 + $0x10] sm:$0xf]
        %v275 = vld [vmem:[%s269 + $0x14] sm:$0xf]
        %v276 = vld [vmem:[%s269 + $0x18] sm:$0xf]
        %v277 = vld [vmem:[%s269 + $0x1c] sm:$0xf]
        %s278 = scalar_lea.vmem %s1, 64
        %v279 = vld [vmem:[%s278] sm:$0xf]
        %v280 = vld [vmem:[%s278 + $0x4] sm:$0xf]
        %v281 = vld [vmem:[%s278 + $0x8] sm:$0xf]
        %v282 = vld [vmem:[%s278 + $0xc] sm:$0xf]
        %v283 = vld [vmem:[%s278 + $0x10] sm:$0xf]
        %v284 = vld [vmem:[%s278 + $0x14] sm:$0xf]
        %v285 = vld [vmem:[%s278 + $0x18] sm:$0xf]
        %v286 = vld [vmem:[%s278 + $0x1c] sm:$0xf]
        %s287 = scalar_lea.vmem %s1, 96
        %v288 = vld [vmem:[%s287] sm:$0xf]
        %v289 = vld [vmem:[%s287 + $0x4] sm:$0xf]
        %v290 = vld [vmem:[%s287 + $0x8] sm:$0xf]
        %v291 = vld [vmem:[%s287 + $0xc] sm:$0xf]
        %v292 = vld [vmem:[%s287 + $0x10] sm:$0xf]
        %v293 = vld [vmem:[%s287 + $0x14] sm:$0xf]
        %v294 = vld [vmem:[%s287 + $0x18] sm:$0xf]
        %v295 = vld [vmem:[%s287 + $0x1c] sm:$0xf]
        %s296 = scalar_lea.vmem %s1, 128
        %v297 = vld [vmem:[%s296] sm:$0xf]
        %v298 = vld [vmem:[%s296 + $0x4] sm:$0xf]
        %v299 = vld [vmem:[%s296 + $0x8] sm:$0xf]
        %v300 = vld [vmem:[%s296 + $0xc] sm:$0xf]
        %v301 = vld [vmem:[%s296 + $0x10] sm:$0xf]
        %v302 = vld [vmem:[%s296 + $0x14] sm:$0xf]
        %v303 = vld [vmem:[%s296 + $0x18] sm:$0xf]
        %v304 = vld [vmem:[%s296 + $0x1c] sm:$0xf]
        %v305 = vld [vmem:[%s250] sm:$0xf]
        %v306 = vld [vmem:[%s250 + $0x4] sm:$0xf]
        %v307 = vld [vmem:[%s250 + $0x8] sm:$0xf]
        %v308 = vld [vmem:[%s250 + $0xc] sm:$0xf]
        %v309 = vld [vmem:[%s250 + $0x10] sm:$0xf]
        %v310 = vld [vmem:[%s250 + $0x14] sm:$0xf]
        %v311 = vld [vmem:[%s250 + $0x18] sm:$0xf]
        %v312 = vld [vmem:[%s250 + $0x1c] sm:$0xf]
        %s313 = scalar_lea.vmem %s250, 32
        %v314 = vld [vmem:[%s313] sm:$0xf]
        %v315 = vld [vmem:[%s313 + $0x4] sm:$0xf]
        %v316 = vld [vmem:[%s313 + $0x8] sm:$0xf]
        %v317 = vld [vmem:[%s313 + $0xc] sm:$0xf]
        %v318 = vld [vmem:[%s313 + $0x10] sm:$0xf]
        %v319 = vld [vmem:[%s313 + $0x14] sm:$0xf]
        %v320 = vld [vmem:[%s313 + $0x18] sm:$0xf]
        %v321 = vld [vmem:[%s313 + $0x1c] sm:$0xf]
        %v330 = vunpack.c.l.b16 %v270
        %v331 = vunpack.c.l.b16 %v271
        %v332 = vunpack.c.l.b16 %v272
        %v333 = vunpack.c.l.b16 %v273
        %v334 = vunpack.c.l.b16 %v274
        %v335 = vunpack.c.l.b16 %v275
        %v336 = vunpack.c.l.b16 %v276
        %v337 = vunpack.c.l.b16 %v277
        %v338 = vpack.c.b16 %v331, %v330
        %v339 = vpack.c.b16 %v333, %v332
        %v340 = vpack.c.b16 %v335, %v334
        %v341 = vpack.c.b16 %v337, %v336
        %v350 = vunpack.c.l.b16 %v314
        %v351 = vunpack.c.l.b16 %v315
        %v352 = vunpack.c.l.b16 %v316
        %v353 = vunpack.c.l.b16 %v317
        %v354 = vunpack.c.l.b16 %v318
        %v355 = vunpack.c.l.b16 %v319
        %v356 = vunpack.c.l.b16 %v320
        %v357 = vunpack.c.l.b16 %v321
        %v358 = vpack.c.b16 %v351, %v350
        %v359 = vpack.c.b16 %v353, %v352
        %v360 = vpack.c.b16 %v355, %v354
        %v361 = vpack.c.b16 %v357, %v356
        %vm366 = vcmask 523264
        %v368 = vsel %vm366, %v338, 0
        %v371 = vsel %vm366, %v339, 0
        %v374 = vsel %vm366, %v340, 0
        %v377 = vsel %vm366, %v341, 0
        %379 = vmatpush.bf16.msra.mxu0 0
        %380 = vmatpush.bf16.msra.mxu0 0
        %381 = vmatpush.bf16.msra.mxu0 0
        %382 = vmatpush.bf16.msra.mxu0 0
        %383 = vmatpush.bf16.msra.mxu0 %v361
        %384 = vmatpush.bf16.msra.mxu0 %v360
        %385 = vmatpush.bf16.msra.mxu0 %v359
        %386 = vmatpush.bf16.msra.mxu0 %v358
        %387 = vmatmul.bf16.gmra.mxu0 %v368
        %v388 = vpop.f32.mrf.mxu0
        %v389 = vadd.f32 0.0, %v388
        %v390 = vpop.f32.mrf.mxu0
        %v391 = vadd.f32 0.0, %v390
        %392 = vmatmul.bf16.gmra.mxu0 %v371
        %v393 = vpop.f32.mrf.mxu0
        %v394 = vadd.f32 0.0, %v393
        %v395 = vpop.f32.mrf.mxu0
        %v396 = vadd.f32 0.0, %v395
        %397 = vmatmul.bf16.gmra.mxu0 %v374
        %v398 = vpop.f32.mrf.mxu0
        %v399 = vadd.f32 0.0, %v398
        %v400 = vpop.f32.mrf.mxu0
        %v401 = vadd.f32 0.0, %v400
        %402 = vmatmul.bf16.gmra.mxu0 %v377
        %v403 = vpop.f32.mrf.mxu0
        %v404 = vadd.f32 0.0, %v403
        %v405 = vpop.f32.mrf.mxu0
        %v406 = vadd.f32 0.0, %v405
        %407 = vdwg.mxu0
        %v416 = vunpack.c.l.b16 %v261
        %v417 = vunpack.c.l.b16 %v262
        %v418 = vunpack.c.l.b16 %v263
        %v419 = vunpack.c.l.b16 %v264
        %v420 = vunpack.c.l.b16 %v265
        %v421 = vunpack.c.l.b16 %v266
        %v422 = vunpack.c.l.b16 %v267
        %v423 = vunpack.c.l.b16 %v268
        %v424 = vpack.c.b16 %v417, %v416
        %v425 = vpack.c.b16 %v419, %v418
        %v426 = vpack.c.b16 %v421, %v420
        %v427 = vpack.c.b16 %v423, %v422
        %v436 = vunpack.c.l.b16 %v305
        %v437 = vunpack.c.l.b16 %v306
        %v438 = vunpack.c.l.b16 %v307
        %v439 = vunpack.c.l.b16 %v308
        %v440 = vunpack.c.l.b16 %v309
        %v441 = vunpack.c.l.b16 %v310
        %v442 = vunpack.c.l.b16 %v311
        %v443 = vunpack.c.l.b16 %v312
        %v444 = vpack.c.b16 %v437, %v436
        %v445 = vpack.c.b16 %v439, %v438
        %v446 = vpack.c.b16 %v441, %v440
        %v447 = vpack.c.b16 %v443, %v442
        %v453 = vsel %vm366, %v424, 0
        %v456 = vsel %vm366, %v425, 0
        %v459 = vsel %vm366, %v426, 0
        %v462 = vsel %vm366, %v427, 0
        %464 = vmatpush.bf16.msra.mxu0 0
        %465 = vmatpush.bf16.msra.mxu0 0
        %466 = vmatpush.bf16.msra.mxu0 0
        %467 = vmatpush.bf16.msra.mxu0 0
        %468 = vmatpush.bf16.msra.mxu0 %v447
        %469 = vmatpush.bf16.msra.mxu0 %v446
        %470 = vmatpush.bf16.msra.mxu0 %v445
        %471 = vmatpush.bf16.msra.mxu0 %v444
        %472 = vmatmul.bf16.gmra.mxu0 %v453
        %v473 = vpop.f32.mrf.mxu0
        %v474 = vadd.f32 %v389, %v473
        %v475 = vpop.f32.mrf.mxu0
        %v476 = vadd.f32 %v391, %v475
        %477 = vmatmul.bf16.gmra.mxu0 %v456
        %v478 = vpop.f32.mrf.mxu0
        %v479 = vadd.f32 %v394, %v478
        %v480 = vpop.f32.mrf.mxu0
        %v481 = vadd.f32 %v396, %v480
        %482 = vmatmul.bf16.gmra.mxu0 %v459
        %v483 = vpop.f32.mrf.mxu0
        %v484 = vadd.f32 %v399, %v483
        %v485 = vpop.f32.mrf.mxu0
        %v486 = vadd.f32 %v401, %v485
        %487 = vmatmul.bf16.gmra.mxu0 %v462
        %v488 = vpop.f32.mrf.mxu0
        %v489 = vadd.f32 %v404, %v488
        %v490 = vpop.f32.mrf.mxu0
        %v491 = vadd.f32 %v406, %v490
        %492 = vdwg.mxu0
        %s493 = scalar_lea.vmem %s250, 64
        %v494 = vld [vmem:[%s493] sm:$0xf]
        %v495 = vld [vmem:[%s493 + $0x4] sm:$0xf]
        %v496 = vld [vmem:[%s493 + $0x8] sm:$0xf]
        %v497 = vld [vmem:[%s493 + $0xc] sm:$0xf]
        %v498 = vld [vmem:[%s493 + $0x10] sm:$0xf]
        %v499 = vld [vmem:[%s493 + $0x14] sm:$0xf]
        %v500 = vld [vmem:[%s493 + $0x18] sm:$0xf]
        %v501 = vld [vmem:[%s493 + $0x1c] sm:$0xf]
        %v510 = vunpack.c.l.b16 %v279
        %v511 = vunpack.c.l.b16 %v280
        %v512 = vunpack.c.l.b16 %v281
        %v513 = vunpack.c.l.b16 %v282
        %v514 = vunpack.c.l.b16 %v283
        %v515 = vunpack.c.l.b16 %v284
        %v516 = vunpack.c.l.b16 %v285
        %v517 = vunpack.c.l.b16 %v286
        %v518 = vpack.c.b16 %v511, %v510
        %v519 = vpack.c.b16 %v513, %v512
        %v520 = vpack.c.b16 %v515, %v514
        %v521 = vpack.c.b16 %v517, %v516
        %v530 = vunpack.c.l.b16 %v494
        %v531 = vunpack.c.l.b16 %v495
        %v532 = vunpack.c.l.b16 %v496
        %v533 = vunpack.c.l.b16 %v497
        %v534 = vunpack.c.l.b16 %v498
        %v535 = vunpack.c.l.b16 %v499
        %v536 = vunpack.c.l.b16 %v500
        %v537 = vunpack.c.l.b16 %v501
        %v538 = vpack.c.b16 %v531, %v530
        %v539 = vpack.c.b16 %v533, %v532
        %v540 = vpack.c.b16 %v535, %v534
        %v541 = vpack.c.b16 %v537, %v536
        %v547 = vsel %vm366, %v518, 0
        %v550 = vsel %vm366, %v519, 0
        %v553 = vsel %vm366, %v520, 0
        %v556 = vsel %vm366, %v521, 0
        %558 = vmatpush.bf16.msra.mxu0 0
        %559 = vmatpush.bf16.msra.mxu0 0
        %560 = vmatpush.bf16.msra.mxu0 0
        %561 = vmatpush.bf16.msra.mxu0 0
        %562 = vmatpush.bf16.msra.mxu0 %v541
        %563 = vmatpush.bf16.msra.mxu0 %v540
        %564 = vmatpush.bf16.msra.mxu0 %v539
        %565 = vmatpush.bf16.msra.mxu0 %v538
        %566 = vmatmul.bf16.gmra.mxu0 %v547
        %v567 = vpop.f32.mrf.mxu0
        %v568 = vadd.f32 0.0, %v567
        %v569 = vpop.f32.mrf.mxu0
        %v570 = vadd.f32 0.0, %v569
        %571 = vmatmul.bf16.gmra.mxu0 %v550
        %v572 = vpop.f32.mrf.mxu0
        %v573 = vadd.f32 0.0, %v572
        %v574 = vpop.f32.mrf.mxu0
        %v575 = vadd.f32 0.0, %v574
        %576 = vmatmul.bf16.gmra.mxu0 %v553
        %v577 = vpop.f32.mrf.mxu0
        %v578 = vadd.f32 0.0, %v577
        %v579 = vpop.f32.mrf.mxu0
        %v580 = vadd.f32 0.0, %v579
        %581 = vmatmul.bf16.gmra.mxu0 %v556
        %v582 = vpop.f32.mrf.mxu0
        %v583 = vadd.f32 0.0, %v582
        %v584 = vpop.f32.mrf.mxu0
        %v585 = vadd.f32 0.0, %v584
        %586 = vdwg.mxu0
        %v587 = vadd.f32 %v474, %v568
        %v588 = vadd.f32 %v476, %v570
        %v589 = vadd.f32 %v479, %v573
        %v590 = vadd.f32 %v481, %v575
        %v591 = vadd.f32 %v484, %v578
        %v592 = vadd.f32 %v486, %v580
        %v593 = vadd.f32 %v489, %v583
        %v594 = vadd.f32 %v491, %v585
        %s595 = scalar_lea.vmem %s250, 96
        %v596 = vld [vmem:[%s595] sm:$0xf]
        %v597 = vld [vmem:[%s595 + $0x4] sm:$0xf]
        %v598 = vld [vmem:[%s595 + $0x8] sm:$0xf]
        %v599 = vld [vmem:[%s595 + $0xc] sm:$0xf]
        %v600 = vld [vmem:[%s595 + $0x10] sm:$0xf]
        %v601 = vld [vmem:[%s595 + $0x14] sm:$0xf]
        %v602 = vld [vmem:[%s595 + $0x18] sm:$0xf]
        %v603 = vld [vmem:[%s595 + $0x1c] sm:$0xf]
        %v612 = vunpack.c.l.b16 %v288
        %v613 = vunpack.c.l.b16 %v289
        %v614 = vunpack.c.l.b16 %v290
        %v615 = vunpack.c.l.b16 %v291
        %v616 = vunpack.c.l.b16 %v292
        %v617 = vunpack.c.l.b16 %v293
        %v618 = vunpack.c.l.b16 %v294
        %v619 = vunpack.c.l.b16 %v295
        %v620 = vpack.c.b16 %v613, %v612
        %v621 = vpack.c.b16 %v615, %v614
        %v622 = vpack.c.b16 %v617, %v616
        %v623 = vpack.c.b16 %v619, %v618
        %v632 = vunpack.c.l.b16 %v596
        %v633 = vunpack.c.l.b16 %v597
        %v634 = vunpack.c.l.b16 %v598
        %v635 = vunpack.c.l.b16 %v599
        %v636 = vunpack.c.l.b16 %v600
        %v637 = vunpack.c.l.b16 %v601
        %v638 = vunpack.c.l.b16 %v602
        %v639 = vunpack.c.l.b16 %v603
        %v640 = vpack.c.b16 %v633, %v632
        %v641 = vpack.c.b16 %v635, %v634
        %v642 = vpack.c.b16 %v637, %v636
        %v643 = vpack.c.b16 %v639, %v638
        %v649 = vsel %vm366, %v620, 0
        %v652 = vsel %vm366, %v621, 0
        %v655 = vsel %vm366, %v622, 0
        %v658 = vsel %vm366, %v623, 0
        %660 = vmatpush.bf16.msra.mxu0 0
        %661 = vmatpush.bf16.msra.mxu0 0
        %662 = vmatpush.bf16.msra.mxu0 0
        %663 = vmatpush.bf16.msra.mxu0 0
        %664 = vmatpush.bf16.msra.mxu0 %v643
        %665 = vmatpush.bf16.msra.mxu0 %v642
        %666 = vmatpush.bf16.msra.mxu0 %v641
        %667 = vmatpush.bf16.msra.mxu0 %v640
        %668 = vmatmul.bf16.gmra.mxu0 %v649
        %v669 = vpop.f32.mrf.mxu0
        %v670 = vadd.f32 0.0, %v669
        %v671 = vpop.f32.mrf.mxu0
        %v672 = vadd.f32 0.0, %v671
        %673 = vmatmul.bf16.gmra.mxu0 %v652
        %v674 = vpop.f32.mrf.mxu0
        %v675 = vadd.f32 0.0, %v674
        %v676 = vpop.f32.mrf.mxu0
        %v677 = vadd.f32 0.0, %v676
        %678 = vmatmul.bf16.gmra.mxu0 %v655
        %v679 = vpop.f32.mrf.mxu0
        %v680 = vadd.f32 0.0, %v679
        %v681 = vpop.f32.mrf.mxu0
        %v682 = vadd.f32 0.0, %v681
        %683 = vmatmul.bf16.gmra.mxu0 %v658
        %v684 = vpop.f32.mrf.mxu0
        %v685 = vadd.f32 0.0, %v684
        %v686 = vpop.f32.mrf.mxu0
        %v687 = vadd.f32 0.0, %v686
        %688 = vdwg.mxu0
        %v689 = vadd.f32 %v587, %v670
        %v690 = vadd.f32 %v588, %v672
        %v691 = vadd.f32 %v589, %v675
        %v692 = vadd.f32 %v590, %v677
        %v693 = vadd.f32 %v591, %v680
        %v694 = vadd.f32 %v592, %v682
        %v695 = vadd.f32 %v593, %v685
        %v696 = vadd.f32 %v594, %v687
        %s697 = scalar_lea.vmem %s250, 128
        %v698 = vld [vmem:[%s697] sm:$0xf]
        %v699 = vld [vmem:[%s697 + $0x4] sm:$0xf]
        %v700 = vld [vmem:[%s697 + $0x8] sm:$0xf]
        %v701 = vld [vmem:[%s697 + $0xc] sm:$0xf]
        %v702 = vld [vmem:[%s697 + $0x10] sm:$0xf]
        %v703 = vld [vmem:[%s697 + $0x14] sm:$0xf]
        %v704 = vld [vmem:[%s697 + $0x18] sm:$0xf]
        %v705 = vld [vmem:[%s697 + $0x1c] sm:$0xf]
        %v714 = vunpack.c.l.b16 %v297
        %v715 = vunpack.c.l.b16 %v298
        %v716 = vunpack.c.l.b16 %v299
        %v717 = vunpack.c.l.b16 %v300
        %v718 = vunpack.c.l.b16 %v301
        %v719 = vunpack.c.l.b16 %v302
        %v720 = vunpack.c.l.b16 %v303
        %v721 = vunpack.c.l.b16 %v304
        %v722 = vpack.c.b16 %v715, %v714
        %v723 = vpack.c.b16 %v717, %v716
        %v724 = vpack.c.b16 %v719, %v718
        %v725 = vpack.c.b16 %v721, %v720
        %v734 = vunpack.c.l.b16 %v698
        %v735 = vunpack.c.l.b16 %v699
        %v736 = vunpack.c.l.b16 %v700
        %v737 = vunpack.c.l.b16 %v701
        %v738 = vunpack.c.l.b16 %v702
        %v739 = vunpack.c.l.b16 %v703
        %v740 = vunpack.c.l.b16 %v704
        %v741 = vunpack.c.l.b16 %v705
        %v742 = vpack.c.b16 %v735, %v734
        %v743 = vpack.c.b16 %v737, %v736
        %v744 = vpack.c.b16 %v739, %v738
        %v745 = vpack.c.b16 %v741, %v740
        %v751 = vsel %vm366, %v722, 0
        %v754 = vsel %vm366, %v723, 0
        %v757 = vsel %vm366, %v724, 0
        %v760 = vsel %vm366, %v725, 0
        %762 = vmatpush.bf16.msra.mxu0 0
        %763 = vmatpush.bf16.msra.mxu0 0
        %764 = vmatpush.bf16.msra.mxu0 0
        %765 = vmatpush.bf16.msra.mxu0 0
        %766 = vmatpush.bf16.msra.mxu0 %v745
        %767 = vmatpush.bf16.msra.mxu0 %v744
        %768 = vmatpush.bf16.msra.mxu0 %v743
        %769 = vmatpush.bf16.msra.mxu0 %v742
        %770 = vmatmul.bf16.gmra.mxu0 %v751
        %v771 = vpop.f32.mrf.mxu0
        %v772 = vadd.f32 0.0, %v771
        %v773 = vpop.f32.mrf.mxu0
        %v774 = vadd.f32 0.0, %v773
        %775 = vmatmul.bf16.gmra.mxu0 %v754
        %v776 = vpop.f32.mrf.mxu0
        %v777 = vadd.f32 0.0, %v776
        %v778 = vpop.f32.mrf.mxu0
        %v779 = vadd.f32 0.0, %v778
        %780 = vmatmul.bf16.gmra.mxu0 %v757
        %v781 = vpop.f32.mrf.mxu0
        %v782 = vadd.f32 0.0, %v781
        %v783 = vpop.f32.mrf.mxu0
        %v784 = vadd.f32 0.0, %v783
        %785 = vmatmul.bf16.gmra.mxu0 %v760
        %v786 = vpop.f32.mrf.mxu0
        %v787 = vadd.f32 0.0, %v786
        %v788 = vpop.f32.mrf.mxu0
        %v789 = vadd.f32 0.0, %v788
        %790 = vdwg.mxu0
        %v791 = vadd.f32 %v689, %v772
        %v792 = vadd.f32 %v690, %v774
        %v793 = vadd.f32 %v691, %v777
        %v794 = vadd.f32 %v692, %v779
        %v795 = vadd.f32 %v693, %v782
        %v796 = vadd.f32 %v694, %v784
        %v797 = vadd.f32 %v695, %v787
        %v798 = vadd.f32 %v696, %v789
        %799 = vrot.lane.b32.xlu0 %v791, 127
        %v800 = vpop.permute.xlu0 %799
        %801 = vrot.lane.b32.xlu0 %v792, 127
        %v802 = vpop.permute.xlu0 %801
        %803 = vrot.lane.b32.xlu0 %v793, 127
        %v804 = vpop.permute.xlu0 %803
        %805 = vrot.lane.b32.xlu0 %v794, 127
        %v806 = vpop.permute.xlu0 %805
        %807 = vrot.lane.b32.xlu0 %v795, 127
        %v808 = vpop.permute.xlu0 %807
        %809 = vrot.lane.b32.xlu0 %v796, 127
        %v810 = vpop.permute.xlu0 %809
        %811 = vrot.lane.b32.xlu0 %v797, 127
        %v812 = vpop.permute.xlu0 %811
        %813 = vrot.lane.b32.xlu0 %v798, 127
        %v814 = vpop.permute.xlu0 %813
        %v815 = vmax.f32 %v791, %v800
        %v816 = vmax.f32 %v792, %v802
        %v817 = vmax.f32 %v793, %v804
        %v818 = vmax.f32 %v794, %v806
        %v819 = vmax.f32 %v795, %v808
        %v820 = vmax.f32 %v796, %v810
        %v821 = vmax.f32 %v797, %v812
        %v822 = vmax.f32 %v798, %v814
        %823 = vrot.lane.b32.xlu0 %v791, 1
        %v824 = vpop.permute.xlu0 %823
        %825 = vrot.lane.b32.xlu0 %v792, 1
        %v826 = vpop.permute.xlu0 %825
        %827 = vrot.lane.b32.xlu0 %v793, 1
        %v828 = vpop.permute.xlu0 %827
        %829 = vrot.lane.b32.xlu0 %v794, 1
        %v830 = vpop.permute.xlu0 %829
        %831 = vrot.lane.b32.xlu0 %v795, 1
        %v832 = vpop.permute.xlu0 %831
        %833 = vrot.lane.b32.xlu0 %v796, 1
        %v834 = vpop.permute.xlu0 %833
        %835 = vrot.lane.b32.xlu0 %v797, 1
        %v836 = vpop.permute.xlu0 %835
        %837 = vrot.lane.b32.xlu0 %v798, 1
        %v838 = vpop.permute.xlu0 %837
        %v839 = vperm.slane %v252, 0
        %v840 = vadd.f32 %v824, %v839
        %v841 = vadd.f32 %v826, %v839
        %v842 = vadd.f32 %v828, %v839
        %v843 = vadd.f32 %v830, %v839
        %v844 = vadd.f32 %v832, %v839
        %v845 = vadd.f32 %v834, %v839
        %v846 = vadd.f32 %v836, %v839
        %v847 = vadd.f32 %v838, %v839
        %v848 = vmax.f32 %v815, %v840
        %v849 = vmax.f32 %v816, %v841
        %v850 = vmax.f32 %v817, %v842
        %v851 = vmax.f32 %v818, %v843
        %v852 = vmax.f32 %v819, %v844
        %v853 = vmax.f32 %v820, %v845
        %v854 = vmax.f32 %v821, %v846
        %v855 = vmax.f32 %v822, %v847
        %856 = vrot.lane.b32.xlu0 %v848, 120
        %v857 = vpop.permute.xlu0 %856
        %858 = vrot.lane.b32.xlu0 %v849, 120
        %v859 = vpop.permute.xlu0 %858
        %860 = vrot.lane.b32.xlu0 %v850, 120
        %v861 = vpop.permute.xlu0 %860
        %862 = vrot.lane.b32.xlu0 %v851, 120
        %v863 = vpop.permute.xlu0 %862
        %864 = vrot.lane.b32.xlu0 %v852, 120
        %v865 = vpop.permute.xlu0 %864
        %866 = vrot.lane.b32.xlu0 %v853, 120
        %v867 = vpop.permute.xlu0 %866
        %868 = vrot.lane.b32.xlu0 %v854, 120
        %v869 = vpop.permute.xlu0 %868
        %870 = vrot.lane.b32.xlu0 %v855, 120
        %v871 = vpop.permute.xlu0 %870
        %v872 = vmax.f32 %v848, %v857
        %v873 = vmax.f32 %v849, %v859
        %v874 = vmax.f32 %v850, %v861
        %v875 = vmax.f32 %v851, %v863
        %v876 = vmax.f32 %v852, %v865
        %v877 = vmax.f32 %v853, %v867
        %v878 = vmax.f32 %v854, %v869
        %v879 = vmax.f32 %v855, %v871
        %880 = vrot.lane.b32.xlu0 %v848, 8
        %v881 = vpop.permute.xlu0 %880
        %882 = vrot.lane.b32.xlu0 %v849, 8
        %v883 = vpop.permute.xlu0 %882
        %884 = vrot.lane.b32.xlu0 %v850, 8
        %v885 = vpop.permute.xlu0 %884
        %886 = vrot.lane.b32.xlu0 %v851, 8
        %v887 = vpop.permute.xlu0 %886
        %888 = vrot.lane.b32.xlu0 %v852, 8
        %v889 = vpop.permute.xlu0 %888
        %890 = vrot.lane.b32.xlu0 %v853, 8
        %v891 = vpop.permute.xlu0 %890
        %892 = vrot.lane.b32.xlu0 %v854, 8
        %v893 = vpop.permute.xlu0 %892
        %894 = vrot.lane.b32.xlu0 %v855, 8
        %v895 = vpop.permute.xlu0 %894
        %v896 = vperm.slane %v252, 1
        %v897 = vadd.f32 %v881, %v896
        %v898 = vadd.f32 %v883, %v896
        %v899 = vadd.f32 %v885, %v896
        %v900 = vadd.f32 %v887, %v896
        %v901 = vadd.f32 %v889, %v896
        %v902 = vadd.f32 %v891, %v896
        %v903 = vadd.f32 %v893, %v896
        %v904 = vadd.f32 %v895, %v896
        %v905 = vmax.f32 %v872, %v897
        %v906 = vmax.f32 %v873, %v898
        %v907 = vmax.f32 %v874, %v899
        %v908 = vmax.f32 %v875, %v900
        %v909 = vmax.f32 %v876, %v901
        %v910 = vmax.f32 %v877, %v902
        %v911 = vmax.f32 %v878, %v903
        %v912 = vmax.f32 %v879, %v904
        %914 = vset.pattern.permute.xlu0 0
        %915 = vperm.xlu0 %914, %v253
        %v916 = vpop.permute.xlu0 %915
        %919 = vset.pattern.permute.xlu0 0
        %920 = vperm.xlu0 %919, %v254
        %v921 = vpop.permute.xlu0 %920
        %924 = vset.pattern.permute.xlu0 0
        %925 = vperm.xlu0 %924, %v255
        %v926 = vpop.permute.xlu0 %925
        %929 = vset.pattern.permute.xlu0 0
        %930 = vperm.xlu0 %929, %v256
        %v931 = vpop.permute.xlu0 %930
        %934 = vset.pattern.permute.xlu0 0
        %935 = vperm.xlu0 %934, %v257
        %v936 = vpop.permute.xlu0 %935
        %939 = vset.pattern.permute.xlu0 0
        %940 = vperm.xlu0 %939, %v258
        %v941 = vpop.permute.xlu0 %940
        %944 = vset.pattern.permute.xlu0 0
        %945 = vperm.xlu0 %944, %v259
        %v946 = vpop.permute.xlu0 %945
        %949 = vset.pattern.permute.xlu0 0
        %950 = vperm.xlu0 %949, %v260
        %v951 = vpop.permute.xlu0 %950
        %v953 = vadd.f32 %v905, %v916
        %v954 = vadd.f32 %v906, %v921
        %v955 = vadd.f32 %v907, %v926
        %v956 = vadd.f32 %v908, %v931
        %v957 = vadd.f32 %v909, %v936
        %v958 = vadd.f32 %v910, %v941
        %v959 = vadd.f32 %v911, %v946
        %v960 = vadd.f32 %v912, %v951
        %v961 = vmax.f32 %v953, 0.0
        %v962 = vmax.f32 %v954, 0.0
        %v963 = vmax.f32 %v955, 0.0
        %v964 = vmax.f32 %v956, 0.0
        %v965 = vmax.f32 %v957, 0.0
        %v966 = vmax.f32 %v958, 0.0
        %v967 = vmax.f32 %v959, 0.0
        %v968 = vmax.f32 %v960, 0.0
        %v969 = vperm.slane %v252, 2
        %v970 = vmul.f32 %v961, %v969
        %v971 = vmul.f32 %v962, %v969
        %v972 = vmul.f32 %v963, %v969
        %v973 = vmul.f32 %v964, %v969
        %v974 = vmul.f32 %v965, %v969
        %v975 = vmul.f32 %v966, %v969
        %v976 = vmul.f32 %v967, %v969
        %v977 = vmul.f32 %v968, %v969
        %978 = vadd.xlane.f32.xlu0 %v970
        %v979 = vpop.xlane.xlu0 %978
        %980 = vadd.xlane.f32.xlu0 %v971
        %v981 = vpop.xlane.xlu0 %980
        %982 = vadd.xlane.f32.xlu0 %v972
        %v983 = vpop.xlane.xlu0 %982
        %984 = vadd.xlane.f32.xlu0 %v973
        %v985 = vpop.xlane.xlu0 %984
        %986 = vadd.xlane.f32.xlu0 %v974
        %v987 = vpop.xlane.xlu0 %986
        %988 = vadd.xlane.f32.xlu0 %v975
        %v989 = vpop.xlane.xlu0 %988
        %990 = vadd.xlane.f32.xlu0 %v976
        %v991 = vpop.xlane.xlu0 %990
        %992 = vadd.xlane.f32.xlu0 %v977
        %v993 = vpop.xlane.xlu0 %992
        %v1002 = vlaneseq
        %v1003 = vand.u32 %v1002, 127
        %v1004 = vperm.slane %v979, %v1003
        %v1005 = vadd.s32 %v1003, 4294967288
        %v1006 = vperm.slane %v981, %v1005
        %vm1007 = vcmask 130112
        %v1008 = vsel %vm1007, %v1006, %v1004
        %v1009 = vadd.s32 %v1003, 4294967280
        %v1010 = vperm.slane %v983, %v1009
        %vm1011 = vcmask 195712
        %v1012 = vsel %vm1011, %v1010, %v1008
        %v1013 = vadd.s32 %v1003, 4294967272
        %v1014 = vperm.slane %v985, %v1013
        %vm1015 = vcmask 261312
        %v1016 = vsel %vm1015, %v1014, %v1012
        %v1017 = vadd.s32 %v1003, 4294967264
        %v1018 = vperm.slane %v987, %v1017
        %vm1019 = vcmask 326912
        %v1020 = vsel %vm1019, %v1018, %v1016
        %v1021 = vadd.s32 %v1003, 4294967256
        %v1022 = vperm.slane %v989, %v1021
        %vm1023 = vcmask 392512
        %v1024 = vsel %vm1023, %v1022, %v1020
        %v1025 = vadd.s32 %v1003, 4294967248
        %v1026 = vperm.slane %v991, %v1025
        %vm1027 = vcmask 458112
        %v1028 = vsel %vm1027, %v1026, %v1024
        %v1029 = vadd.s32 %v1003, 4294967240
        %v1030 = vperm.slane %v993, %v1029
        %vm1031 = vcmask 523712
        %v1032 = vsel %vm1031, %v1030, %v1028
        %vm1034 = vcmask 516096
        %1035 = vst.msk [vmem:[#allocation2] sm:$0x1] %vm1034, %v1032
        %v1036 = vld [vmem:[%s313] sm:$0xf]
        %v1037 = vld [vmem:[%s313 + $0x4] sm:$0xf]
        %v1038 = vld [vmem:[%s313 + $0x8] sm:$0xf]
        %v1039 = vld [vmem:[%s313 + $0xc] sm:$0xf]
        %v1040 = vld [vmem:[%s313 + $0x10] sm:$0xf]
        %v1041 = vld [vmem:[%s313 + $0x14] sm:$0xf]
        %v1042 = vld [vmem:[%s313 + $0x18] sm:$0xf]
        %v1043 = vld [vmem:[%s313 + $0x1c] sm:$0xf]
        %v1044 = vld [vmem:[%s493] sm:$0xf]
        %v1045 = vld [vmem:[%s493 + $0x4] sm:$0xf]
        %v1046 = vld [vmem:[%s493 + $0x8] sm:$0xf]
        %v1047 = vld [vmem:[%s493 + $0xc] sm:$0xf]
        %v1048 = vld [vmem:[%s493 + $0x10] sm:$0xf]
        %v1049 = vld [vmem:[%s493 + $0x14] sm:$0xf]
        %v1050 = vld [vmem:[%s493 + $0x18] sm:$0xf]
        %v1051 = vld [vmem:[%s493 + $0x1c] sm:$0xf]
        %v1060 = vunpack.c.l.b16 %v1044
        %v1061 = vunpack.c.l.b16 %v1045
        %v1062 = vunpack.c.l.b16 %v1046
        %v1063 = vunpack.c.l.b16 %v1047
        %v1064 = vunpack.c.l.b16 %v1048
        %v1065 = vunpack.c.l.b16 %v1049
        %v1066 = vunpack.c.l.b16 %v1050
        %v1067 = vunpack.c.l.b16 %v1051
        %v1068 = vpack.c.b16 %v1061, %v1060
        %v1069 = vpack.c.b16 %v1063, %v1062
        %v1070 = vpack.c.b16 %v1065, %v1064
        %v1071 = vpack.c.b16 %v1067, %v1066
        %1076 = vmatpush.bf16.msra.mxu0 0
        %1077 = vmatpush.bf16.msra.mxu0 0
        %1078 = vmatpush.bf16.msra.mxu0 0
        %1079 = vmatpush.bf16.msra.mxu0 0
        %1080 = vmatpush.bf16.msra.mxu0 %v1071
        %1081 = vmatpush.bf16.msra.mxu0 %v1070
        %1082 = vmatpush.bf16.msra.mxu0 %v1069
        %1083 = vmatpush.bf16.msra.mxu0 %v1068
        %1084 = vmatmul.bf16.gmra.mxu0 %v368
        %v1085 = vpop.f32.mrf.mxu0
        %v1086 = vadd.f32 0.0, %v1085
        %v1087 = vpop.f32.mrf.mxu0
        %v1088 = vadd.f32 0.0, %v1087
        %1089 = vmatmul.bf16.gmra.mxu0 %v371
        %v1090 = vpop.f32.mrf.mxu0
        %v1091 = vadd.f32 0.0, %v1090
        %v1092 = vpop.f32.mrf.mxu0
        %v1093 = vadd.f32 0.0, %v1092
        %1094 = vmatmul.bf16.gmra.mxu0 %v374
        %v1095 = vpop.f32.mrf.mxu0
        %v1096 = vadd.f32 0.0, %v1095
        %v1097 = vpop.f32.mrf.mxu0
        %v1098 = vadd.f32 0.0, %v1097
        %1099 = vmatmul.bf16.gmra.mxu0 %v377
        %v1100 = vpop.f32.mrf.mxu0
        %v1101 = vadd.f32 0.0, %v1100
        %v1102 = vpop.f32.mrf.mxu0
        %v1103 = vadd.f32 0.0, %v1102
        %1104 = vdwg.mxu0
        %v1113 = vunpack.c.l.b16 %v1036
        %v1114 = vunpack.c.l.b16 %v1037
        %v1115 = vunpack.c.l.b16 %v1038
        %v1116 = vunpack.c.l.b16 %v1039
        %v1117 = vunpack.c.l.b16 %v1040
        %v1118 = vunpack.c.l.b16 %v1041
        %v1119 = vunpack.c.l.b16 %v1042
        %v1120 = vunpack.c.l.b16 %v1043
        %v1121 = vpack.c.b16 %v1114, %v1113
        %v1122 = vpack.c.b16 %v1116, %v1115
        %v1123 = vpack.c.b16 %v1118, %v1117
        %v1124 = vpack.c.b16 %v1120, %v1119
        %1129 = vmatpush.bf16.msra.mxu0 0
        %1130 = vmatpush.bf16.msra.mxu0 0
        %1131 = vmatpush.bf16.msra.mxu0 0
        %1132 = vmatpush.bf16.msra.mxu0 0
        %1133 = vmatpush.bf16.msra.mxu0 %v1124
        %1134 = vmatpush.bf16.msra.mxu0 %v1123
        %1135 = vmatpush.bf16.msra.mxu0 %v1122
        %1136 = vmatpush.bf16.msra.mxu0 %v1121
        %1137 = vmatmul.bf16.gmra.mxu0 %v453
        %v1138 = vpop.f32.mrf.mxu0
        %v1139 = vadd.f32 %v1086, %v1138
        %v1140 = vpop.f32.mrf.mxu0
        %v1141 = vadd.f32 %v1088, %v1140
        %1142 = vmatmul.bf16.gmra.mxu0 %v456
        %v1143 = vpop.f32.mrf.mxu0
        %v1144 = vadd.f32 %v1091, %v1143
        %v1145 = vpop.f32.mrf.mxu0
        %v1146 = vadd.f32 %v1093, %v1145
        %1147 = vmatmul.bf16.gmra.mxu0 %v459
        %v1148 = vpop.f32.mrf.mxu0
        %v1149 = vadd.f32 %v1096, %v1148
        %v1150 = vpop.f32.mrf.mxu0
        %v1151 = vadd.f32 %v1098, %v1150
        %1152 = vmatmul.bf16.gmra.mxu0 %v462
        %v1153 = vpop.f32.mrf.mxu0
        %v1154 = vadd.f32 %v1101, %v1153
        %v1155 = vpop.f32.mrf.mxu0
        %v1156 = vadd.f32 %v1103, %v1155
        %1157 = vdwg.mxu0
        %v1158 = vld [vmem:[%s595] sm:$0xf]
        %v1159 = vld [vmem:[%s595 + $0x4] sm:$0xf]
        %v1160 = vld [vmem:[%s595 + $0x8] sm:$0xf]
        %v1161 = vld [vmem:[%s595 + $0xc] sm:$0xf]
        %v1162 = vld [vmem:[%s595 + $0x10] sm:$0xf]
        %v1163 = vld [vmem:[%s595 + $0x14] sm:$0xf]
        %v1164 = vld [vmem:[%s595 + $0x18] sm:$0xf]
        %v1165 = vld [vmem:[%s595 + $0x1c] sm:$0xf]
        %v1174 = vunpack.c.l.b16 %v1158
        %v1175 = vunpack.c.l.b16 %v1159
        %v1176 = vunpack.c.l.b16 %v1160
        %v1177 = vunpack.c.l.b16 %v1161
        %v1178 = vunpack.c.l.b16 %v1162
        %v1179 = vunpack.c.l.b16 %v1163
        %v1180 = vunpack.c.l.b16 %v1164
        %v1181 = vunpack.c.l.b16 %v1165
        %v1182 = vpack.c.b16 %v1175, %v1174
        %v1183 = vpack.c.b16 %v1177, %v1176
        %v1184 = vpack.c.b16 %v1179, %v1178
        %v1185 = vpack.c.b16 %v1181, %v1180
        %1190 = vmatpush.bf16.msra.mxu0 0
        %1191 = vmatpush.bf16.msra.mxu0 0
        %1192 = vmatpush.bf16.msra.mxu0 0
        %1193 = vmatpush.bf16.msra.mxu0 0
        %1194 = vmatpush.bf16.msra.mxu0 %v1185
        %1195 = vmatpush.bf16.msra.mxu0 %v1184
        %1196 = vmatpush.bf16.msra.mxu0 %v1183
        %1197 = vmatpush.bf16.msra.mxu0 %v1182
        %1198 = vmatmul.bf16.gmra.mxu0 %v547
        %v1199 = vpop.f32.mrf.mxu0
        %v1200 = vadd.f32 0.0, %v1199
        %v1201 = vpop.f32.mrf.mxu0
        %v1202 = vadd.f32 0.0, %v1201
        %1203 = vmatmul.bf16.gmra.mxu0 %v550
        %v1204 = vpop.f32.mrf.mxu0
        %v1205 = vadd.f32 0.0, %v1204
        %v1206 = vpop.f32.mrf.mxu0
        %v1207 = vadd.f32 0.0, %v1206
        %1208 = vmatmul.bf16.gmra.mxu0 %v553
        %v1209 = vpop.f32.mrf.mxu0
        %v1210 = vadd.f32 0.0, %v1209
        %v1211 = vpop.f32.mrf.mxu0
        %v1212 = vadd.f32 0.0, %v1211
        %1213 = vmatmul.bf16.gmra.mxu0 %v556
        %v1214 = vpop.f32.mrf.mxu0
        %v1215 = vadd.f32 0.0, %v1214
        %v1216 = vpop.f32.mrf.mxu0
        %v1217 = vadd.f32 0.0, %v1216
        %1218 = vdwg.mxu0
        %v1219 = vadd.f32 %v1139, %v1200
        %v1220 = vadd.f32 %v1141, %v1202
        %v1221 = vadd.f32 %v1144, %v1205
        %v1222 = vadd.f32 %v1146, %v1207
        %v1223 = vadd.f32 %v1149, %v1210
        %v1224 = vadd.f32 %v1151, %v1212
        %v1225 = vadd.f32 %v1154, %v1215
        %v1226 = vadd.f32 %v1156, %v1217
        %v1227 = vld [vmem:[%s697] sm:$0xf]
        %v1228 = vld [vmem:[%s697 + $0x4] sm:$0xf]
        %v1229 = vld [vmem:[%s697 + $0x8] sm:$0xf]
        %v1230 = vld [vmem:[%s697 + $0xc] sm:$0xf]
        %v1231 = vld [vmem:[%s697 + $0x10] sm:$0xf]
        %v1232 = vld [vmem:[%s697 + $0x14] sm:$0xf]
        %v1233 = vld [vmem:[%s697 + $0x18] sm:$0xf]
        %v1234 = vld [vmem:[%s697 + $0x1c] sm:$0xf]
        %v1243 = vunpack.c.l.b16 %v1227
        %v1244 = vunpack.c.l.b16 %v1228
        %v1245 = vunpack.c.l.b16 %v1229
        %v1246 = vunpack.c.l.b16 %v1230
        %v1247 = vunpack.c.l.b16 %v1231
        %v1248 = vunpack.c.l.b16 %v1232
        %v1249 = vunpack.c.l.b16 %v1233
        %v1250 = vunpack.c.l.b16 %v1234
        %v1251 = vpack.c.b16 %v1244, %v1243
        %v1252 = vpack.c.b16 %v1246, %v1245
        %v1253 = vpack.c.b16 %v1248, %v1247
        %v1254 = vpack.c.b16 %v1250, %v1249
        %1259 = vmatpush.bf16.msra.mxu0 0
        %1260 = vmatpush.bf16.msra.mxu0 0
        %1261 = vmatpush.bf16.msra.mxu0 0
        %1262 = vmatpush.bf16.msra.mxu0 0
        %1263 = vmatpush.bf16.msra.mxu0 %v1254
        %1264 = vmatpush.bf16.msra.mxu0 %v1253
        %1265 = vmatpush.bf16.msra.mxu0 %v1252
        %1266 = vmatpush.bf16.msra.mxu0 %v1251
        %1267 = vmatmul.bf16.gmra.mxu0 %v649
        %v1268 = vpop.f32.mrf.mxu0
        %v1269 = vadd.f32 0.0, %v1268
        %v1270 = vpop.f32.mrf.mxu0
        %v1271 = vadd.f32 0.0, %v1270
        %1272 = vmatmul.bf16.gmra.mxu0 %v652
        %v1273 = vpop.f32.mrf.mxu0
        %v1274 = vadd.f32 0.0, %v1273
        %v1275 = vpop.f32.mrf.mxu0
        %v1276 = vadd.f32 0.0, %v1275
        %1277 = vmatmul.bf16.gmra.mxu0 %v655
        %v1278 = vpop.f32.mrf.mxu0
        %v1279 = vadd.f32 0.0, %v1278
        %v1280 = vpop.f32.mrf.mxu0
        %v1281 = vadd.f32 0.0, %v1280
        %1282 = vmatmul.bf16.gmra.mxu0 %v658
        %v1283 = vpop.f32.mrf.mxu0
        %v1284 = vadd.f32 0.0, %v1283
        %v1285 = vpop.f32.mrf.mxu0
        %v1286 = vadd.f32 0.0, %v1285
        %1287 = vdwg.mxu0
        %v1288 = vadd.f32 %v1219, %v1269
        %v1289 = vadd.f32 %v1220, %v1271
        %v1290 = vadd.f32 %v1221, %v1274
        %v1291 = vadd.f32 %v1222, %v1276
        %v1292 = vadd.f32 %v1223, %v1279
        %v1293 = vadd.f32 %v1224, %v1281
        %v1294 = vadd.f32 %v1225, %v1284
        %v1295 = vadd.f32 %v1226, %v1286
        %s1296 = scalar_lea.vmem %s250, 160
        %v1297 = vld [vmem:[%s1296] sm:$0xf]
        %v1298 = vld [vmem:[%s1296 + $0x4] sm:$0xf]
        %v1299 = vld [vmem:[%s1296 + $0x8] sm:$0xf]
        %v1300 = vld [vmem:[%s1296 + $0xc] sm:$0xf]
        %v1301 = vld [vmem:[%s1296 + $0x10] sm:$0xf]
        %v1302 = vld [vmem:[%s1296 + $0x14] sm:$0xf]
        %v1303 = vld [vmem:[%s1296 + $0x18] sm:$0xf]
        %v1304 = vld [vmem:[%s1296 + $0x1c] sm:$0xf]
        %v1313 = vunpack.c.l.b16 %v1297
        %v1314 = vunpack.c.l.b16 %v1298
        %v1315 = vunpack.c.l.b16 %v1299
        %v1316 = vunpack.c.l.b16 %v1300
        %v1317 = vunpack.c.l.b16 %v1301
        %v1318 = vunpack.c.l.b16 %v1302
        %v1319 = vunpack.c.l.b16 %v1303
        %v1320 = vunpack.c.l.b16 %v1304
        %v1321 = vpack.c.b16 %v1314, %v1313
        %v1322 = vpack.c.b16 %v1316, %v1315
        %v1323 = vpack.c.b16 %v1318, %v1317
        %v1324 = vpack.c.b16 %v1320, %v1319
        %1329 = vmatpush.bf16.msra.mxu0 0
        %1330 = vmatpush.bf16.msra.mxu0 0
        %1331 = vmatpush.bf16.msra.mxu0 0
        %1332 = vmatpush.bf16.msra.mxu0 0
        %1333 = vmatpush.bf16.msra.mxu0 %v1324
        %1334 = vmatpush.bf16.msra.mxu0 %v1323
        %1335 = vmatpush.bf16.msra.mxu0 %v1322
        %1336 = vmatpush.bf16.msra.mxu0 %v1321
        %1337 = vmatmul.bf16.gmra.mxu0 %v751
        %v1338 = vpop.f32.mrf.mxu0
        %v1339 = vadd.f32 0.0, %v1338
        %v1340 = vpop.f32.mrf.mxu0
        %v1341 = vadd.f32 0.0, %v1340
        %1342 = vmatmul.bf16.gmra.mxu0 %v754
        %v1343 = vpop.f32.mrf.mxu0
        %v1344 = vadd.f32 0.0, %v1343
        %v1345 = vpop.f32.mrf.mxu0
        %v1346 = vadd.f32 0.0, %v1345
        %1347 = vmatmul.bf16.gmra.mxu0 %v757
        %v1348 = vpop.f32.mrf.mxu0
        %v1349 = vadd.f32 0.0, %v1348
        %v1350 = vpop.f32.mrf.mxu0
        %v1351 = vadd.f32 0.0, %v1350
        %1352 = vmatmul.bf16.gmra.mxu0 %v760
        %v1353 = vpop.f32.mrf.mxu0
        %v1354 = vadd.f32 0.0, %v1353
        %v1355 = vpop.f32.mrf.mxu0
        %v1356 = vadd.f32 0.0, %v1355
        %1357 = vdwg.mxu0
        %v1358 = vadd.f32 %v1288, %v1339
        %v1359 = vadd.f32 %v1289, %v1341
        %v1360 = vadd.f32 %v1290, %v1344
        %v1361 = vadd.f32 %v1291, %v1346
        %v1362 = vadd.f32 %v1292, %v1349
        %v1363 = vadd.f32 %v1293, %v1351
        %v1364 = vadd.f32 %v1294, %v1354
        %v1365 = vadd.f32 %v1295, %v1356
        %1366 = vrot.lane.b32.xlu0 %v1358, 127
        %v1367 = vpop.permute.xlu0 %1366
        %1368 = vrot.lane.b32.xlu0 %v1359, 127
        %v1369 = vpop.permute.xlu0 %1368
        %1370 = vrot.lane.b32.xlu0 %v1360, 127
        %v1371 = vpop.permute.xlu0 %1370
        %1372 = vrot.lane.b32.xlu0 %v1361, 127
        %v1373 = vpop.permute.xlu0 %1372
        %1374 = vrot.lane.b32.xlu0 %v1362, 127
        %v1375 = vpop.permute.xlu0 %1374
        %1376 = vrot.lane.b32.xlu0 %v1363, 127
        %v1377 = vpop.permute.xlu0 %1376
        %1378 = vrot.lane.b32.xlu0 %v1364, 127
        %v1379 = vpop.permute.xlu0 %1378
        %1380 = vrot.lane.b32.xlu0 %v1365, 127
        %v1381 = vpop.permute.xlu0 %1380
        %v1382 = vmax.f32 %v1358, %v1367
        %v1383 = vmax.f32 %v1359, %v1369
        %v1384 = vmax.f32 %v1360, %v1371
        %v1385 = vmax.f32 %v1361, %v1373
        %v1386 = vmax.f32 %v1362, %v1375
        %v1387 = vmax.f32 %v1363, %v1377
        %v1388 = vmax.f32 %v1364, %v1379
        %v1389 = vmax.f32 %v1365, %v1381
        %1390 = vrot.lane.b32.xlu0 %v1358, 1
        %v1391 = vpop.permute.xlu0 %1390
        %1392 = vrot.lane.b32.xlu0 %v1359, 1
        %v1393 = vpop.permute.xlu0 %1392
        %1394 = vrot.lane.b32.xlu0 %v1360, 1
        %v1395 = vpop.permute.xlu0 %1394
        %1396 = vrot.lane.b32.xlu0 %v1361, 1
        %v1397 = vpop.permute.xlu0 %1396
        %1398 = vrot.lane.b32.xlu0 %v1362, 1
        %v1399 = vpop.permute.xlu0 %1398
        %1400 = vrot.lane.b32.xlu0 %v1363, 1
        %v1401 = vpop.permute.xlu0 %1400
        %1402 = vrot.lane.b32.xlu0 %v1364, 1
        %v1403 = vpop.permute.xlu0 %1402
        %1404 = vrot.lane.b32.xlu0 %v1365, 1
        %v1405 = vpop.permute.xlu0 %1404
        %v1406 = vadd.f32 %v1391, %v839
        %v1407 = vadd.f32 %v1393, %v839
        %v1408 = vadd.f32 %v1395, %v839
        %v1409 = vadd.f32 %v1397, %v839
        %v1410 = vadd.f32 %v1399, %v839
        %v1411 = vadd.f32 %v1401, %v839
        %v1412 = vadd.f32 %v1403, %v839
        %v1413 = vadd.f32 %v1405, %v839
        %v1414 = vmax.f32 %v1382, %v1406
        %v1415 = vmax.f32 %v1383, %v1407
        %v1416 = vmax.f32 %v1384, %v1408
        %v1417 = vmax.f32 %v1385, %v1409
        %v1418 = vmax.f32 %v1386, %v1410
        %v1419 = vmax.f32 %v1387, %v1411
        %v1420 = vmax.f32 %v1388, %v1412
        %v1421 = vmax.f32 %v1389, %v1413
        %1422 = vrot.lane.b32.xlu0 %v1414, 120
        %v1423 = vpop.permute.xlu0 %1422
        %1424 = vrot.lane.b32.xlu0 %v1415, 120
        %v1425 = vpop.permute.xlu0 %1424
        %1426 = vrot.lane.b32.xlu0 %v1416, 120
        %v1427 = vpop.permute.xlu0 %1426
        %1428 = vrot.lane.b32.xlu0 %v1417, 120
        %v1429 = vpop.permute.xlu0 %1428
        %1430 = vrot.lane.b32.xlu0 %v1418, 120
        %v1431 = vpop.permute.xlu0 %1430
        %1432 = vrot.lane.b32.xlu0 %v1419, 120
        %v1433 = vpop.permute.xlu0 %1432
        %1434 = vrot.lane.b32.xlu0 %v1420, 120
        %v1435 = vpop.permute.xlu0 %1434
        %1436 = vrot.lane.b32.xlu0 %v1421, 120
        %v1437 = vpop.permute.xlu0 %1436
        %v1438 = vmax.f32 %v1414, %v1423
        %v1439 = vmax.f32 %v1415, %v1425
        %v1440 = vmax.f32 %v1416, %v1427
        %v1441 = vmax.f32 %v1417, %v1429
        %v1442 = vmax.f32 %v1418, %v1431
        %v1443 = vmax.f32 %v1419, %v1433
        %v1444 = vmax.f32 %v1420, %v1435
        %v1445 = vmax.f32 %v1421, %v1437
        %1446 = vrot.lane.b32.xlu0 %v1414, 8
        %v1447 = vpop.permute.xlu0 %1446
        %1448 = vrot.lane.b32.xlu0 %v1415, 8
        %v1449 = vpop.permute.xlu0 %1448
        %1450 = vrot.lane.b32.xlu0 %v1416, 8
        %v1451 = vpop.permute.xlu0 %1450
        %1452 = vrot.lane.b32.xlu0 %v1417, 8
        %v1453 = vpop.permute.xlu0 %1452
        %1454 = vrot.lane.b32.xlu0 %v1418, 8
        %v1455 = vpop.permute.xlu0 %1454
        %1456 = vrot.lane.b32.xlu0 %v1419, 8
        %v1457 = vpop.permute.xlu0 %1456
        %1458 = vrot.lane.b32.xlu0 %v1420, 8
        %v1459 = vpop.permute.xlu0 %1458
        %1460 = vrot.lane.b32.xlu0 %v1421, 8
        %v1461 = vpop.permute.xlu0 %1460
        %v1462 = vadd.f32 %v1447, %v896
        %v1463 = vadd.f32 %v1449, %v896
        %v1464 = vadd.f32 %v1451, %v896
        %v1465 = vadd.f32 %v1453, %v896
        %v1466 = vadd.f32 %v1455, %v896
        %v1467 = vadd.f32 %v1457, %v896
        %v1468 = vadd.f32 %v1459, %v896
        %v1469 = vadd.f32 %v1461, %v896
        %v1470 = vmax.f32 %v1438, %v1462
        %v1471 = vmax.f32 %v1439, %v1463
        %v1472 = vmax.f32 %v1440, %v1464
        %v1473 = vmax.f32 %v1441, %v1465
        %v1474 = vmax.f32 %v1442, %v1466
        %v1475 = vmax.f32 %v1443, %v1467
        %v1476 = vmax.f32 %v1444, %v1468
        %v1477 = vmax.f32 %v1445, %v1469
        %v1478 = vadd.f32 %v1470, %v916
        %v1479 = vadd.f32 %v1471, %v921
        %v1480 = vadd.f32 %v1472, %v926
        %v1481 = vadd.f32 %v1473, %v931
        %v1482 = vadd.f32 %v1474, %v936
        %v1483 = vadd.f32 %v1475, %v941
        %v1484 = vadd.f32 %v1476, %v946
        %v1485 = vadd.f32 %v1477, %v951
        %v1486 = vmax.f32 %v1478, 0.0
        %v1487 = vmax.f32 %v1479, 0.0
        %v1488 = vmax.f32 %v1480, 0.0
        %v1489 = vmax.f32 %v1481, 0.0
        %v1490 = vmax.f32 %v1482, 0.0
        %v1491 = vmax.f32 %v1483, 0.0
        %v1492 = vmax.f32 %v1484, 0.0
        %v1493 = vmax.f32 %v1485, 0.0
        %v1494 = vmul.f32 %v1486, %v969
        %v1495 = vmul.f32 %v1487, %v969
        %v1496 = vmul.f32 %v1488, %v969
        %v1497 = vmul.f32 %v1489, %v969
        %v1498 = vmul.f32 %v1490, %v969
        %v1499 = vmul.f32 %v1491, %v969
        %v1500 = vmul.f32 %v1492, %v969
        %v1501 = vmul.f32 %v1493, %v969
        %1502 = vadd.xlane.f32.xlu0 %v1494
        %v1503 = vpop.xlane.xlu0 %1502
        %1504 = vadd.xlane.f32.xlu0 %v1495
        %v1505 = vpop.xlane.xlu0 %1504
        %1506 = vadd.xlane.f32.xlu0 %v1496
        %v1507 = vpop.xlane.xlu0 %1506
        %1508 = vadd.xlane.f32.xlu0 %v1497
        %v1509 = vpop.xlane.xlu0 %1508
        %1510 = vadd.xlane.f32.xlu0 %v1498
        %v1511 = vpop.xlane.xlu0 %1510
        %1512 = vadd.xlane.f32.xlu0 %v1499
        %v1513 = vpop.xlane.xlu0 %1512
        %1514 = vadd.xlane.f32.xlu0 %v1500
        %v1515 = vpop.xlane.xlu0 %1514
        %1516 = vadd.xlane.f32.xlu0 %v1501
        %v1517 = vpop.xlane.xlu0 %1516
        %v1526 = vperm.slane %v1503, %v1003
        %v1527 = vperm.slane %v1505, %v1005
        %v1528 = vsel %vm1007, %v1527, %v1526
        %v1529 = vperm.slane %v1507, %v1009
        %v1530 = vsel %vm1011, %v1529, %v1528
        %v1531 = vperm.slane %v1509, %v1013
        %v1532 = vsel %vm1015, %v1531, %v1530
        %v1533 = vperm.slane %v1511, %v1017
        %v1534 = vsel %vm1019, %v1533, %v1532
        %v1535 = vperm.slane %v1513, %v1021
        %v1536 = vsel %vm1023, %v1535, %v1534
        %v1537 = vperm.slane %v1515, %v1025
        %v1538 = vsel %vm1027, %v1537, %v1536
        %v1539 = vperm.slane %v1517, %v1029
        %v1540 = vsel %vm1031, %v1539, %v1538
        %1542 = vst.msk [vmem:[#allocation2 + $0x1] sm:$0x1] %vm1034, %v1540
        %v1543 = vld [vmem:[%s493] sm:$0xf]
        %v1544 = vld [vmem:[%s493 + $0x4] sm:$0xf]
        %v1545 = vld [vmem:[%s493 + $0x8] sm:$0xf]
        %v1546 = vld [vmem:[%s493 + $0xc] sm:$0xf]
        %v1547 = vld [vmem:[%s493 + $0x10] sm:$0xf]
        %v1548 = vld [vmem:[%s493 + $0x14] sm:$0xf]
        %v1549 = vld [vmem:[%s493 + $0x18] sm:$0xf]
        %v1550 = vld [vmem:[%s493 + $0x1c] sm:$0xf]
        %v1551 = vld [vmem:[%s595] sm:$0xf]
        %v1552 = vld [vmem:[%s595 + $0x4] sm:$0xf]
        %v1553 = vld [vmem:[%s595 + $0x8] sm:$0xf]
        %v1554 = vld [vmem:[%s595 + $0xc] sm:$0xf]
        %v1555 = vld [vmem:[%s595 + $0x10] sm:$0xf]
        %v1556 = vld [vmem:[%s595 + $0x14] sm:$0xf]
        %v1557 = vld [vmem:[%s595 + $0x18] sm:$0xf]
        %v1558 = vld [vmem:[%s595 + $0x1c] sm:$0xf]
        %v1567 = vunpack.c.l.b16 %v1551
        %v1568 = vunpack.c.l.b16 %v1552
        %v1569 = vunpack.c.l.b16 %v1553
        %v1570 = vunpack.c.l.b16 %v1554
        %v1571 = vunpack.c.l.b16 %v1555
        %v1572 = vunpack.c.l.b16 %v1556
        %v1573 = vunpack.c.l.b16 %v1557
        %v1574 = vunpack.c.l.b16 %v1558
        %v1575 = vpack.c.b16 %v1568, %v1567
        %v1576 = vpack.c.b16 %v1570, %v1569
        %v1577 = vpack.c.b16 %v1572, %v1571
        %v1578 = vpack.c.b16 %v1574, %v1573
        %1583 = vmatpush.bf16.msra.mxu0 0
        %1584 = vmatpush.bf16.msra.mxu0 0
        %1585 = vmatpush.bf16.msra.mxu0 0
        %1586 = vmatpush.bf16.msra.mxu0 0
        %1587 = vmatpush.bf16.msra.mxu0 %v1578
        %1588 = vmatpush.bf16.msra.mxu0 %v1577
        %1589 = vmatpush.bf16.msra.mxu0 %v1576
        %1590 = vmatpush.bf16.msra.mxu0 %v1575
        %1591 = vmatmul.bf16.gmra.mxu0 %v368
        %v1592 = vpop.f32.mrf.mxu0
        %v1593 = vadd.f32 0.0, %v1592
        %v1594 = vpop.f32.mrf.mxu0
        %v1595 = vadd.f32 0.0, %v1594
        %1596 = vmatmul.bf16.gmra.mxu0 %v371
        %v1597 = vpop.f32.mrf.mxu0
        %v1598 = vadd.f32 0.0, %v1597
        %v1599 = vpop.f32.mrf.mxu0
        %v1600 = vadd.f32 0.0, %v1599
        %1601 = vmatmul.bf16.gmra.mxu0 %v374
        %v1602 = vpop.f32.mrf.mxu0
        %v1603 = vadd.f32 0.0, %v1602
        %v1604 = vpop.f32.mrf.mxu0
        %v1605 = vadd.f32 0.0, %v1604
        %1606 = vmatmul.bf16.gmra.mxu0 %v377
        %v1607 = vpop.f32.mrf.mxu0
        %v1608 = vadd.f32 0.0, %v1607
        %v1609 = vpop.f32.mrf.mxu0
        %v1610 = vadd.f32 0.0, %v1609
        %1611 = vdwg.mxu0
        %v1620 = vunpack.c.l.b16 %v1543
        %v1621 = vunpack.c.l.b16 %v1544
        %v1622 = vunpack.c.l.b16 %v1545
        %v1623 = vunpack.c.l.b16 %v1546
        %v1624 = vunpack.c.l.b16 %v1547
        %v1625 = vunpack.c.l.b16 %v1548
        %v1626 = vunpack.c.l.b16 %v1549
        %v1627 = vunpack.c.l.b16 %v1550
        %v1628 = vpack.c.b16 %v1621, %v1620
        %v1629 = vpack.c.b16 %v1623, %v1622
        %v1630 = vpack.c.b16 %v1625, %v1624
        %v1631 = vpack.c.b16 %v1627, %v1626
        %1636 = vmatpush.bf16.msra.mxu0 0
        %1637 = vmatpush.bf16.msra.mxu0 0
        %1638 = vmatpush.bf16.msra.mxu0 0
        %1639 = vmatpush.bf16.msra.mxu0 0
        %1640 = vmatpush.bf16.msra.mxu0 %v1631
        %1641 = vmatpush.bf16.msra.mxu0 %v1630
        %1642 = vmatpush.bf16.msra.mxu0 %v1629
        %1643 = vmatpush.bf16.msra.mxu0 %v1628
        %1644 = vmatmul.bf16.gmra.mxu0 %v453
        %v1645 = vpop.f32.mrf.mxu0
        %v1646 = vadd.f32 %v1593, %v1645
        %v1647 = vpop.f32.mrf.mxu0
        %v1648 = vadd.f32 %v1595, %v1647
        %1649 = vmatmul.bf16.gmra.mxu0 %v456
        %v1650 = vpop.f32.mrf.mxu0
        %v1651 = vadd.f32 %v1598, %v1650
        %v1652 = vpop.f32.mrf.mxu0
        %v1653 = vadd.f32 %v1600, %v1652
        %1654 = vmatmul.bf16.gmra.mxu0 %v459
        %v1655 = vpop.f32.mrf.mxu0
        %v1656 = vadd.f32 %v1603, %v1655
        %v1657 = vpop.f32.mrf.mxu0
        %v1658 = vadd.f32 %v1605, %v1657
        %1659 = vmatmul.bf16.gmra.mxu0 %v462
        %v1660 = vpop.f32.mrf.mxu0
        %v1661 = vadd.f32 %v1608, %v1660
        %v1662 = vpop.f32.mrf.mxu0
        %v1663 = vadd.f32 %v1610, %v1662
        %1664 = vdwg.mxu0
        %v1665 = vld [vmem:[%s697] sm:$0xf]
        %v1666 = vld [vmem:[%s697 + $0x4] sm:$0xf]
        %v1667 = vld [vmem:[%s697 + $0x8] sm:$0xf]
        %v1668 = vld [vmem:[%s697 + $0xc] sm:$0xf]
        %v1669 = vld [vmem:[%s697 + $0x10] sm:$0xf]
        %v1670 = vld [vmem:[%s697 + $0x14] sm:$0xf]
        %v1671 = vld [vmem:[%s697 + $0x18] sm:$0xf]
        %v1672 = vld [vmem:[%s697 + $0x1c] sm:$0xf]
        %v1681 = vunpack.c.l.b16 %v1665
        %v1682 = vunpack.c.l.b16 %v1666
        %v1683 = vunpack.c.l.b16 %v1667
        %v1684 = vunpack.c.l.b16 %v1668
        %v1685 = vunpack.c.l.b16 %v1669
        %v1686 = vunpack.c.l.b16 %v1670
        %v1687 = vunpack.c.l.b16 %v1671
        %v1688 = vunpack.c.l.b16 %v1672
        %v1689 = vpack.c.b16 %v1682, %v1681
        %v1690 = vpack.c.b16 %v1684, %v1683
        %v1691 = vpack.c.b16 %v1686, %v1685
        %v1692 = vpack.c.b16 %v1688, %v1687
        %1697 = vmatpush.bf16.msra.mxu0 0
        %1698 = vmatpush.bf16.msra.mxu0 0
        %1699 = vmatpush.bf16.msra.mxu0 0
        %1700 = vmatpush.bf16.msra.mxu0 0
        %1701 = vmatpush.bf16.msra.mxu0 %v1692
        %1702 = vmatpush.bf16.msra.mxu0 %v1691
        %1703 = vmatpush.bf16.msra.mxu0 %v1690
        %1704 = vmatpush.bf16.msra.mxu0 %v1689
        %1705 = vmatmul.bf16.gmra.mxu0 %v547
        %v1706 = vpop.f32.mrf.mxu0
        %v1707 = vadd.f32 0.0, %v1706
        %v1708 = vpop.f32.mrf.mxu0
        %v1709 = vadd.f32 0.0, %v1708
        %1710 = vmatmul.bf16.gmra.mxu0 %v550
        %v1711 = vpop.f32.mrf.mxu0
        %v1712 = vadd.f32 0.0, %v1711
        %v1713 = vpop.f32.mrf.mxu0
        %v1714 = vadd.f32 0.0, %v1713
        %1715 = vmatmul.bf16.gmra.mxu0 %v553
        %v1716 = vpop.f32.mrf.mxu0
        %v1717 = vadd.f32 0.0, %v1716
        %v1718 = vpop.f32.mrf.mxu0
        %v1719 = vadd.f32 0.0, %v1718
        %1720 = vmatmul.bf16.gmra.mxu0 %v556
        %v1721 = vpop.f32.mrf.mxu0
        %v1722 = vadd.f32 0.0, %v1721
        %v1723 = vpop.f32.mrf.mxu0
        %v1724 = vadd.f32 0.0, %v1723
        %1725 = vdwg.mxu0
        %v1726 = vadd.f32 %v1646, %v1707
        %v1727 = vadd.f32 %v1648, %v1709
        %v1728 = vadd.f32 %v1651, %v1712
        %v1729 = vadd.f32 %v1653, %v1714
        %v1730 = vadd.f32 %v1656, %v1717
        %v1731 = vadd.f32 %v1658, %v1719
        %v1732 = vadd.f32 %v1661, %v1722
        %v1733 = vadd.f32 %v1663, %v1724
        %v1734 = vld [vmem:[%s1296] sm:$0xf]
        %v1735 = vld [vmem:[%s1296 + $0x4] sm:$0xf]
        %v1736 = vld [vmem:[%s1296 + $0x8] sm:$0xf]
        %v1737 = vld [vmem:[%s1296 + $0xc] sm:$0xf]
        %v1738 = vld [vmem:[%s1296 + $0x10] sm:$0xf]
        %v1739 = vld [vmem:[%s1296 + $0x14] sm:$0xf]
        %v1740 = vld [vmem:[%s1296 + $0x18] sm:$0xf]
        %v1741 = vld [vmem:[%s1296 + $0x1c] sm:$0xf]
        %v1750 = vunpack.c.l.b16 %v1734
        %v1751 = vunpack.c.l.b16 %v1735
        %v1752 = vunpack.c.l.b16 %v1736
        %v1753 = vunpack.c.l.b16 %v1737
        %v1754 = vunpack.c.l.b16 %v1738
        %v1755 = vunpack.c.l.b16 %v1739
        %v1756 = vunpack.c.l.b16 %v1740
        %v1757 = vunpack.c.l.b16 %v1741
        %v1758 = vpack.c.b16 %v1751, %v1750
        %v1759 = vpack.c.b16 %v1753, %v1752
        %v1760 = vpack.c.b16 %v1755, %v1754
        %v1761 = vpack.c.b16 %v1757, %v1756
        %1766 = vmatpush.bf16.msra.mxu0 0
        %1767 = vmatpush.bf16.msra.mxu0 0
        %1768 = vmatpush.bf16.msra.mxu0 0
        %1769 = vmatpush.bf16.msra.mxu0 0
        %1770 = vmatpush.bf16.msra.mxu0 %v1761
        %1771 = vmatpush.bf16.msra.mxu0 %v1760
        %1772 = vmatpush.bf16.msra.mxu0 %v1759
        %1773 = vmatpush.bf16.msra.mxu0 %v1758
        %1774 = vmatmul.bf16.gmra.mxu0 %v649
        %v1775 = vpop.f32.mrf.mxu0
        %v1776 = vadd.f32 0.0, %v1775
        %v1777 = vpop.f32.mrf.mxu0
        %v1778 = vadd.f32 0.0, %v1777
        %1779 = vmatmul.bf16.gmra.mxu0 %v652
        %v1780 = vpop.f32.mrf.mxu0
        %v1781 = vadd.f32 0.0, %v1780
        %v1782 = vpop.f32.mrf.mxu0
        %v1783 = vadd.f32 0.0, %v1782
        %1784 = vmatmul.bf16.gmra.mxu0 %v655
        %v1785 = vpop.f32.mrf.mxu0
        %v1786 = vadd.f32 0.0, %v1785
        %v1787 = vpop.f32.mrf.mxu0
        %v1788 = vadd.f32 0.0, %v1787
        %1789 = vmatmul.bf16.gmra.mxu0 %v658
        %v1790 = vpop.f32.mrf.mxu0
        %v1791 = vadd.f32 0.0, %v1790
        %v1792 = vpop.f32.mrf.mxu0
        %v1793 = vadd.f32 0.0, %v1792
        %1794 = vdwg.mxu0
        %v1795 = vadd.f32 %v1726, %v1776
        %v1796 = vadd.f32 %v1727, %v1778
        %v1797 = vadd.f32 %v1728, %v1781
        %v1798 = vadd.f32 %v1729, %v1783
        %v1799 = vadd.f32 %v1730, %v1786
        %v1800 = vadd.f32 %v1731, %v1788
        %v1801 = vadd.f32 %v1732, %v1791
        %v1802 = vadd.f32 %v1733, %v1793
        %s1803 = scalar_lea.vmem %s250, 192
        %v1804 = vld [vmem:[%s1803] sm:$0xf]
        %v1805 = vld [vmem:[%s1803 + $0x4] sm:$0xf]
        %v1806 = vld [vmem:[%s1803 + $0x8] sm:$0xf]
        %v1807 = vld [vmem:[%s1803 + $0xc] sm:$0xf]
        %v1808 = vld [vmem:[%s1803 + $0x10] sm:$0xf]
        %v1809 = vld [vmem:[%s1803 + $0x14] sm:$0xf]
        %v1810 = vld [vmem:[%s1803 + $0x18] sm:$0xf]
        %v1811 = vld [vmem:[%s1803 + $0x1c] sm:$0xf]
        %v1820 = vunpack.c.l.b16 %v1804
        %v1821 = vunpack.c.l.b16 %v1805
        %v1822 = vunpack.c.l.b16 %v1806
        %v1823 = vunpack.c.l.b16 %v1807
        %v1824 = vunpack.c.l.b16 %v1808
        %v1825 = vunpack.c.l.b16 %v1809
        %v1826 = vunpack.c.l.b16 %v1810
        %v1827 = vunpack.c.l.b16 %v1811
        %v1828 = vpack.c.b16 %v1821, %v1820
        %v1829 = vpack.c.b16 %v1823, %v1822
        %v1830 = vpack.c.b16 %v1825, %v1824
        %v1831 = vpack.c.b16 %v1827, %v1826
        %1836 = vmatpush.bf16.msra.mxu0 0
        %1837 = vmatpush.bf16.msra.mxu0 0
        %1838 = vmatpush.bf16.msra.mxu0 0
        %1839 = vmatpush.bf16.msra.mxu0 0
        %1840 = vmatpush.bf16.msra.mxu0 %v1831
        %1841 = vmatpush.bf16.msra.mxu0 %v1830
        %1842 = vmatpush.bf16.msra.mxu0 %v1829
        %1843 = vmatpush.bf16.msra.mxu0 %v1828
        %1844 = vmatmul.bf16.gmra.mxu0 %v751
        %v1845 = vpop.f32.mrf.mxu0
        %v1846 = vadd.f32 0.0, %v1845
        %v1847 = vpop.f32.mrf.mxu0
        %v1848 = vadd.f32 0.0, %v1847
        %1849 = vmatmul.bf16.gmra.mxu0 %v754
        %v1850 = vpop.f32.mrf.mxu0
        %v1851 = vadd.f32 0.0, %v1850
        %v1852 = vpop.f32.mrf.mxu0
        %v1853 = vadd.f32 0.0, %v1852
        %1854 = vmatmul.bf16.gmra.mxu0 %v757
        %v1855 = vpop.f32.mrf.mxu0
        %v1856 = vadd.f32 0.0, %v1855
        %v1857 = vpop.f32.mrf.mxu0
        %v1858 = vadd.f32 0.0, %v1857
        %1859 = vmatmul.bf16.gmra.mxu0 %v760
        %v1860 = vpop.f32.mrf.mxu0
        %v1861 = vadd.f32 0.0, %v1860
        %v1862 = vpop.f32.mrf.mxu0
        %v1863 = vadd.f32 0.0, %v1862
        %1864 = vdwg.mxu0
        %v1865 = vadd.f32 %v1795, %v1846
        %v1866 = vadd.f32 %v1796, %v1848
        %v1867 = vadd.f32 %v1797, %v1851
        %v1868 = vadd.f32 %v1798, %v1853
        %v1869 = vadd.f32 %v1799, %v1856
        %v1870 = vadd.f32 %v1800, %v1858
        %v1871 = vadd.f32 %v1801, %v1861
        %v1872 = vadd.f32 %v1802, %v1863
        %1873 = vrot.lane.b32.xlu0 %v1865, 127
        %v1874 = vpop.permute.xlu0 %1873
        %1875 = vrot.lane.b32.xlu0 %v1866, 127
        %v1876 = vpop.permute.xlu0 %1875
        %1877 = vrot.lane.b32.xlu0 %v1867, 127
        %v1878 = vpop.permute.xlu0 %1877
        %1879 = vrot.lane.b32.xlu0 %v1868, 127
        %v1880 = vpop.permute.xlu0 %1879
        %1881 = vrot.lane.b32.xlu0 %v1869, 127
        %v1882 = vpop.permute.xlu0 %1881
        %1883 = vrot.lane.b32.xlu0 %v1870, 127
        %v1884 = vpop.permute.xlu0 %1883
        %1885 = vrot.lane.b32.xlu0 %v1871, 127
        %v1886 = vpop.permute.xlu0 %1885
        %1887 = vrot.lane.b32.xlu0 %v1872, 127
        %v1888 = vpop.permute.xlu0 %1887
        %v1889 = vmax.f32 %v1865, %v1874
        %v1890 = vmax.f32 %v1866, %v1876
        %v1891 = vmax.f32 %v1867, %v1878
        %v1892 = vmax.f32 %v1868, %v1880
        %v1893 = vmax.f32 %v1869, %v1882
        %v1894 = vmax.f32 %v1870, %v1884
        %v1895 = vmax.f32 %v1871, %v1886
        %v1896 = vmax.f32 %v1872, %v1888
        %1897 = vrot.lane.b32.xlu0 %v1865, 1
        %v1898 = vpop.permute.xlu0 %1897
        %1899 = vrot.lane.b32.xlu0 %v1866, 1
        %v1900 = vpop.permute.xlu0 %1899
        %1901 = vrot.lane.b32.xlu0 %v1867, 1
        %v1902 = vpop.permute.xlu0 %1901
        %1903 = vrot.lane.b32.xlu0 %v1868, 1
        %v1904 = vpop.permute.xlu0 %1903
        %1905 = vrot.lane.b32.xlu0 %v1869, 1
        %v1906 = vpop.permute.xlu0 %1905
        %1907 = vrot.lane.b32.xlu0 %v1870, 1
        %v1908 = vpop.permute.xlu0 %1907
        %1909 = vrot.lane.b32.xlu0 %v1871, 1
        %v1910 = vpop.permute.xlu0 %1909
        %1911 = vrot.lane.b32.xlu0 %v1872, 1
        %v1912 = vpop.permute.xlu0 %1911
        %v1913 = vadd.f32 %v1898, %v839
        %v1914 = vadd.f32 %v1900, %v839
        %v1915 = vadd.f32 %v1902, %v839
        %v1916 = vadd.f32 %v1904, %v839
        %v1917 = vadd.f32 %v1906, %v839
        %v1918 = vadd.f32 %v1908, %v839
        %v1919 = vadd.f32 %v1910, %v839
        %v1920 = vadd.f32 %v1912, %v839
        %v1921 = vmax.f32 %v1889, %v1913
        %v1922 = vmax.f32 %v1890, %v1914
        %v1923 = vmax.f32 %v1891, %v1915
        %v1924 = vmax.f32 %v1892, %v1916
        %v1925 = vmax.f32 %v1893, %v1917
        %v1926 = vmax.f32 %v1894, %v1918
        %v1927 = vmax.f32 %v1895, %v1919
        %v1928 = vmax.f32 %v1896, %v1920
        %1929 = vrot.lane.b32.xlu0 %v1921, 120
        %v1930 = vpop.permute.xlu0 %1929
        %1931 = vrot.lane.b32.xlu0 %v1922, 120
        %v1932 = vpop.permute.xlu0 %1931
        %1933 = vrot.lane.b32.xlu0 %v1923, 120
        %v1934 = vpop.permute.xlu0 %1933
        %1935 = vrot.lane.b32.xlu0 %v1924, 120
        %v1936 = vpop.permute.xlu0 %1935
        %1937 = vrot.lane.b32.xlu0 %v1925, 120
        %v1938 = vpop.permute.xlu0 %1937
        %1939 = vrot.lane.b32.xlu0 %v1926, 120
        %v1940 = vpop.permute.xlu0 %1939
        %1941 = vrot.lane.b32.xlu0 %v1927, 120
        %v1942 = vpop.permute.xlu0 %1941
        %1943 = vrot.lane.b32.xlu0 %v1928, 120
        %v1944 = vpop.permute.xlu0 %1943
        %v1945 = vmax.f32 %v1921, %v1930
        %v1946 = vmax.f32 %v1922, %v1932
        %v1947 = vmax.f32 %v1923, %v1934
        %v1948 = vmax.f32 %v1924, %v1936
        %v1949 = vmax.f32 %v1925, %v1938
        %v1950 = vmax.f32 %v1926, %v1940
        %v1951 = vmax.f32 %v1927, %v1942
        %v1952 = vmax.f32 %v1928, %v1944
        %1953 = vrot.lane.b32.xlu0 %v1921, 8
        %v1954 = vpop.permute.xlu0 %1953
        %1955 = vrot.lane.b32.xlu0 %v1922, 8
        %v1956 = vpop.permute.xlu0 %1955
        %1957 = vrot.lane.b32.xlu0 %v1923, 8
        %v1958 = vpop.permute.xlu0 %1957
        %1959 = vrot.lane.b32.xlu0 %v1924, 8
        %v1960 = vpop.permute.xlu0 %1959
        %1961 = vrot.lane.b32.xlu0 %v1925, 8
        %v1962 = vpop.permute.xlu0 %1961
        %1963 = vrot.lane.b32.xlu0 %v1926, 8
        %v1964 = vpop.permute.xlu0 %1963
        %1965 = vrot.lane.b32.xlu0 %v1927, 8
        %v1966 = vpop.permute.xlu0 %1965
        %1967 = vrot.lane.b32.xlu0 %v1928, 8
        %v1968 = vpop.permute.xlu0 %1967
        %v1969 = vadd.f32 %v1954, %v896
        %v1970 = vadd.f32 %v1956, %v896
        %v1971 = vadd.f32 %v1958, %v896
        %v1972 = vadd.f32 %v1960, %v896
        %v1973 = vadd.f32 %v1962, %v896
        %v1974 = vadd.f32 %v1964, %v896
        %v1975 = vadd.f32 %v1966, %v896
        %v1976 = vadd.f32 %v1968, %v896
        %v1977 = vmax.f32 %v1945, %v1969
        %v1978 = vmax.f32 %v1946, %v1970
        %v1979 = vmax.f32 %v1947, %v1971
        %v1980 = vmax.f32 %v1948, %v1972
        %v1981 = vmax.f32 %v1949, %v1973
        %v1982 = vmax.f32 %v1950, %v1974
        %v1983 = vmax.f32 %v1951, %v1975
        %v1984 = vmax.f32 %v1952, %v1976
        %v1985 = vadd.f32 %v1977, %v916
        %v1986 = vadd.f32 %v1978, %v921
        %v1987 = vadd.f32 %v1979, %v926
        %v1988 = vadd.f32 %v1980, %v931
        %v1989 = vadd.f32 %v1981, %v936
        %v1990 = vadd.f32 %v1982, %v941
        %v1991 = vadd.f32 %v1983, %v946
        %v1992 = vadd.f32 %v1984, %v951
        %v1993 = vmax.f32 %v1985, 0.0
        %v1994 = vmax.f32 %v1986, 0.0
        %v1995 = vmax.f32 %v1987, 0.0
        %v1996 = vmax.f32 %v1988, 0.0
        %v1997 = vmax.f32 %v1989, 0.0
        %v1998 = vmax.f32 %v1990, 0.0
        %v1999 = vmax.f32 %v1991, 0.0
        %v2000 = vmax.f32 %v1992, 0.0
        %v2001 = vmul.f32 %v1993, %v969
        %v2002 = vmul.f32 %v1994, %v969
        %v2003 = vmul.f32 %v1995, %v969
        %v2004 = vmul.f32 %v1996, %v969
        %v2005 = vmul.f32 %v1997, %v969
        %v2006 = vmul.f32 %v1998, %v969
        %v2007 = vmul.f32 %v1999, %v969
        %v2008 = vmul.f32 %v2000, %v969
        %2009 = vadd.xlane.f32.xlu0 %v2001
        %v2010 = vpop.xlane.xlu0 %2009
        %2011 = vadd.xlane.f32.xlu0 %v2002
        %v2012 = vpop.xlane.xlu0 %2011
        %2013 = vadd.xlane.f32.xlu0 %v2003
        %v2014 = vpop.xlane.xlu0 %2013
        %2015 = vadd.xlane.f32.xlu0 %v2004
        %v2016 = vpop.xlane.xlu0 %2015
        %2017 = vadd.xlane.f32.xlu0 %v2005
        %v2018 = vpop.xlane.xlu0 %2017
        %2019 = vadd.xlane.f32.xlu0 %v2006
        %v2020 = vpop.xlane.xlu0 %2019
        %2021 = vadd.xlane.f32.xlu0 %v2007
        %v2022 = vpop.xlane.xlu0 %2021
        %2023 = vadd.xlane.f32.xlu0 %v2008
        %v2024 = vpop.xlane.xlu0 %2023
        %v2033 = vperm.slane %v2010, %v1003
        %v2034 = vperm.slane %v2012, %v1005
        %v2035 = vsel %vm1007, %v2034, %v2033
        %v2036 = vperm.slane %v2014, %v1009
        %v2037 = vsel %vm1011, %v2036, %v2035
        %v2038 = vperm.slane %v2016, %v1013
        %v2039 = vsel %vm1015, %v2038, %v2037
        %v2040 = vperm.slane %v2018, %v1017
        %v2041 = vsel %vm1019, %v2040, %v2039
        %v2042 = vperm.slane %v2020, %v1021
        %v2043 = vsel %vm1023, %v2042, %v2041
        %v2044 = vperm.slane %v2022, %v1025
        %v2045 = vsel %vm1027, %v2044, %v2043
        %v2046 = vperm.slane %v2024, %v1029
        %v2047 = vsel %vm1031, %v2046, %v2045
        %2049 = vst.msk [vmem:[#allocation2 + $0x2] sm:$0x1] %vm1034, %v2047
        %v2050 = vld [vmem:[%s595] sm:$0xf]
        %v2051 = vld [vmem:[%s595 + $0x4] sm:$0xf]
        %v2052 = vld [vmem:[%s595 + $0x8] sm:$0xf]
        %v2053 = vld [vmem:[%s595 + $0xc] sm:$0xf]
        %v2054 = vld [vmem:[%s595 + $0x10] sm:$0xf]
        %v2055 = vld [vmem:[%s595 + $0x14] sm:$0xf]
        %v2056 = vld [vmem:[%s595 + $0x18] sm:$0xf]
        %v2057 = vld [vmem:[%s595 + $0x1c] sm:$0xf]
        %v2058 = vld [vmem:[%s697] sm:$0xf]
        %v2059 = vld [vmem:[%s697 + $0x4] sm:$0xf]
        %v2060 = vld [vmem:[%s697 + $0x8] sm:$0xf]
        %v2061 = vld [vmem:[%s697 + $0xc] sm:$0xf]
        %v2062 = vld [vmem:[%s697 + $0x10] sm:$0xf]
        %v2063 = vld [vmem:[%s697 + $0x14] sm:$0xf]
        %v2064 = vld [vmem:[%s697 + $0x18] sm:$0xf]
        %v2065 = vld [vmem:[%s697 + $0x1c] sm:$0xf]
        %v2074 = vunpack.c.l.b16 %v2058
        %v2075 = vunpack.c.l.b16 %v2059
        %v2076 = vunpack.c.l.b16 %v2060
        %v2077 = vunpack.c.l.b16 %v2061
        %v2078 = vunpack.c.l.b16 %v2062
        %v2079 = vunpack.c.l.b16 %v2063
        %v2080 = vunpack.c.l.b16 %v2064
        %v2081 = vunpack.c.l.b16 %v2065
        %v2082 = vpack.c.b16 %v2075, %v2074
        %v2083 = vpack.c.b16 %v2077, %v2076
        %v2084 = vpack.c.b16 %v2079, %v2078
        %v2085 = vpack.c.b16 %v2081, %v2080
        %2090 = vmatpush.bf16.msra.mxu0 0
        %2091 = vmatpush.bf16.msra.mxu0 0
        %2092 = vmatpush.bf16.msra.mxu0 0
        %2093 = vmatpush.bf16.msra.mxu0 0
        %2094 = vmatpush.bf16.msra.mxu0 %v2085
        %2095 = vmatpush.bf16.msra.mxu0 %v2084
        %2096 = vmatpush.bf16.msra.mxu0 %v2083
        %2097 = vmatpush.bf16.msra.mxu0 %v2082
        %2098 = vmatmul.bf16.gmra.mxu0 %v368
        %v2099 = vpop.f32.mrf.mxu0
        %v2100 = vadd.f32 0.0, %v2099
        %v2101 = vpop.f32.mrf.mxu0
        %v2102 = vadd.f32 0.0, %v2101
        %2103 = vmatmul.bf16.gmra.mxu0 %v371
        %v2104 = vpop.f32.mrf.mxu0
        %v2105 = vadd.f32 0.0, %v2104
        %v2106 = vpop.f32.mrf.mxu0
        %v2107 = vadd.f32 0.0, %v2106
        %2108 = vmatmul.bf16.gmra.mxu0 %v374
        %v2109 = vpop.f32.mrf.mxu0
        %v2110 = vadd.f32 0.0, %v2109
        %v2111 = vpop.f32.mrf.mxu0
        %v2112 = vadd.f32 0.0, %v2111
        %2113 = vmatmul.bf16.gmra.mxu0 %v377
        %v2114 = vpop.f32.mrf.mxu0
        %v2115 = vadd.f32 0.0, %v2114
        %v2116 = vpop.f32.mrf.mxu0
        %v2117 = vadd.f32 0.0, %v2116
        %2118 = vdwg.mxu0
        %v2127 = vunpack.c.l.b16 %v2050
        %v2128 = vunpack.c.l.b16 %v2051
        %v2129 = vunpack.c.l.b16 %v2052
        %v2130 = vunpack.c.l.b16 %v2053
        %v2131 = vunpack.c.l.b16 %v2054
        %v2132 = vunpack.c.l.b16 %v2055
        %v2133 = vunpack.c.l.b16 %v2056
        %v2134 = vunpack.c.l.b16 %v2057
        %v2135 = vpack.c.b16 %v2128, %v2127
        %v2136 = vpack.c.b16 %v2130, %v2129
        %v2137 = vpack.c.b16 %v2132, %v2131
        %v2138 = vpack.c.b16 %v2134, %v2133
        %2143 = vmatpush.bf16.msra.mxu0 0
        %2144 = vmatpush.bf16.msra.mxu0 0
        %2145 = vmatpush.bf16.msra.mxu0 0
        %2146 = vmatpush.bf16.msra.mxu0 0
        %2147 = vmatpush.bf16.msra.mxu0 %v2138
        %2148 = vmatpush.bf16.msra.mxu0 %v2137
        %2149 = vmatpush.bf16.msra.mxu0 %v2136
        %2150 = vmatpush.bf16.msra.mxu0 %v2135
        %2151 = vmatmul.bf16.gmra.mxu0 %v453
        %v2152 = vpop.f32.mrf.mxu0
        %v2153 = vadd.f32 %v2100, %v2152
        %v2154 = vpop.f32.mrf.mxu0
        %v2155 = vadd.f32 %v2102, %v2154
        %2156 = vmatmul.bf16.gmra.mxu0 %v456
        %v2157 = vpop.f32.mrf.mxu0
        %v2158 = vadd.f32 %v2105, %v2157
        %v2159 = vpop.f32.mrf.mxu0
        %v2160 = vadd.f32 %v2107, %v2159
        %2161 = vmatmul.bf16.gmra.mxu0 %v459
        %v2162 = vpop.f32.mrf.mxu0
        %v2163 = vadd.f32 %v2110, %v2162
        %v2164 = vpop.f32.mrf.mxu0
        %v2165 = vadd.f32 %v2112, %v2164
        %2166 = vmatmul.bf16.gmra.mxu0 %v462
        %v2167 = vpop.f32.mrf.mxu0
        %v2168 = vadd.f32 %v2115, %v2167
        %v2169 = vpop.f32.mrf.mxu0
        %v2170 = vadd.f32 %v2117, %v2169
        %2171 = vdwg.mxu0
        %v2172 = vld [vmem:[%s1296] sm:$0xf]
        %v2173 = vld [vmem:[%s1296 + $0x4] sm:$0xf]
        %v2174 = vld [vmem:[%s1296 + $0x8] sm:$0xf]
        %v2175 = vld [vmem:[%s1296 + $0xc] sm:$0xf]
        %v2176 = vld [vmem:[%s1296 + $0x10] sm:$0xf]
        %v2177 = vld [vmem:[%s1296 + $0x14] sm:$0xf]
        %v2178 = vld [vmem:[%s1296 + $0x18] sm:$0xf]
        %v2179 = vld [vmem:[%s1296 + $0x1c] sm:$0xf]
        %v2188 = vunpack.c.l.b16 %v2172
        %v2189 = vunpack.c.l.b16 %v2173
        %v2190 = vunpack.c.l.b16 %v2174
        %v2191 = vunpack.c.l.b16 %v2175
        %v2192 = vunpack.c.l.b16 %v2176
        %v2193 = vunpack.c.l.b16 %v2177
        %v2194 = vunpack.c.l.b16 %v2178
        %v2195 = vunpack.c.l.b16 %v2179
        %v2196 = vpack.c.b16 %v2189, %v2188
        %v2197 = vpack.c.b16 %v2191, %v2190
        %v2198 = vpack.c.b16 %v2193, %v2192
        %v2199 = vpack.c.b16 %v2195, %v2194
        %2204 = vmatpush.bf16.msra.mxu0 0
        %2205 = vmatpush.bf16.msra.mxu0 0
        %2206 = vmatpush.bf16.msra.mxu0 0
        %2207 = vmatpush.bf16.msra.mxu0 0
        %2208 = vmatpush.bf16.msra.mxu0 %v2199
        %2209 = vmatpush.bf16.msra.mxu0 %v2198
        %2210 = vmatpush.bf16.msra.mxu0 %v2197
        %2211 = vmatpush.bf16.msra.mxu0 %v2196
        %2212 = vmatmul.bf16.gmra.mxu0 %v547
        %v2213 = vpop.f32.mrf.mxu0
        %v2214 = vadd.f32 0.0, %v2213
        %v2215 = vpop.f32.mrf.mxu0
        %v2216 = vadd.f32 0.0, %v2215
        %2217 = vmatmul.bf16.gmra.mxu0 %v550
        %v2218 = vpop.f32.mrf.mxu0
        %v2219 = vadd.f32 0.0, %v2218
        %v2220 = vpop.f32.mrf.mxu0
        %v2221 = vadd.f32 0.0, %v2220
        %2222 = vmatmul.bf16.gmra.mxu0 %v553
        %v2223 = vpop.f32.mrf.mxu0
        %v2224 = vadd.f32 0.0, %v2223
        %v2225 = vpop.f32.mrf.mxu0
        %v2226 = vadd.f32 0.0, %v2225
        %2227 = vmatmul.bf16.gmra.mxu0 %v556
        %v2228 = vpop.f32.mrf.mxu0
        %v2229 = vadd.f32 0.0, %v2228
        %v2230 = vpop.f32.mrf.mxu0
        %v2231 = vadd.f32 0.0, %v2230
        %2232 = vdwg.mxu0
        %v2233 = vadd.f32 %v2153, %v2214
        %v2234 = vadd.f32 %v2155, %v2216
        %v2235 = vadd.f32 %v2158, %v2219
        %v2236 = vadd.f32 %v2160, %v2221
        %v2237 = vadd.f32 %v2163, %v2224
        %v2238 = vadd.f32 %v2165, %v2226
        %v2239 = vadd.f32 %v2168, %v2229
        %v2240 = vadd.f32 %v2170, %v2231
        %v2241 = vld [vmem:[%s1803] sm:$0xf]
        %v2242 = vld [vmem:[%s1803 + $0x4] sm:$0xf]
        %v2243 = vld [vmem:[%s1803 + $0x8] sm:$0xf]
        %v2244 = vld [vmem:[%s1803 + $0xc] sm:$0xf]
        %v2245 = vld [vmem:[%s1803 + $0x10] sm:$0xf]
        %v2246 = vld [vmem:[%s1803 + $0x14] sm:$0xf]
        %v2247 = vld [vmem:[%s1803 + $0x18] sm:$0xf]
        %v2248 = vld [vmem:[%s1803 + $0x1c] sm:$0xf]
        %v2257 = vunpack.c.l.b16 %v2241
        %v2258 = vunpack.c.l.b16 %v2242
        %v2259 = vunpack.c.l.b16 %v2243
        %v2260 = vunpack.c.l.b16 %v2244
        %v2261 = vunpack.c.l.b16 %v2245
        %v2262 = vunpack.c.l.b16 %v2246
        %v2263 = vunpack.c.l.b16 %v2247
        %v2264 = vunpack.c.l.b16 %v2248
        %v2265 = vpack.c.b16 %v2258, %v2257
        %v2266 = vpack.c.b16 %v2260, %v2259
        %v2267 = vpack.c.b16 %v2262, %v2261
        %v2268 = vpack.c.b16 %v2264, %v2263
        %2273 = vmatpush.bf16.msra.mxu0 0
        %2274 = vmatpush.bf16.msra.mxu0 0
        %2275 = vmatpush.bf16.msra.mxu0 0
        %2276 = vmatpush.bf16.msra.mxu0 0
        %2277 = vmatpush.bf16.msra.mxu0 %v2268
        %2278 = vmatpush.bf16.msra.mxu0 %v2267
        %2279 = vmatpush.bf16.msra.mxu0 %v2266
        %2280 = vmatpush.bf16.msra.mxu0 %v2265
        %2281 = vmatmul.bf16.gmra.mxu0 %v649
        %v2282 = vpop.f32.mrf.mxu0
        %v2283 = vadd.f32 0.0, %v2282
        %v2284 = vpop.f32.mrf.mxu0
        %v2285 = vadd.f32 0.0, %v2284
        %2286 = vmatmul.bf16.gmra.mxu0 %v652
        %v2287 = vpop.f32.mrf.mxu0
        %v2288 = vadd.f32 0.0, %v2287
        %v2289 = vpop.f32.mrf.mxu0
        %v2290 = vadd.f32 0.0, %v2289
        %2291 = vmatmul.bf16.gmra.mxu0 %v655
        %v2292 = vpop.f32.mrf.mxu0
        %v2293 = vadd.f32 0.0, %v2292
        %v2294 = vpop.f32.mrf.mxu0
        %v2295 = vadd.f32 0.0, %v2294
        %2296 = vmatmul.bf16.gmra.mxu0 %v658
        %v2297 = vpop.f32.mrf.mxu0
        %v2298 = vadd.f32 0.0, %v2297
        %v2299 = vpop.f32.mrf.mxu0
        %v2300 = vadd.f32 0.0, %v2299
        %2301 = vdwg.mxu0
        %v2302 = vadd.f32 %v2233, %v2283
        %v2303 = vadd.f32 %v2234, %v2285
        %v2304 = vadd.f32 %v2235, %v2288
        %v2305 = vadd.f32 %v2236, %v2290
        %v2306 = vadd.f32 %v2237, %v2293
        %v2307 = vadd.f32 %v2238, %v2295
        %v2308 = vadd.f32 %v2239, %v2298
        %v2309 = vadd.f32 %v2240, %v2300
        %s2310 = scalar_lea.vmem %s250, 224
        %v2311 = vld [vmem:[%s2310] sm:$0xf]
        %v2312 = vld [vmem:[%s2310 + $0x4] sm:$0xf]
        %v2313 = vld [vmem:[%s2310 + $0x8] sm:$0xf]
        %v2314 = vld [vmem:[%s2310 + $0xc] sm:$0xf]
        %v2315 = vld [vmem:[%s2310 + $0x10] sm:$0xf]
        %v2316 = vld [vmem:[%s2310 + $0x14] sm:$0xf]
        %v2317 = vld [vmem:[%s2310 + $0x18] sm:$0xf]
        %v2318 = vld [vmem:[%s2310 + $0x1c] sm:$0xf]
        %v2327 = vunpack.c.l.b16 %v2311
        %v2328 = vunpack.c.l.b16 %v2312
        %v2329 = vunpack.c.l.b16 %v2313
        %v2330 = vunpack.c.l.b16 %v2314
        %v2331 = vunpack.c.l.b16 %v2315
        %v2332 = vunpack.c.l.b16 %v2316
        %v2333 = vunpack.c.l.b16 %v2317
        %v2334 = vunpack.c.l.b16 %v2318
        %v2335 = vpack.c.b16 %v2328, %v2327
        %v2336 = vpack.c.b16 %v2330, %v2329
        %v2337 = vpack.c.b16 %v2332, %v2331
        %v2338 = vpack.c.b16 %v2334, %v2333
        %2343 = vmatpush.bf16.msra.mxu0 0
        %2344 = vmatpush.bf16.msra.mxu0 0
        %2345 = vmatpush.bf16.msra.mxu0 0
        %2346 = vmatpush.bf16.msra.mxu0 0
        %2347 = vmatpush.bf16.msra.mxu0 %v2338
        %2348 = vmatpush.bf16.msra.mxu0 %v2337
        %2349 = vmatpush.bf16.msra.mxu0 %v2336
        %2350 = vmatpush.bf16.msra.mxu0 %v2335
        %2351 = vmatmul.bf16.gmra.mxu0 %v751
        %v2352 = vpop.f32.mrf.mxu0
        %v2353 = vadd.f32 0.0, %v2352
        %v2354 = vpop.f32.mrf.mxu0
        %v2355 = vadd.f32 0.0, %v2354
        %2356 = vmatmul.bf16.gmra.mxu0 %v754
        %v2357 = vpop.f32.mrf.mxu0
        %v2358 = vadd.f32 0.0, %v2357
        %v2359 = vpop.f32.mrf.mxu0
        %v2360 = vadd.f32 0.0, %v2359
        %2361 = vmatmul.bf16.gmra.mxu0 %v757
        %v2362 = vpop.f32.mrf.mxu0
        %v2363 = vadd.f32 0.0, %v2362
        %v2364 = vpop.f32.mrf.mxu0
        %v2365 = vadd.f32 0.0, %v2364
        %2366 = vmatmul.bf16.gmra.mxu0 %v760
        %v2367 = vpop.f32.mrf.mxu0
        %v2368 = vadd.f32 0.0, %v2367
        %v2369 = vpop.f32.mrf.mxu0
        %v2370 = vadd.f32 0.0, %v2369
        %2371 = vdwg.mxu0
        %v2372 = vadd.f32 %v2302, %v2353
        %v2373 = vadd.f32 %v2303, %v2355
        %v2374 = vadd.f32 %v2304, %v2358
        %v2375 = vadd.f32 %v2305, %v2360
        %v2376 = vadd.f32 %v2306, %v2363
        %v2377 = vadd.f32 %v2307, %v2365
        %v2378 = vadd.f32 %v2308, %v2368
        %v2379 = vadd.f32 %v2309, %v2370
        %2380 = vrot.lane.b32.xlu0 %v2372, 127
        %v2381 = vpop.permute.xlu0 %2380
        %2382 = vrot.lane.b32.xlu0 %v2373, 127
        %v2383 = vpop.permute.xlu0 %2382
        %2384 = vrot.lane.b32.xlu0 %v2374, 127
        %v2385 = vpop.permute.xlu0 %2384
        %2386 = vrot.lane.b32.xlu0 %v2375, 127
        %v2387 = vpop.permute.xlu0 %2386
        %2388 = vrot.lane.b32.xlu0 %v2376, 127
        %v2389 = vpop.permute.xlu0 %2388
        %2390 = vrot.lane.b32.xlu0 %v2377, 127
        %v2391 = vpop.permute.xlu0 %2390
        %2392 = vrot.lane.b32.xlu0 %v2378, 127
        %v2393 = vpop.permute.xlu0 %2392
        %2394 = vrot.lane.b32.xlu0 %v2379, 127
        %v2395 = vpop.permute.xlu0 %2394
        %v2396 = vmax.f32 %v2372, %v2381
        %v2397 = vmax.f32 %v2373, %v2383
        %v2398 = vmax.f32 %v2374, %v2385
        %v2399 = vmax.f32 %v2375, %v2387
        %v2400 = vmax.f32 %v2376, %v2389
        %v2401 = vmax.f32 %v2377, %v2391
        %v2402 = vmax.f32 %v2378, %v2393
        %v2403 = vmax.f32 %v2379, %v2395
        %2404 = vrot.lane.b32.xlu0 %v2372, 1
        %v2405 = vpop.permute.xlu0 %2404
        %2406 = vrot.lane.b32.xlu0 %v2373, 1
        %v2407 = vpop.permute.xlu0 %2406
        %2408 = vrot.lane.b32.xlu0 %v2374, 1
        %v2409 = vpop.permute.xlu0 %2408
        %2410 = vrot.lane.b32.xlu0 %v2375, 1
        %v2411 = vpop.permute.xlu0 %2410
        %2412 = vrot.lane.b32.xlu0 %v2376, 1
        %v2413 = vpop.permute.xlu0 %2412
        %2414 = vrot.lane.b32.xlu0 %v2377, 1
        %v2415 = vpop.permute.xlu0 %2414
        %2416 = vrot.lane.b32.xlu0 %v2378, 1
        %v2417 = vpop.permute.xlu0 %2416
        %2418 = vrot.lane.b32.xlu0 %v2379, 1
        %v2419 = vpop.permute.xlu0 %2418
        %v2420 = vadd.f32 %v2405, %v839
        %v2421 = vadd.f32 %v2407, %v839
        %v2422 = vadd.f32 %v2409, %v839
        %v2423 = vadd.f32 %v2411, %v839
        %v2424 = vadd.f32 %v2413, %v839
        %v2425 = vadd.f32 %v2415, %v839
        %v2426 = vadd.f32 %v2417, %v839
        %v2427 = vadd.f32 %v2419, %v839
        %v2428 = vmax.f32 %v2396, %v2420
        %v2429 = vmax.f32 %v2397, %v2421
        %v2430 = vmax.f32 %v2398, %v2422
        %v2431 = vmax.f32 %v2399, %v2423
        %v2432 = vmax.f32 %v2400, %v2424
        %v2433 = vmax.f32 %v2401, %v2425
        %v2434 = vmax.f32 %v2402, %v2426
        %v2435 = vmax.f32 %v2403, %v2427
        %2436 = vrot.lane.b32.xlu0 %v2428, 120
        %v2437 = vpop.permute.xlu0 %2436
        %2438 = vrot.lane.b32.xlu0 %v2429, 120
        %v2439 = vpop.permute.xlu0 %2438
        %2440 = vrot.lane.b32.xlu0 %v2430, 120
        %v2441 = vpop.permute.xlu0 %2440
        %2442 = vrot.lane.b32.xlu0 %v2431, 120
        %v2443 = vpop.permute.xlu0 %2442
        %2444 = vrot.lane.b32.xlu0 %v2432, 120
        %v2445 = vpop.permute.xlu0 %2444
        %2446 = vrot.lane.b32.xlu0 %v2433, 120
        %v2447 = vpop.permute.xlu0 %2446
        %2448 = vrot.lane.b32.xlu0 %v2434, 120
        %v2449 = vpop.permute.xlu0 %2448
        %2450 = vrot.lane.b32.xlu0 %v2435, 120
        %v2451 = vpop.permute.xlu0 %2450
        %v2452 = vmax.f32 %v2428, %v2437
        %v2453 = vmax.f32 %v2429, %v2439
        %v2454 = vmax.f32 %v2430, %v2441
        %v2455 = vmax.f32 %v2431, %v2443
        %v2456 = vmax.f32 %v2432, %v2445
        %v2457 = vmax.f32 %v2433, %v2447
        %v2458 = vmax.f32 %v2434, %v2449
        %v2459 = vmax.f32 %v2435, %v2451
        %2460 = vrot.lane.b32.xlu0 %v2428, 8
        %v2461 = vpop.permute.xlu0 %2460
        %2462 = vrot.lane.b32.xlu0 %v2429, 8
        %v2463 = vpop.permute.xlu0 %2462
        %2464 = vrot.lane.b32.xlu0 %v2430, 8
        %v2465 = vpop.permute.xlu0 %2464
        %2466 = vrot.lane.b32.xlu0 %v2431, 8
        %v2467 = vpop.permute.xlu0 %2466
        %2468 = vrot.lane.b32.xlu0 %v2432, 8
        %v2469 = vpop.permute.xlu0 %2468
        %2470 = vrot.lane.b32.xlu0 %v2433, 8
        %v2471 = vpop.permute.xlu0 %2470
        %2472 = vrot.lane.b32.xlu0 %v2434, 8
        %v2473 = vpop.permute.xlu0 %2472
        %2474 = vrot.lane.b32.xlu0 %v2435, 8
        %v2475 = vpop.permute.xlu0 %2474
        %v2476 = vadd.f32 %v2461, %v896
        %v2477 = vadd.f32 %v2463, %v896
        %v2478 = vadd.f32 %v2465, %v896
        %v2479 = vadd.f32 %v2467, %v896
        %v2480 = vadd.f32 %v2469, %v896
        %v2481 = vadd.f32 %v2471, %v896
        %v2482 = vadd.f32 %v2473, %v896
        %v2483 = vadd.f32 %v2475, %v896
        %v2484 = vmax.f32 %v2452, %v2476
        %v2485 = vmax.f32 %v2453, %v2477
        %v2486 = vmax.f32 %v2454, %v2478
        %v2487 = vmax.f32 %v2455, %v2479
        %v2488 = vmax.f32 %v2456, %v2480
        %v2489 = vmax.f32 %v2457, %v2481
        %v2490 = vmax.f32 %v2458, %v2482
        %v2491 = vmax.f32 %v2459, %v2483
        %v2492 = vadd.f32 %v2484, %v916
        %v2493 = vadd.f32 %v2485, %v921
        %v2494 = vadd.f32 %v2486, %v926
        %v2495 = vadd.f32 %v2487, %v931
        %v2496 = vadd.f32 %v2488, %v936
        %v2497 = vadd.f32 %v2489, %v941
        %v2498 = vadd.f32 %v2490, %v946
        %v2499 = vadd.f32 %v2491, %v951
        %v2500 = vmax.f32 %v2492, 0.0
        %v2501 = vmax.f32 %v2493, 0.0
        %v2502 = vmax.f32 %v2494, 0.0
        %v2503 = vmax.f32 %v2495, 0.0
        %v2504 = vmax.f32 %v2496, 0.0
        %v2505 = vmax.f32 %v2497, 0.0
        %v2506 = vmax.f32 %v2498, 0.0
        %v2507 = vmax.f32 %v2499, 0.0
        %v2508 = vmul.f32 %v2500, %v969
        %v2509 = vmul.f32 %v2501, %v969
        %v2510 = vmul.f32 %v2502, %v969
        %v2511 = vmul.f32 %v2503, %v969
        %v2512 = vmul.f32 %v2504, %v969
        %v2513 = vmul.f32 %v2505, %v969
        %v2514 = vmul.f32 %v2506, %v969
        %v2515 = vmul.f32 %v2507, %v969
        %2516 = vadd.xlane.f32.xlu0 %v2508
        %v2517 = vpop.xlane.xlu0 %2516
        %2518 = vadd.xlane.f32.xlu0 %v2509
        %v2519 = vpop.xlane.xlu0 %2518
        %2520 = vadd.xlane.f32.xlu0 %v2510
        %v2521 = vpop.xlane.xlu0 %2520
        %2522 = vadd.xlane.f32.xlu0 %v2511
        %v2523 = vpop.xlane.xlu0 %2522
        %2524 = vadd.xlane.f32.xlu0 %v2512
        %v2525 = vpop.xlane.xlu0 %2524
        %2526 = vadd.xlane.f32.xlu0 %v2513
        %v2527 = vpop.xlane.xlu0 %2526
        %2528 = vadd.xlane.f32.xlu0 %v2514
        %v2529 = vpop.xlane.xlu0 %2528
        %2530 = vadd.xlane.f32.xlu0 %v2515
        %v2531 = vpop.xlane.xlu0 %2530
        %v2540 = vperm.slane %v2517, %v1003
        %v2541 = vperm.slane %v2519, %v1005
        %v2542 = vsel %vm1007, %v2541, %v2540
        %v2543 = vperm.slane %v2521, %v1009
        %v2544 = vsel %vm1011, %v2543, %v2542
        %v2545 = vperm.slane %v2523, %v1013
        %v2546 = vsel %vm1015, %v2545, %v2544
        %v2547 = vperm.slane %v2525, %v1017
        %v2548 = vsel %vm1019, %v2547, %v2546
        %v2549 = vperm.slane %v2527, %v1021
        %v2550 = vsel %vm1023, %v2549, %v2548
        %v2551 = vperm.slane %v2529, %v1025
        %v2552 = vsel %vm1027, %v2551, %v2550
        %v2553 = vperm.slane %v2531, %v1029
        %v2554 = vsel %vm1031, %v2553, %v2552
        %2556 = vst.msk [vmem:[#allocation2 + $0x3] sm:$0x1] %vm1034, %v2554
        %v2557 = vld [vmem:[%s697] sm:$0xf]
        %v2558 = vld [vmem:[%s697 + $0x4] sm:$0xf]
        %v2559 = vld [vmem:[%s697 + $0x8] sm:$0xf]
        %v2560 = vld [vmem:[%s697 + $0xc] sm:$0xf]
        %v2561 = vld [vmem:[%s697 + $0x10] sm:$0xf]
        %v2562 = vld [vmem:[%s697 + $0x14] sm:$0xf]
        %v2563 = vld [vmem:[%s697 + $0x18] sm:$0xf]
        %v2564 = vld [vmem:[%s697 + $0x1c] sm:$0xf]
        %v2565 = vld [vmem:[%s1296] sm:$0xf]
        %v2566 = vld [vmem:[%s1296 + $0x4] sm:$0xf]
        %v2567 = vld [vmem:[%s1296 + $0x8] sm:$0xf]
        %v2568 = vld [vmem:[%s1296 + $0xc] sm:$0xf]
        %v2569 = vld [vmem:[%s1296 + $0x10] sm:$0xf]
        %v2570 = vld [vmem:[%s1296 + $0x14] sm:$0xf]
        %v2571 = vld [vmem:[%s1296 + $0x18] sm:$0xf]
        %v2572 = vld [vmem:[%s1296 + $0x1c] sm:$0xf]
        %v2581 = vunpack.c.l.b16 %v2565
        %v2582 = vunpack.c.l.b16 %v2566
        %v2583 = vunpack.c.l.b16 %v2567
        %v2584 = vunpack.c.l.b16 %v2568
        %v2585 = vunpack.c.l.b16 %v2569
        %v2586 = vunpack.c.l.b16 %v2570
        %v2587 = vunpack.c.l.b16 %v2571
        %v2588 = vunpack.c.l.b16 %v2572
        %v2589 = vpack.c.b16 %v2582, %v2581
        %v2590 = vpack.c.b16 %v2584, %v2583
        %v2591 = vpack.c.b16 %v2586, %v2585
        %v2592 = vpack.c.b16 %v2588, %v2587
        %2597 = vmatpush.bf16.msra.mxu0 0
        %2598 = vmatpush.bf16.msra.mxu0 0
        %2599 = vmatpush.bf16.msra.mxu0 0
        %2600 = vmatpush.bf16.msra.mxu0 0
        %2601 = vmatpush.bf16.msra.mxu0 %v2592
        %2602 = vmatpush.bf16.msra.mxu0 %v2591
        %2603 = vmatpush.bf16.msra.mxu0 %v2590
        %2604 = vmatpush.bf16.msra.mxu0 %v2589
        %2605 = vmatmul.bf16.gmra.mxu0 %v368
        %v2606 = vpop.f32.mrf.mxu0
        %v2607 = vadd.f32 0.0, %v2606
        %v2608 = vpop.f32.mrf.mxu0
        %v2609 = vadd.f32 0.0, %v2608
        %2610 = vmatmul.bf16.gmra.mxu0 %v371
        %v2611 = vpop.f32.mrf.mxu0
        %v2612 = vadd.f32 0.0, %v2611
        %v2613 = vpop.f32.mrf.mxu0
        %v2614 = vadd.f32 0.0, %v2613
        %2615 = vmatmul.bf16.gmra.mxu0 %v374
        %v2616 = vpop.f32.mrf.mxu0
        %v2617 = vadd.f32 0.0, %v2616
        %v2618 = vpop.f32.mrf.mxu0
        %v2619 = vadd.f32 0.0, %v2618
        %2620 = vmatmul.bf16.gmra.mxu0 %v377
        %v2621 = vpop.f32.mrf.mxu0
        %v2622 = vadd.f32 0.0, %v2621
        %v2623 = vpop.f32.mrf.mxu0
        %v2624 = vadd.f32 0.0, %v2623
        %2625 = vdwg.mxu0
        %v2634 = vunpack.c.l.b16 %v2557
        %v2635 = vunpack.c.l.b16 %v2558
        %v2636 = vunpack.c.l.b16 %v2559
        %v2637 = vunpack.c.l.b16 %v2560
        %v2638 = vunpack.c.l.b16 %v2561
        %v2639 = vunpack.c.l.b16 %v2562
        %v2640 = vunpack.c.l.b16 %v2563
        %v2641 = vunpack.c.l.b16 %v2564
        %v2642 = vpack.c.b16 %v2635, %v2634
        %v2643 = vpack.c.b16 %v2637, %v2636
        %v2644 = vpack.c.b16 %v2639, %v2638
        %v2645 = vpack.c.b16 %v2641, %v2640
        %2650 = vmatpush.bf16.msra.mxu0 0
        %2651 = vmatpush.bf16.msra.mxu0 0
        %2652 = vmatpush.bf16.msra.mxu0 0
        %2653 = vmatpush.bf16.msra.mxu0 0
        %2654 = vmatpush.bf16.msra.mxu0 %v2645
        %2655 = vmatpush.bf16.msra.mxu0 %v2644
        %2656 = vmatpush.bf16.msra.mxu0 %v2643
        %2657 = vmatpush.bf16.msra.mxu0 %v2642
        %2658 = vmatmul.bf16.gmra.mxu0 %v453
        %v2659 = vpop.f32.mrf.mxu0
        %v2660 = vadd.f32 %v2607, %v2659
        %v2661 = vpop.f32.mrf.mxu0
        %v2662 = vadd.f32 %v2609, %v2661
        %2663 = vmatmul.bf16.gmra.mxu0 %v456
        %v2664 = vpop.f32.mrf.mxu0
        %v2665 = vadd.f32 %v2612, %v2664
        %v2666 = vpop.f32.mrf.mxu0
        %v2667 = vadd.f32 %v2614, %v2666
        %2668 = vmatmul.bf16.gmra.mxu0 %v459
        %v2669 = vpop.f32.mrf.mxu0
        %v2670 = vadd.f32 %v2617, %v2669
        %v2671 = vpop.f32.mrf.mxu0
        %v2672 = vadd.f32 %v2619, %v2671
        %2673 = vmatmul.bf16.gmra.mxu0 %v462
        %v2674 = vpop.f32.mrf.mxu0
        %v2675 = vadd.f32 %v2622, %v2674
        %v2676 = vpop.f32.mrf.mxu0
        %v2677 = vadd.f32 %v2624, %v2676
        %2678 = vdwg.mxu0
        %v2679 = vld [vmem:[%s1803] sm:$0xf]
        %v2680 = vld [vmem:[%s1803 + $0x4] sm:$0xf]
        %v2681 = vld [vmem:[%s1803 + $0x8] sm:$0xf]
        %v2682 = vld [vmem:[%s1803 + $0xc] sm:$0xf]
        %v2683 = vld [vmem:[%s1803 + $0x10] sm:$0xf]
        %v2684 = vld [vmem:[%s1803 + $0x14] sm:$0xf]
        %v2685 = vld [vmem:[%s1803 + $0x18] sm:$0xf]
        %v2686 = vld [vmem:[%s1803 + $0x1c] sm:$0xf]
        %v2695 = vunpack.c.l.b16 %v2679
        %v2696 = vunpack.c.l.b16 %v2680
        %v2697 = vunpack.c.l.b16 %v2681
        %v2698 = vunpack.c.l.b16 %v2682
        %v2699 = vunpack.c.l.b16 %v2683
        %v2700 = vunpack.c.l.b16 %v2684
        %v2701 = vunpack.c.l.b16 %v2685
        %v2702 = vunpack.c.l.b16 %v2686
        %v2703 = vpack.c.b16 %v2696, %v2695
        %v2704 = vpack.c.b16 %v2698, %v2697
        %v2705 = vpack.c.b16 %v2700, %v2699
        %v2706 = vpack.c.b16 %v2702, %v2701
        %2711 = vmatpush.bf16.msra.mxu0 0
        %2712 = vmatpush.bf16.msra.mxu0 0
        %2713 = vmatpush.bf16.msra.mxu0 0
        %2714 = vmatpush.bf16.msra.mxu0 0
        %2715 = vmatpush.bf16.msra.mxu0 %v2706
        %2716 = vmatpush.bf16.msra.mxu0 %v2705
        %2717 = vmatpush.bf16.msra.mxu0 %v2704
        %2718 = vmatpush.bf16.msra.mxu0 %v2703
        %2719 = vmatmul.bf16.gmra.mxu0 %v547
        %v2720 = vpop.f32.mrf.mxu0
        %v2721 = vadd.f32 0.0, %v2720
        %v2722 = vpop.f32.mrf.mxu0
        %v2723 = vadd.f32 0.0, %v2722
        %2724 = vmatmul.bf16.gmra.mxu0 %v550
        %v2725 = vpop.f32.mrf.mxu0
        %v2726 = vadd.f32 0.0, %v2725
        %v2727 = vpop.f32.mrf.mxu0
        %v2728 = vadd.f32 0.0, %v2727
        %2729 = vmatmul.bf16.gmra.mxu0 %v553
        %v2730 = vpop.f32.mrf.mxu0
        %v2731 = vadd.f32 0.0, %v2730
        %v2732 = vpop.f32.mrf.mxu0
        %v2733 = vadd.f32 0.0, %v2732
        %2734 = vmatmul.bf16.gmra.mxu0 %v556
        %v2735 = vpop.f32.mrf.mxu0
        %v2736 = vadd.f32 0.0, %v2735
        %v2737 = vpop.f32.mrf.mxu0
        %v2738 = vadd.f32 0.0, %v2737
        %2739 = vdwg.mxu0
        %v2740 = vadd.f32 %v2660, %v2721
        %v2741 = vadd.f32 %v2662, %v2723
        %v2742 = vadd.f32 %v2665, %v2726
        %v2743 = vadd.f32 %v2667, %v2728
        %v2744 = vadd.f32 %v2670, %v2731
        %v2745 = vadd.f32 %v2672, %v2733
        %v2746 = vadd.f32 %v2675, %v2736
        %v2747 = vadd.f32 %v2677, %v2738
        %v2748 = vld [vmem:[%s2310] sm:$0xf]
        %v2749 = vld [vmem:[%s2310 + $0x4] sm:$0xf]
        %v2750 = vld [vmem:[%s2310 + $0x8] sm:$0xf]
        %v2751 = vld [vmem:[%s2310 + $0xc] sm:$0xf]
        %v2752 = vld [vmem:[%s2310 + $0x10] sm:$0xf]
        %v2753 = vld [vmem:[%s2310 + $0x14] sm:$0xf]
        %v2754 = vld [vmem:[%s2310 + $0x18] sm:$0xf]
        %v2755 = vld [vmem:[%s2310 + $0x1c] sm:$0xf]
        %v2764 = vunpack.c.l.b16 %v2748
        %v2765 = vunpack.c.l.b16 %v2749
        %v2766 = vunpack.c.l.b16 %v2750
        %v2767 = vunpack.c.l.b16 %v2751
        %v2768 = vunpack.c.l.b16 %v2752
        %v2769 = vunpack.c.l.b16 %v2753
        %v2770 = vunpack.c.l.b16 %v2754
        %v2771 = vunpack.c.l.b16 %v2755
        %v2772 = vpack.c.b16 %v2765, %v2764
        %v2773 = vpack.c.b16 %v2767, %v2766
        %v2774 = vpack.c.b16 %v2769, %v2768
        %v2775 = vpack.c.b16 %v2771, %v2770
        %2780 = vmatpush.bf16.msra.mxu0 0
        %2781 = vmatpush.bf16.msra.mxu0 0
        %2782 = vmatpush.bf16.msra.mxu0 0
        %2783 = vmatpush.bf16.msra.mxu0 0
        %2784 = vmatpush.bf16.msra.mxu0 %v2775
        %2785 = vmatpush.bf16.msra.mxu0 %v2774
        %2786 = vmatpush.bf16.msra.mxu0 %v2773
        %2787 = vmatpush.bf16.msra.mxu0 %v2772
        %2788 = vmatmul.bf16.gmra.mxu0 %v649
        %v2789 = vpop.f32.mrf.mxu0
        %v2790 = vadd.f32 0.0, %v2789
        %v2791 = vpop.f32.mrf.mxu0
        %v2792 = vadd.f32 0.0, %v2791
        %2793 = vmatmul.bf16.gmra.mxu0 %v652
        %v2794 = vpop.f32.mrf.mxu0
        %v2795 = vadd.f32 0.0, %v2794
        %v2796 = vpop.f32.mrf.mxu0
        %v2797 = vadd.f32 0.0, %v2796
        %2798 = vmatmul.bf16.gmra.mxu0 %v655
        %v2799 = vpop.f32.mrf.mxu0
        %v2800 = vadd.f32 0.0, %v2799
        %v2801 = vpop.f32.mrf.mxu0
        %v2802 = vadd.f32 0.0, %v2801
        %2803 = vmatmul.bf16.gmra.mxu0 %v658
        %v2804 = vpop.f32.mrf.mxu0
        %v2805 = vadd.f32 0.0, %v2804
        %v2806 = vpop.f32.mrf.mxu0
        %v2807 = vadd.f32 0.0, %v2806
        %2808 = vdwg.mxu0
        %v2809 = vadd.f32 %v2740, %v2790
        %v2810 = vadd.f32 %v2741, %v2792
        %v2811 = vadd.f32 %v2742, %v2795
        %v2812 = vadd.f32 %v2743, %v2797
        %v2813 = vadd.f32 %v2744, %v2800
        %v2814 = vadd.f32 %v2745, %v2802
        %v2815 = vadd.f32 %v2746, %v2805
        %v2816 = vadd.f32 %v2747, %v2807
        %s2817 = scalar_lea.vmem %s250, 256
        %v2818 = vld [vmem:[%s2817] sm:$0xf]
        %v2819 = vld [vmem:[%s2817 + $0x4] sm:$0xf]
        %v2820 = vld [vmem:[%s2817 + $0x8] sm:$0xf]
        %v2821 = vld [vmem:[%s2817 + $0xc] sm:$0xf]
        %v2822 = vld [vmem:[%s2817 + $0x10] sm:$0xf]
        %v2823 = vld [vmem:[%s2817 + $0x14] sm:$0xf]
        %v2824 = vld [vmem:[%s2817 + $0x18] sm:$0xf]
        %v2825 = vld [vmem:[%s2817 + $0x1c] sm:$0xf]
        %v2834 = vunpack.c.l.b16 %v2818
        %v2835 = vunpack.c.l.b16 %v2819
        %v2836 = vunpack.c.l.b16 %v2820
        %v2837 = vunpack.c.l.b16 %v2821
        %v2838 = vunpack.c.l.b16 %v2822
        %v2839 = vunpack.c.l.b16 %v2823
        %v2840 = vunpack.c.l.b16 %v2824
        %v2841 = vunpack.c.l.b16 %v2825
        %v2842 = vpack.c.b16 %v2835, %v2834
        %v2843 = vpack.c.b16 %v2837, %v2836
        %v2844 = vpack.c.b16 %v2839, %v2838
        %v2845 = vpack.c.b16 %v2841, %v2840
        %2850 = vmatpush.bf16.msra.mxu0 0
        %2851 = vmatpush.bf16.msra.mxu0 0
        %2852 = vmatpush.bf16.msra.mxu0 0
        %2853 = vmatpush.bf16.msra.mxu0 0
        %2854 = vmatpush.bf16.msra.mxu0 %v2845
        %2855 = vmatpush.bf16.msra.mxu0 %v2844
        %2856 = vmatpush.bf16.msra.mxu0 %v2843
        %2857 = vmatpush.bf16.msra.mxu0 %v2842
        %2858 = vmatmul.bf16.gmra.mxu0 %v751
        %v2859 = vpop.f32.mrf.mxu0
        %v2860 = vadd.f32 0.0, %v2859
        %v2861 = vpop.f32.mrf.mxu0
        %v2862 = vadd.f32 0.0, %v2861
        %2863 = vmatmul.bf16.gmra.mxu0 %v754
        %v2864 = vpop.f32.mrf.mxu0
        %v2865 = vadd.f32 0.0, %v2864
        %v2866 = vpop.f32.mrf.mxu0
        %v2867 = vadd.f32 0.0, %v2866
        %2868 = vmatmul.bf16.gmra.mxu0 %v757
        %v2869 = vpop.f32.mrf.mxu0
        %v2870 = vadd.f32 0.0, %v2869
        %v2871 = vpop.f32.mrf.mxu0
        %v2872 = vadd.f32 0.0, %v2871
        %2873 = vmatmul.bf16.gmra.mxu0 %v760
        %v2874 = vpop.f32.mrf.mxu0
        %v2875 = vadd.f32 0.0, %v2874
        %v2876 = vpop.f32.mrf.mxu0
        %v2877 = vadd.f32 0.0, %v2876
        %2878 = vdwg.mxu0
        %v2879 = vadd.f32 %v2809, %v2860
        %v2880 = vadd.f32 %v2810, %v2862
        %v2881 = vadd.f32 %v2811, %v2865
        %v2882 = vadd.f32 %v2812, %v2867
        %v2883 = vadd.f32 %v2813, %v2870
        %v2884 = vadd.f32 %v2814, %v2872
        %v2885 = vadd.f32 %v2815, %v2875
        %v2886 = vadd.f32 %v2816, %v2877
        %2887 = vrot.lane.b32.xlu0 %v2879, 127
        %v2888 = vpop.permute.xlu0 %2887
        %2889 = vrot.lane.b32.xlu0 %v2880, 127
        %v2890 = vpop.permute.xlu0 %2889
        %2891 = vrot.lane.b32.xlu0 %v2881, 127
        %v2892 = vpop.permute.xlu0 %2891
        %2893 = vrot.lane.b32.xlu0 %v2882, 127
        %v2894 = vpop.permute.xlu0 %2893
        %2895 = vrot.lane.b32.xlu0 %v2883, 127
        %v2896 = vpop.permute.xlu0 %2895
        %2897 = vrot.lane.b32.xlu0 %v2884, 127
        %v2898 = vpop.permute.xlu0 %2897
        %2899 = vrot.lane.b32.xlu0 %v2885, 127
        %v2900 = vpop.permute.xlu0 %2899
        %2901 = vrot.lane.b32.xlu0 %v2886, 127
        %v2902 = vpop.permute.xlu0 %2901
        %v2903 = vmax.f32 %v2879, %v2888
        %v2904 = vmax.f32 %v2880, %v2890
        %v2905 = vmax.f32 %v2881, %v2892
        %v2906 = vmax.f32 %v2882, %v2894
        %v2907 = vmax.f32 %v2883, %v2896
        %v2908 = vmax.f32 %v2884, %v2898
        %v2909 = vmax.f32 %v2885, %v2900
        %v2910 = vmax.f32 %v2886, %v2902
        %2911 = vrot.lane.b32.xlu0 %v2879, 1
        %v2912 = vpop.permute.xlu0 %2911
        %2913 = vrot.lane.b32.xlu0 %v2880, 1
        %v2914 = vpop.permute.xlu0 %2913
        %2915 = vrot.lane.b32.xlu0 %v2881, 1
        %v2916 = vpop.permute.xlu0 %2915
        %2917 = vrot.lane.b32.xlu0 %v2882, 1
        %v2918 = vpop.permute.xlu0 %2917
        %2919 = vrot.lane.b32.xlu0 %v2883, 1
        %v2920 = vpop.permute.xlu0 %2919
        %2921 = vrot.lane.b32.xlu0 %v2884, 1
        %v2922 = vpop.permute.xlu0 %2921
        %2923 = vrot.lane.b32.xlu0 %v2885, 1
        %v2924 = vpop.permute.xlu0 %2923
        %2925 = vrot.lane.b32.xlu0 %v2886, 1
        %v2926 = vpop.permute.xlu0 %2925
        %v2927 = vadd.f32 %v2912, %v839
        %v2928 = vadd.f32 %v2914, %v839
        %v2929 = vadd.f32 %v2916, %v839
        %v2930 = vadd.f32 %v2918, %v839
        %v2931 = vadd.f32 %v2920, %v839
        %v2932 = vadd.f32 %v2922, %v839
        %v2933 = vadd.f32 %v2924, %v839
        %v2934 = vadd.f32 %v2926, %v839
        %v2935 = vmax.f32 %v2903, %v2927
        %v2936 = vmax.f32 %v2904, %v2928
        %v2937 = vmax.f32 %v2905, %v2929
        %v2938 = vmax.f32 %v2906, %v2930
        %v2939 = vmax.f32 %v2907, %v2931
        %v2940 = vmax.f32 %v2908, %v2932
        %v2941 = vmax.f32 %v2909, %v2933
        %v2942 = vmax.f32 %v2910, %v2934
        %2943 = vrot.lane.b32.xlu0 %v2935, 120
        %v2944 = vpop.permute.xlu0 %2943
        %2945 = vrot.lane.b32.xlu0 %v2936, 120
        %v2946 = vpop.permute.xlu0 %2945
        %2947 = vrot.lane.b32.xlu0 %v2937, 120
        %v2948 = vpop.permute.xlu0 %2947
        %2949 = vrot.lane.b32.xlu0 %v2938, 120
        %v2950 = vpop.permute.xlu0 %2949
        %2951 = vrot.lane.b32.xlu0 %v2939, 120
        %v2952 = vpop.permute.xlu0 %2951
        %2953 = vrot.lane.b32.xlu0 %v2940, 120
        %v2954 = vpop.permute.xlu0 %2953
        %2955 = vrot.lane.b32.xlu0 %v2941, 120
        %v2956 = vpop.permute.xlu0 %2955
        %2957 = vrot.lane.b32.xlu0 %v2942, 120
        %v2958 = vpop.permute.xlu0 %2957
        %v2959 = vmax.f32 %v2935, %v2944
        %v2960 = vmax.f32 %v2936, %v2946
        %v2961 = vmax.f32 %v2937, %v2948
        %v2962 = vmax.f32 %v2938, %v2950
        %v2963 = vmax.f32 %v2939, %v2952
        %v2964 = vmax.f32 %v2940, %v2954
        %v2965 = vmax.f32 %v2941, %v2956
        %v2966 = vmax.f32 %v2942, %v2958
        %2967 = vrot.lane.b32.xlu0 %v2935, 8
        %v2968 = vpop.permute.xlu0 %2967
        %2969 = vrot.lane.b32.xlu0 %v2936, 8
        %v2970 = vpop.permute.xlu0 %2969
        %2971 = vrot.lane.b32.xlu0 %v2937, 8
        %v2972 = vpop.permute.xlu0 %2971
        %2973 = vrot.lane.b32.xlu0 %v2938, 8
        %v2974 = vpop.permute.xlu0 %2973
        %2975 = vrot.lane.b32.xlu0 %v2939, 8
        %v2976 = vpop.permute.xlu0 %2975
        %2977 = vrot.lane.b32.xlu0 %v2940, 8
        %v2978 = vpop.permute.xlu0 %2977
        %2979 = vrot.lane.b32.xlu0 %v2941, 8
        %v2980 = vpop.permute.xlu0 %2979
        %2981 = vrot.lane.b32.xlu0 %v2942, 8
        %v2982 = vpop.permute.xlu0 %2981
        %v2983 = vadd.f32 %v2968, %v896
        %v2984 = vadd.f32 %v2970, %v896
        %v2985 = vadd.f32 %v2972, %v896
        %v2986 = vadd.f32 %v2974, %v896
        %v2987 = vadd.f32 %v2976, %v896
        %v2988 = vadd.f32 %v2978, %v896
        %v2989 = vadd.f32 %v2980, %v896
        %v2990 = vadd.f32 %v2982, %v896
        %v2991 = vmax.f32 %v2959, %v2983
        %v2992 = vmax.f32 %v2960, %v2984
        %v2993 = vmax.f32 %v2961, %v2985
        %v2994 = vmax.f32 %v2962, %v2986
        %v2995 = vmax.f32 %v2963, %v2987
        %v2996 = vmax.f32 %v2964, %v2988
        %v2997 = vmax.f32 %v2965, %v2989
        %v2998 = vmax.f32 %v2966, %v2990
        %v2999 = vadd.f32 %v2991, %v916
        %v3000 = vadd.f32 %v2992, %v921
        %v3001 = vadd.f32 %v2993, %v926
        %v3002 = vadd.f32 %v2994, %v931
        %v3003 = vadd.f32 %v2995, %v936
        %v3004 = vadd.f32 %v2996, %v941
        %v3005 = vadd.f32 %v2997, %v946
        %v3006 = vadd.f32 %v2998, %v951
        %v3007 = vmax.f32 %v2999, 0.0
        %v3008 = vmax.f32 %v3000, 0.0
        %v3009 = vmax.f32 %v3001, 0.0
        %v3010 = vmax.f32 %v3002, 0.0
        %v3011 = vmax.f32 %v3003, 0.0
        %v3012 = vmax.f32 %v3004, 0.0
        %v3013 = vmax.f32 %v3005, 0.0
        %v3014 = vmax.f32 %v3006, 0.0
        %v3015 = vmul.f32 %v3007, %v969
        %v3016 = vmul.f32 %v3008, %v969
        %v3017 = vmul.f32 %v3009, %v969
        %v3018 = vmul.f32 %v3010, %v969
        %v3019 = vmul.f32 %v3011, %v969
        %v3020 = vmul.f32 %v3012, %v969
        %v3021 = vmul.f32 %v3013, %v969
        %v3022 = vmul.f32 %v3014, %v969
        %3023 = vadd.xlane.f32.xlu0 %v3015
        %v3024 = vpop.xlane.xlu0 %3023
        %3025 = vadd.xlane.f32.xlu0 %v3016
        %v3026 = vpop.xlane.xlu0 %3025
        %3027 = vadd.xlane.f32.xlu0 %v3017
        %v3028 = vpop.xlane.xlu0 %3027
        %3029 = vadd.xlane.f32.xlu0 %v3018
        %v3030 = vpop.xlane.xlu0 %3029
        %3031 = vadd.xlane.f32.xlu0 %v3019
        %v3032 = vpop.xlane.xlu0 %3031
        %3033 = vadd.xlane.f32.xlu0 %v3020
        %v3034 = vpop.xlane.xlu0 %3033
        %3035 = vadd.xlane.f32.xlu0 %v3021
        %v3036 = vpop.xlane.xlu0 %3035
        %3037 = vadd.xlane.f32.xlu0 %v3022
        %v3038 = vpop.xlane.xlu0 %3037
        %v3047 = vperm.slane %v3024, %v1003
        %v3048 = vperm.slane %v3026, %v1005
        %v3049 = vsel %vm1007, %v3048, %v3047
        %v3050 = vperm.slane %v3028, %v1009
        %v3051 = vsel %vm1011, %v3050, %v3049
        %v3052 = vperm.slane %v3030, %v1013
        %v3053 = vsel %vm1015, %v3052, %v3051
        %v3054 = vperm.slane %v3032, %v1017
        %v3055 = vsel %vm1019, %v3054, %v3053
        %v3056 = vperm.slane %v3034, %v1021
        %v3057 = vsel %vm1023, %v3056, %v3055
        %v3058 = vperm.slane %v3036, %v1025
        %v3059 = vsel %vm1027, %v3058, %v3057
        %v3060 = vperm.slane %v3038, %v1029
        %v3061 = vsel %vm1031, %v3060, %v3059
        %3063 = vst.msk [vmem:[#allocation2 + $0x4] sm:$0x1] %vm1034, %v3061
        %v3064 = vld [vmem:[%s1296] sm:$0xf]
        %v3065 = vld [vmem:[%s1296 + $0x4] sm:$0xf]
        %v3066 = vld [vmem:[%s1296 + $0x8] sm:$0xf]
        %v3067 = vld [vmem:[%s1296 + $0xc] sm:$0xf]
        %v3068 = vld [vmem:[%s1296 + $0x10] sm:$0xf]
        %v3069 = vld [vmem:[%s1296 + $0x14] sm:$0xf]
        %v3070 = vld [vmem:[%s1296 + $0x18] sm:$0xf]
        %v3071 = vld [vmem:[%s1296 + $0x1c] sm:$0xf]
        %v3072 = vld [vmem:[%s1803] sm:$0xf]
        %v3073 = vld [vmem:[%s1803 + $0x4] sm:$0xf]
        %v3074 = vld [vmem:[%s1803 + $0x8] sm:$0xf]
        %v3075 = vld [vmem:[%s1803 + $0xc] sm:$0xf]
        %v3076 = vld [vmem:[%s1803 + $0x10] sm:$0xf]
        %v3077 = vld [vmem:[%s1803 + $0x14] sm:$0xf]
        %v3078 = vld [vmem:[%s1803 + $0x18] sm:$0xf]
        %v3079 = vld [vmem:[%s1803 + $0x1c] sm:$0xf]
        %v3088 = vunpack.c.l.b16 %v3072
        %v3089 = vunpack.c.l.b16 %v3073
        %v3090 = vunpack.c.l.b16 %v3074
        %v3091 = vunpack.c.l.b16 %v3075
        %v3092 = vunpack.c.l.b16 %v3076
        %v3093 = vunpack.c.l.b16 %v3077
        %v3094 = vunpack.c.l.b16 %v3078
        %v3095 = vunpack.c.l.b16 %v3079
        %v3096 = vpack.c.b16 %v3089, %v3088
        %v3097 = vpack.c.b16 %v3091, %v3090
        %v3098 = vpack.c.b16 %v3093, %v3092
        %v3099 = vpack.c.b16 %v3095, %v3094
        %3104 = vmatpush.bf16.msra.mxu0 0
        %3105 = vmatpush.bf16.msra.mxu0 0
        %3106 = vmatpush.bf16.msra.mxu0 0
        %3107 = vmatpush.bf16.msra.mxu0 0
        %3108 = vmatpush.bf16.msra.mxu0 %v3099
        %3109 = vmatpush.bf16.msra.mxu0 %v3098
        %3110 = vmatpush.bf16.msra.mxu0 %v3097
        %3111 = vmatpush.bf16.msra.mxu0 %v3096
        %3112 = vmatmul.bf16.gmra.mxu0 %v368
        %v3113 = vpop.f32.mrf.mxu0
        %v3114 = vadd.f32 0.0, %v3113
        %v3115 = vpop.f32.mrf.mxu0
        %v3116 = vadd.f32 0.0, %v3115
        %3117 = vmatmul.bf16.gmra.mxu0 %v371
        %v3118 = vpop.f32.mrf.mxu0
        %v3119 = vadd.f32 0.0, %v3118
        %v3120 = vpop.f32.mrf.mxu0
        %v3121 = vadd.f32 0.0, %v3120
        %3122 = vmatmul.bf16.gmra.mxu0 %v374
        %v3123 = vpop.f32.mrf.mxu0
        %v3124 = vadd.f32 0.0, %v3123
        %v3125 = vpop.f32.mrf.mxu0
        %v3126 = vadd.f32 0.0, %v3125
        %3127 = vmatmul.bf16.gmra.mxu0 %v377
        %v3128 = vpop.f32.mrf.mxu0
        %v3129 = vadd.f32 0.0, %v3128
        %v3130 = vpop.f32.mrf.mxu0
        %v3131 = vadd.f32 0.0, %v3130
        %3132 = vdwg.mxu0
        %v3141 = vunpack.c.l.b16 %v3064
        %v3142 = vunpack.c.l.b16 %v3065
        %v3143 = vunpack.c.l.b16 %v3066
        %v3144 = vunpack.c.l.b16 %v3067
        %v3145 = vunpack.c.l.b16 %v3068
        %v3146 = vunpack.c.l.b16 %v3069
        %v3147 = vunpack.c.l.b16 %v3070
        %v3148 = vunpack.c.l.b16 %v3071
        %v3149 = vpack.c.b16 %v3142, %v3141
        %v3150 = vpack.c.b16 %v3144, %v3143
        %v3151 = vpack.c.b16 %v3146, %v3145
        %v3152 = vpack.c.b16 %v3148, %v3147
        %3157 = vmatpush.bf16.msra.mxu0 0
        %3158 = vmatpush.bf16.msra.mxu0 0
        %3159 = vmatpush.bf16.msra.mxu0 0
        %3160 = vmatpush.bf16.msra.mxu0 0
        %3161 = vmatpush.bf16.msra.mxu0 %v3152
        %3162 = vmatpush.bf16.msra.mxu0 %v3151
        %3163 = vmatpush.bf16.msra.mxu0 %v3150
        %3164 = vmatpush.bf16.msra.mxu0 %v3149
        %3165 = vmatmul.bf16.gmra.mxu0 %v453
        %v3166 = vpop.f32.mrf.mxu0
        %v3167 = vadd.f32 %v3114, %v3166
        %v3168 = vpop.f32.mrf.mxu0
        %v3169 = vadd.f32 %v3116, %v3168
        %3170 = vmatmul.bf16.gmra.mxu0 %v456
        %v3171 = vpop.f32.mrf.mxu0
        %v3172 = vadd.f32 %v3119, %v3171
        %v3173 = vpop.f32.mrf.mxu0
        %v3174 = vadd.f32 %v3121, %v3173
        %3175 = vmatmul.bf16.gmra.mxu0 %v459
        %v3176 = vpop.f32.mrf.mxu0
        %v3177 = vadd.f32 %v3124, %v3176
        %v3178 = vpop.f32.mrf.mxu0
        %v3179 = vadd.f32 %v3126, %v3178
        %3180 = vmatmul.bf16.gmra.mxu0 %v462
        %v3181 = vpop.f32.mrf.mxu0
        %v3182 = vadd.f32 %v3129, %v3181
        %v3183 = vpop.f32.mrf.mxu0
        %v3184 = vadd.f32 %v3131, %v3183
        %3185 = vdwg.mxu0
        %v3186 = vld [vmem:[%s2310] sm:$0xf]
        %v3187 = vld [vmem:[%s2310 + $0x4] sm:$0xf]
        %v3188 = vld [vmem:[%s2310 + $0x8] sm:$0xf]
        %v3189 = vld [vmem:[%s2310 + $0xc] sm:$0xf]
        %v3190 = vld [vmem:[%s2310 + $0x10] sm:$0xf]
        %v3191 = vld [vmem:[%s2310 + $0x14] sm:$0xf]
        %v3192 = vld [vmem:[%s2310 + $0x18] sm:$0xf]
        %v3193 = vld [vmem:[%s2310 + $0x1c] sm:$0xf]
        %v3202 = vunpack.c.l.b16 %v3186
        %v3203 = vunpack.c.l.b16 %v3187
        %v3204 = vunpack.c.l.b16 %v3188
        %v3205 = vunpack.c.l.b16 %v3189
        %v3206 = vunpack.c.l.b16 %v3190
        %v3207 = vunpack.c.l.b16 %v3191
        %v3208 = vunpack.c.l.b16 %v3192
        %v3209 = vunpack.c.l.b16 %v3193
        %v3210 = vpack.c.b16 %v3203, %v3202
        %v3211 = vpack.c.b16 %v3205, %v3204
        %v3212 = vpack.c.b16 %v3207, %v3206
        %v3213 = vpack.c.b16 %v3209, %v3208
        %3218 = vmatpush.bf16.msra.mxu0 0
        %3219 = vmatpush.bf16.msra.mxu0 0
        %3220 = vmatpush.bf16.msra.mxu0 0
        %3221 = vmatpush.bf16.msra.mxu0 0
        %3222 = vmatpush.bf16.msra.mxu0 %v3213
        %3223 = vmatpush.bf16.msra.mxu0 %v3212
        %3224 = vmatpush.bf16.msra.mxu0 %v3211
        %3225 = vmatpush.bf16.msra.mxu0 %v3210
        %3226 = vmatmul.bf16.gmra.mxu0 %v547
        %v3227 = vpop.f32.mrf.mxu0
        %v3228 = vadd.f32 0.0, %v3227
        %v3229 = vpop.f32.mrf.mxu0
        %v3230 = vadd.f32 0.0, %v3229
        %3231 = vmatmul.bf16.gmra.mxu0 %v550
        %v3232 = vpop.f32.mrf.mxu0
        %v3233 = vadd.f32 0.0, %v3232
        %v3234 = vpop.f32.mrf.mxu0
        %v3235 = vadd.f32 0.0, %v3234
        %3236 = vmatmul.bf16.gmra.mxu0 %v553
        %v3237 = vpop.f32.mrf.mxu0
        %v3238 = vadd.f32 0.0, %v3237
        %v3239 = vpop.f32.mrf.mxu0
        %v3240 = vadd.f32 0.0, %v3239
        %3241 = vmatmul.bf16.gmra.mxu0 %v556
        %v3242 = vpop.f32.mrf.mxu0
        %v3243 = vadd.f32 0.0, %v3242
        %v3244 = vpop.f32.mrf.mxu0
        %v3245 = vadd.f32 0.0, %v3244
        %3246 = vdwg.mxu0
        %v3247 = vadd.f32 %v3167, %v3228
        %v3248 = vadd.f32 %v3169, %v3230
        %v3249 = vadd.f32 %v3172, %v3233
        %v3250 = vadd.f32 %v3174, %v3235
        %v3251 = vadd.f32 %v3177, %v3238
        %v3252 = vadd.f32 %v3179, %v3240
        %v3253 = vadd.f32 %v3182, %v3243
        %v3254 = vadd.f32 %v3184, %v3245
        %v3255 = vld [vmem:[%s2817] sm:$0xf]
        %v3256 = vld [vmem:[%s2817 + $0x4] sm:$0xf]
        %v3257 = vld [vmem:[%s2817 + $0x8] sm:$0xf]
        %v3258 = vld [vmem:[%s2817 + $0xc] sm:$0xf]
        %v3259 = vld [vmem:[%s2817 + $0x10] sm:$0xf]
        %v3260 = vld [vmem:[%s2817 + $0x14] sm:$0xf]
        %v3261 = vld [vmem:[%s2817 + $0x18] sm:$0xf]
        %v3262 = vld [vmem:[%s2817 + $0x1c] sm:$0xf]
        %v3271 = vunpack.c.l.b16 %v3255
        %v3272 = vunpack.c.l.b16 %v3256
        %v3273 = vunpack.c.l.b16 %v3257
        %v3274 = vunpack.c.l.b16 %v3258
        %v3275 = vunpack.c.l.b16 %v3259
        %v3276 = vunpack.c.l.b16 %v3260
        %v3277 = vunpack.c.l.b16 %v3261
        %v3278 = vunpack.c.l.b16 %v3262
        %v3279 = vpack.c.b16 %v3272, %v3271
        %v3280 = vpack.c.b16 %v3274, %v3273
        %v3281 = vpack.c.b16 %v3276, %v3275
        %v3282 = vpack.c.b16 %v3278, %v3277
        %3287 = vmatpush.bf16.msra.mxu0 0
        %3288 = vmatpush.bf16.msra.mxu0 0
        %3289 = vmatpush.bf16.msra.mxu0 0
        %3290 = vmatpush.bf16.msra.mxu0 0
        %3291 = vmatpush.bf16.msra.mxu0 %v3282
        %3292 = vmatpush.bf16.msra.mxu0 %v3281
        %3293 = vmatpush.bf16.msra.mxu0 %v3280
        %3294 = vmatpush.bf16.msra.mxu0 %v3279
        %3295 = vmatmul.bf16.gmra.mxu0 %v649
        %v3296 = vpop.f32.mrf.mxu0
        %v3297 = vadd.f32 0.0, %v3296
        %v3298 = vpop.f32.mrf.mxu0
        %v3299 = vadd.f32 0.0, %v3298
        %3300 = vmatmul.bf16.gmra.mxu0 %v652
        %v3301 = vpop.f32.mrf.mxu0
        %v3302 = vadd.f32 0.0, %v3301
        %v3303 = vpop.f32.mrf.mxu0
        %v3304 = vadd.f32 0.0, %v3303
        %3305 = vmatmul.bf16.gmra.mxu0 %v655
        %v3306 = vpop.f32.mrf.mxu0
        %v3307 = vadd.f32 0.0, %v3306
        %v3308 = vpop.f32.mrf.mxu0
        %v3309 = vadd.f32 0.0, %v3308
        %3310 = vmatmul.bf16.gmra.mxu0 %v658
        %v3311 = vpop.f32.mrf.mxu0
        %v3312 = vadd.f32 0.0, %v3311
        %v3313 = vpop.f32.mrf.mxu0
        %v3314 = vadd.f32 0.0, %v3313
        %3315 = vdwg.mxu0
        %v3316 = vadd.f32 %v3247, %v3297
        %v3317 = vadd.f32 %v3248, %v3299
        %v3318 = vadd.f32 %v3249, %v3302
        %v3319 = vadd.f32 %v3250, %v3304
        %v3320 = vadd.f32 %v3251, %v3307
        %v3321 = vadd.f32 %v3252, %v3309
        %v3322 = vadd.f32 %v3253, %v3312
        %v3323 = vadd.f32 %v3254, %v3314
        %s3324 = scalar_lea.vmem %s250, 288
        %v3325 = vld [vmem:[%s3324] sm:$0xf]
        %v3326 = vld [vmem:[%s3324 + $0x4] sm:$0xf]
        %v3327 = vld [vmem:[%s3324 + $0x8] sm:$0xf]
        %v3328 = vld [vmem:[%s3324 + $0xc] sm:$0xf]
        %v3329 = vld [vmem:[%s3324 + $0x10] sm:$0xf]
        %v3330 = vld [vmem:[%s3324 + $0x14] sm:$0xf]
        %v3331 = vld [vmem:[%s3324 + $0x18] sm:$0xf]
        %v3332 = vld [vmem:[%s3324 + $0x1c] sm:$0xf]
        %v3341 = vunpack.c.l.b16 %v3325
        %v3342 = vunpack.c.l.b16 %v3326
        %v3343 = vunpack.c.l.b16 %v3327
        %v3344 = vunpack.c.l.b16 %v3328
        %v3345 = vunpack.c.l.b16 %v3329
        %v3346 = vunpack.c.l.b16 %v3330
        %v3347 = vunpack.c.l.b16 %v3331
        %v3348 = vunpack.c.l.b16 %v3332
        %v3349 = vpack.c.b16 %v3342, %v3341
        %v3350 = vpack.c.b16 %v3344, %v3343
        %v3351 = vpack.c.b16 %v3346, %v3345
        %v3352 = vpack.c.b16 %v3348, %v3347
        %3357 = vmatpush.bf16.msra.mxu0 0
        %3358 = vmatpush.bf16.msra.mxu0 0
        %3359 = vmatpush.bf16.msra.mxu0 0
        %3360 = vmatpush.bf16.msra.mxu0 0
        %3361 = vmatpush.bf16.msra.mxu0 %v3352
        %3362 = vmatpush.bf16.msra.mxu0 %v3351
        %3363 = vmatpush.bf16.msra.mxu0 %v3350
        %3364 = vmatpush.bf16.msra.mxu0 %v3349
        %3365 = vmatmul.bf16.gmra.mxu0 %v751
        %v3366 = vpop.f32.mrf.mxu0
        %v3367 = vadd.f32 0.0, %v3366
        %v3368 = vpop.f32.mrf.mxu0
        %v3369 = vadd.f32 0.0, %v3368
        %3370 = vmatmul.bf16.gmra.mxu0 %v754
        %v3371 = vpop.f32.mrf.mxu0
        %v3372 = vadd.f32 0.0, %v3371
        %v3373 = vpop.f32.mrf.mxu0
        %v3374 = vadd.f32 0.0, %v3373
        %3375 = vmatmul.bf16.gmra.mxu0 %v757
        %v3376 = vpop.f32.mrf.mxu0
        %v3377 = vadd.f32 0.0, %v3376
        %v3378 = vpop.f32.mrf.mxu0
        %v3379 = vadd.f32 0.0, %v3378
        %3380 = vmatmul.bf16.gmra.mxu0 %v760
        %v3381 = vpop.f32.mrf.mxu0
        %v3382 = vadd.f32 0.0, %v3381
        %v3383 = vpop.f32.mrf.mxu0
        %v3384 = vadd.f32 0.0, %v3383
        %3385 = vdwg.mxu0
        %v3386 = vadd.f32 %v3316, %v3367
        %v3387 = vadd.f32 %v3317, %v3369
        %v3388 = vadd.f32 %v3318, %v3372
        %v3389 = vadd.f32 %v3319, %v3374
        %v3390 = vadd.f32 %v3320, %v3377
        %v3391 = vadd.f32 %v3321, %v3379
        %v3392 = vadd.f32 %v3322, %v3382
        %v3393 = vadd.f32 %v3323, %v3384
        %3394 = vrot.lane.b32.xlu0 %v3386, 127
        %v3395 = vpop.permute.xlu0 %3394
        %3396 = vrot.lane.b32.xlu0 %v3387, 127
        %v3397 = vpop.permute.xlu0 %3396
        %3398 = vrot.lane.b32.xlu0 %v3388, 127
        %v3399 = vpop.permute.xlu0 %3398
        %3400 = vrot.lane.b32.xlu0 %v3389, 127
        %v3401 = vpop.permute.xlu0 %3400
        %3402 = vrot.lane.b32.xlu0 %v3390, 127
        %v3403 = vpop.permute.xlu0 %3402
        %3404 = vrot.lane.b32.xlu0 %v3391, 127
        %v3405 = vpop.permute.xlu0 %3404
        %3406 = vrot.lane.b32.xlu0 %v3392, 127
        %v3407 = vpop.permute.xlu0 %3406
        %3408 = vrot.lane.b32.xlu0 %v3393, 127
        %v3409 = vpop.permute.xlu0 %3408
        %v3410 = vmax.f32 %v3386, %v3395
        %v3411 = vmax.f32 %v3387, %v3397
        %v3412 = vmax.f32 %v3388, %v3399
        %v3413 = vmax.f32 %v3389, %v3401
        %v3414 = vmax.f32 %v3390, %v3403
        %v3415 = vmax.f32 %v3391, %v3405
        %v3416 = vmax.f32 %v3392, %v3407
        %v3417 = vmax.f32 %v3393, %v3409
        %3418 = vrot.lane.b32.xlu0 %v3386, 1
        %v3419 = vpop.permute.xlu0 %3418
        %3420 = vrot.lane.b32.xlu0 %v3387, 1
        %v3421 = vpop.permute.xlu0 %3420
        %3422 = vrot.lane.b32.xlu0 %v3388, 1
        %v3423 = vpop.permute.xlu0 %3422
        %3424 = vrot.lane.b32.xlu0 %v3389, 1
        %v3425 = vpop.permute.xlu0 %3424
        %3426 = vrot.lane.b32.xlu0 %v3390, 1
        %v3427 = vpop.permute.xlu0 %3426
        %3428 = vrot.lane.b32.xlu0 %v3391, 1
        %v3429 = vpop.permute.xlu0 %3428
        %3430 = vrot.lane.b32.xlu0 %v3392, 1
        %v3431 = vpop.permute.xlu0 %3430
        %3432 = vrot.lane.b32.xlu0 %v3393, 1
        %v3433 = vpop.permute.xlu0 %3432
        %v3434 = vadd.f32 %v3419, %v839
        %v3435 = vadd.f32 %v3421, %v839
        %v3436 = vadd.f32 %v3423, %v839
        %v3437 = vadd.f32 %v3425, %v839
        %v3438 = vadd.f32 %v3427, %v839
        %v3439 = vadd.f32 %v3429, %v839
        %v3440 = vadd.f32 %v3431, %v839
        %v3441 = vadd.f32 %v3433, %v839
        %v3442 = vmax.f32 %v3410, %v3434
        %v3443 = vmax.f32 %v3411, %v3435
        %v3444 = vmax.f32 %v3412, %v3436
        %v3445 = vmax.f32 %v3413, %v3437
        %v3446 = vmax.f32 %v3414, %v3438
        %v3447 = vmax.f32 %v3415, %v3439
        %v3448 = vmax.f32 %v3416, %v3440
        %v3449 = vmax.f32 %v3417, %v3441
        %3450 = vrot.lane.b32.xlu0 %v3442, 120
        %v3451 = vpop.permute.xlu0 %3450
        %3452 = vrot.lane.b32.xlu0 %v3443, 120
        %v3453 = vpop.permute.xlu0 %3452
        %3454 = vrot.lane.b32.xlu0 %v3444, 120
        %v3455 = vpop.permute.xlu0 %3454
        %3456 = vrot.lane.b32.xlu0 %v3445, 120
        %v3457 = vpop.permute.xlu0 %3456
        %3458 = vrot.lane.b32.xlu0 %v3446, 120
        %v3459 = vpop.permute.xlu0 %3458
        %3460 = vrot.lane.b32.xlu0 %v3447, 120
        %v3461 = vpop.permute.xlu0 %3460
        %3462 = vrot.lane.b32.xlu0 %v3448, 120
        %v3463 = vpop.permute.xlu0 %3462
        %3464 = vrot.lane.b32.xlu0 %v3449, 120
        %v3465 = vpop.permute.xlu0 %3464
        %v3466 = vmax.f32 %v3442, %v3451
        %v3467 = vmax.f32 %v3443, %v3453
        %v3468 = vmax.f32 %v3444, %v3455
        %v3469 = vmax.f32 %v3445, %v3457
        %v3470 = vmax.f32 %v3446, %v3459
        %v3471 = vmax.f32 %v3447, %v3461
        %v3472 = vmax.f32 %v3448, %v3463
        %v3473 = vmax.f32 %v3449, %v3465
        %3474 = vrot.lane.b32.xlu0 %v3442, 8
        %v3475 = vpop.permute.xlu0 %3474
        %3476 = vrot.lane.b32.xlu0 %v3443, 8
        %v3477 = vpop.permute.xlu0 %3476
        %3478 = vrot.lane.b32.xlu0 %v3444, 8
        %v3479 = vpop.permute.xlu0 %3478
        %3480 = vrot.lane.b32.xlu0 %v3445, 8
        %v3481 = vpop.permute.xlu0 %3480
        %3482 = vrot.lane.b32.xlu0 %v3446, 8
        %v3483 = vpop.permute.xlu0 %3482
        %3484 = vrot.lane.b32.xlu0 %v3447, 8
        %v3485 = vpop.permute.xlu0 %3484
        %3486 = vrot.lane.b32.xlu0 %v3448, 8
        %v3487 = vpop.permute.xlu0 %3486
        %3488 = vrot.lane.b32.xlu0 %v3449, 8
        %v3489 = vpop.permute.xlu0 %3488
        %v3490 = vadd.f32 %v3475, %v896
        %v3491 = vadd.f32 %v3477, %v896
        %v3492 = vadd.f32 %v3479, %v896
        %v3493 = vadd.f32 %v3481, %v896
        %v3494 = vadd.f32 %v3483, %v896
        %v3495 = vadd.f32 %v3485, %v896
        %v3496 = vadd.f32 %v3487, %v896
        %v3497 = vadd.f32 %v3489, %v896
        %v3498 = vmax.f32 %v3466, %v3490
        %v3499 = vmax.f32 %v3467, %v3491
        %v3500 = vmax.f32 %v3468, %v3492
        %v3501 = vmax.f32 %v3469, %v3493
        %v3502 = vmax.f32 %v3470, %v3494
        %v3503 = vmax.f32 %v3471, %v3495
        %v3504 = vmax.f32 %v3472, %v3496
        %v3505 = vmax.f32 %v3473, %v3497
        %v3506 = vadd.f32 %v3498, %v916
        %v3507 = vadd.f32 %v3499, %v921
        %v3508 = vadd.f32 %v3500, %v926
        %v3509 = vadd.f32 %v3501, %v931
        %v3510 = vadd.f32 %v3502, %v936
        %v3511 = vadd.f32 %v3503, %v941
        %v3512 = vadd.f32 %v3504, %v946
        %v3513 = vadd.f32 %v3505, %v951
        %v3514 = vmax.f32 %v3506, 0.0
        %v3515 = vmax.f32 %v3507, 0.0
        %v3516 = vmax.f32 %v3508, 0.0
        %v3517 = vmax.f32 %v3509, 0.0
        %v3518 = vmax.f32 %v3510, 0.0
        %v3519 = vmax.f32 %v3511, 0.0
        %v3520 = vmax.f32 %v3512, 0.0
        %v3521 = vmax.f32 %v3513, 0.0
        %v3522 = vmul.f32 %v3514, %v969
        %v3523 = vmul.f32 %v3515, %v969
        %v3524 = vmul.f32 %v3516, %v969
        %v3525 = vmul.f32 %v3517, %v969
        %v3526 = vmul.f32 %v3518, %v969
        %v3527 = vmul.f32 %v3519, %v969
        %v3528 = vmul.f32 %v3520, %v969
        %v3529 = vmul.f32 %v3521, %v969
        %3530 = vadd.xlane.f32.xlu0 %v3522
        %v3531 = vpop.xlane.xlu0 %3530
        %3532 = vadd.xlane.f32.xlu0 %v3523
        %v3533 = vpop.xlane.xlu0 %3532
        %3534 = vadd.xlane.f32.xlu0 %v3524
        %v3535 = vpop.xlane.xlu0 %3534
        %3536 = vadd.xlane.f32.xlu0 %v3525
        %v3537 = vpop.xlane.xlu0 %3536
        %3538 = vadd.xlane.f32.xlu0 %v3526
        %v3539 = vpop.xlane.xlu0 %3538
        %3540 = vadd.xlane.f32.xlu0 %v3527
        %v3541 = vpop.xlane.xlu0 %3540
        %3542 = vadd.xlane.f32.xlu0 %v3528
        %v3543 = vpop.xlane.xlu0 %3542
        %3544 = vadd.xlane.f32.xlu0 %v3529
        %v3545 = vpop.xlane.xlu0 %3544
        %v3554 = vperm.slane %v3531, %v1003
        %v3555 = vperm.slane %v3533, %v1005
        %v3556 = vsel %vm1007, %v3555, %v3554
        %v3557 = vperm.slane %v3535, %v1009
        %v3558 = vsel %vm1011, %v3557, %v3556
        %v3559 = vperm.slane %v3537, %v1013
        %v3560 = vsel %vm1015, %v3559, %v3558
        %v3561 = vperm.slane %v3539, %v1017
        %v3562 = vsel %vm1019, %v3561, %v3560
        %v3563 = vperm.slane %v3541, %v1021
        %v3564 = vsel %vm1023, %v3563, %v3562
        %v3565 = vperm.slane %v3543, %v1025
        %v3566 = vsel %vm1027, %v3565, %v3564
        %v3567 = vperm.slane %v3545, %v1029
        %v3568 = vsel %vm1031, %v3567, %v3566
        %3570 = vst.msk [vmem:[#allocation2 + $0x5] sm:$0x1] %vm1034, %v3568
        %v3571 = vld [vmem:[%s1803] sm:$0xf]
        %v3572 = vld [vmem:[%s1803 + $0x4] sm:$0xf]
        %v3573 = vld [vmem:[%s1803 + $0x8] sm:$0xf]
        %v3574 = vld [vmem:[%s1803 + $0xc] sm:$0xf]
        %v3575 = vld [vmem:[%s1803 + $0x10] sm:$0xf]
        %v3576 = vld [vmem:[%s1803 + $0x14] sm:$0xf]
        %v3577 = vld [vmem:[%s1803 + $0x18] sm:$0xf]
        %v3578 = vld [vmem:[%s1803 + $0x1c] sm:$0xf]
        %v3579 = vld [vmem:[%s2310] sm:$0xf]
        %v3580 = vld [vmem:[%s2310 + $0x4] sm:$0xf]
        %v3581 = vld [vmem:[%s2310 + $0x8] sm:$0xf]
        %v3582 = vld [vmem:[%s2310 + $0xc] sm:$0xf]
        %v3583 = vld [vmem:[%s2310 + $0x10] sm:$0xf]
        %v3584 = vld [vmem:[%s2310 + $0x14] sm:$0xf]
        %v3585 = vld [vmem:[%s2310 + $0x18] sm:$0xf]
        %v3586 = vld [vmem:[%s2310 + $0x1c] sm:$0xf]
        %v3595 = vunpack.c.l.b16 %v3579
        %v3596 = vunpack.c.l.b16 %v3580
        %v3597 = vunpack.c.l.b16 %v3581
        %v3598 = vunpack.c.l.b16 %v3582
        %v3599 = vunpack.c.l.b16 %v3583
        %v3600 = vunpack.c.l.b16 %v3584
        %v3601 = vunpack.c.l.b16 %v3585
        %v3602 = vunpack.c.l.b16 %v3586
        %v3603 = vpack.c.b16 %v3596, %v3595
        %v3604 = vpack.c.b16 %v3598, %v3597
        %v3605 = vpack.c.b16 %v3600, %v3599
        %v3606 = vpack.c.b16 %v3602, %v3601
        %3611 = vmatpush.bf16.msra.mxu0 0
        %3612 = vmatpush.bf16.msra.mxu0 0
        %3613 = vmatpush.bf16.msra.mxu0 0
        %3614 = vmatpush.bf16.msra.mxu0 0
        %3615 = vmatpush.bf16.msra.mxu0 %v3606
        %3616 = vmatpush.bf16.msra.mxu0 %v3605
        %3617 = vmatpush.bf16.msra.mxu0 %v3604
        %3618 = vmatpush.bf16.msra.mxu0 %v3603
        %3619 = vmatmul.bf16.gmra.mxu0 %v368
        %v3620 = vpop.f32.mrf.mxu0
        %v3621 = vadd.f32 0.0, %v3620
        %v3622 = vpop.f32.mrf.mxu0
        %v3623 = vadd.f32 0.0, %v3622
        %3624 = vmatmul.bf16.gmra.mxu0 %v371
        %v3625 = vpop.f32.mrf.mxu0
        %v3626 = vadd.f32 0.0, %v3625
        %v3627 = vpop.f32.mrf.mxu0
        %v3628 = vadd.f32 0.0, %v3627
        %3629 = vmatmul.bf16.gmra.mxu0 %v374
        %v3630 = vpop.f32.mrf.mxu0
        %v3631 = vadd.f32 0.0, %v3630
        %v3632 = vpop.f32.mrf.mxu0
        %v3633 = vadd.f32 0.0, %v3632
        %3634 = vmatmul.bf16.gmra.mxu0 %v377
        %v3635 = vpop.f32.mrf.mxu0
        %v3636 = vadd.f32 0.0, %v3635
        %v3637 = vpop.f32.mrf.mxu0
        %v3638 = vadd.f32 0.0, %v3637
        %3639 = vdwg.mxu0
        %v3648 = vunpack.c.l.b16 %v3571
        %v3649 = vunpack.c.l.b16 %v3572
        %v3650 = vunpack.c.l.b16 %v3573
        %v3651 = vunpack.c.l.b16 %v3574
        %v3652 = vunpack.c.l.b16 %v3575
        %v3653 = vunpack.c.l.b16 %v3576
        %v3654 = vunpack.c.l.b16 %v3577
        %v3655 = vunpack.c.l.b16 %v3578
        %v3656 = vpack.c.b16 %v3649, %v3648
        %v3657 = vpack.c.b16 %v3651, %v3650
        %v3658 = vpack.c.b16 %v3653, %v3652
        %v3659 = vpack.c.b16 %v3655, %v3654
        %3664 = vmatpush.bf16.msra.mxu0 0
        %3665 = vmatpush.bf16.msra.mxu0 0
        %3666 = vmatpush.bf16.msra.mxu0 0
        %3667 = vmatpush.bf16.msra.mxu0 0
        %3668 = vmatpush.bf16.msra.mxu0 %v3659
        %3669 = vmatpush.bf16.msra.mxu0 %v3658
        %3670 = vmatpush.bf16.msra.mxu0 %v3657
        %3671 = vmatpush.bf16.msra.mxu0 %v3656
        %3672 = vmatmul.bf16.gmra.mxu0 %v453
        %v3673 = vpop.f32.mrf.mxu0
        %v3674 = vadd.f32 %v3621, %v3673
        %v3675 = vpop.f32.mrf.mxu0
        %v3676 = vadd.f32 %v3623, %v3675
        %3677 = vmatmul.bf16.gmra.mxu0 %v456
        %v3678 = vpop.f32.mrf.mxu0
        %v3679 = vadd.f32 %v3626, %v3678
        %v3680 = vpop.f32.mrf.mxu0
        %v3681 = vadd.f32 %v3628, %v3680
        %3682 = vmatmul.bf16.gmra.mxu0 %v459
        %v3683 = vpop.f32.mrf.mxu0
        %v3684 = vadd.f32 %v3631, %v3683
        %v3685 = vpop.f32.mrf.mxu0
        %v3686 = vadd.f32 %v3633, %v3685
        %3687 = vmatmul.bf16.gmra.mxu0 %v462
        %v3688 = vpop.f32.mrf.mxu0
        %v3689 = vadd.f32 %v3636, %v3688
        %v3690 = vpop.f32.mrf.mxu0
        %v3691 = vadd.f32 %v3638, %v3690
        %3692 = vdwg.mxu0
        %v3693 = vld [vmem:[%s2817] sm:$0xf]
        %v3694 = vld [vmem:[%s2817 + $0x4] sm:$0xf]
        %v3695 = vld [vmem:[%s2817 + $0x8] sm:$0xf]
        %v3696 = vld [vmem:[%s2817 + $0xc] sm:$0xf]
        %v3697 = vld [vmem:[%s2817 + $0x10] sm:$0xf]
        %v3698 = vld [vmem:[%s2817 + $0x14] sm:$0xf]
        %v3699 = vld [vmem:[%s2817 + $0x18] sm:$0xf]
        %v3700 = vld [vmem:[%s2817 + $0x1c] sm:$0xf]
        %v3709 = vunpack.c.l.b16 %v3693
        %v3710 = vunpack.c.l.b16 %v3694
        %v3711 = vunpack.c.l.b16 %v3695
        %v3712 = vunpack.c.l.b16 %v3696
        %v3713 = vunpack.c.l.b16 %v3697
        %v3714 = vunpack.c.l.b16 %v3698
        %v3715 = vunpack.c.l.b16 %v3699
        %v3716 = vunpack.c.l.b16 %v3700
        %v3717 = vpack.c.b16 %v3710, %v3709
        %v3718 = vpack.c.b16 %v3712, %v3711
        %v3719 = vpack.c.b16 %v3714, %v3713
        %v3720 = vpack.c.b16 %v3716, %v3715
        %3725 = vmatpush.bf16.msra.mxu0 0
        %3726 = vmatpush.bf16.msra.mxu0 0
        %3727 = vmatpush.bf16.msra.mxu0 0
        %3728 = vmatpush.bf16.msra.mxu0 0
        %3729 = vmatpush.bf16.msra.mxu0 %v3720
        %3730 = vmatpush.bf16.msra.mxu0 %v3719
        %3731 = vmatpush.bf16.msra.mxu0 %v3718
        %3732 = vmatpush.bf16.msra.mxu0 %v3717
        %3733 = vmatmul.bf16.gmra.mxu0 %v547
        %v3734 = vpop.f32.mrf.mxu0
        %v3735 = vadd.f32 0.0, %v3734
        %v3736 = vpop.f32.mrf.mxu0
        %v3737 = vadd.f32 0.0, %v3736
        %3738 = vmatmul.bf16.gmra.mxu0 %v550
        %v3739 = vpop.f32.mrf.mxu0
        %v3740 = vadd.f32 0.0, %v3739
        %v3741 = vpop.f32.mrf.mxu0
        %v3742 = vadd.f32 0.0, %v3741
        %3743 = vmatmul.bf16.gmra.mxu0 %v553
        %v3744 = vpop.f32.mrf.mxu0
        %v3745 = vadd.f32 0.0, %v3744
        %v3746 = vpop.f32.mrf.mxu0
        %v3747 = vadd.f32 0.0, %v3746
        %3748 = vmatmul.bf16.gmra.mxu0 %v556
        %v3749 = vpop.f32.mrf.mxu0
        %v3750 = vadd.f32 0.0, %v3749
        %v3751 = vpop.f32.mrf.mxu0
        %v3752 = vadd.f32 0.0, %v3751
        %3753 = vdwg.mxu0
        %v3754 = vadd.f32 %v3674, %v3735
        %v3755 = vadd.f32 %v3676, %v3737
        %v3756 = vadd.f32 %v3679, %v3740
        %v3757 = vadd.f32 %v3681, %v3742
        %v3758 = vadd.f32 %v3684, %v3745
        %v3759 = vadd.f32 %v3686, %v3747
        %v3760 = vadd.f32 %v3689, %v3750
        %v3761 = vadd.f32 %v3691, %v3752
        %v3762 = vld [vmem:[%s3324] sm:$0xf]
        %v3763 = vld [vmem:[%s3324 + $0x4] sm:$0xf]
        %v3764 = vld [vmem:[%s3324 + $0x8] sm:$0xf]
        %v3765 = vld [vmem:[%s3324 + $0xc] sm:$0xf]
        %v3766 = vld [vmem:[%s3324 + $0x10] sm:$0xf]
        %v3767 = vld [vmem:[%s3324 + $0x14] sm:$0xf]
        %v3768 = vld [vmem:[%s3324 + $0x18] sm:$0xf]
        %v3769 = vld [vmem:[%s3324 + $0x1c] sm:$0xf]
        %v3778 = vunpack.c.l.b16 %v3762
        %v3779 = vunpack.c.l.b16 %v3763
        %v3780 = vunpack.c.l.b16 %v3764
        %v3781 = vunpack.c.l.b16 %v3765
        %v3782 = vunpack.c.l.b16 %v3766
        %v3783 = vunpack.c.l.b16 %v3767
        %v3784 = vunpack.c.l.b16 %v3768
        %v3785 = vunpack.c.l.b16 %v3769
        %v3786 = vpack.c.b16 %v3779, %v3778
        %v3787 = vpack.c.b16 %v3781, %v3780
        %v3788 = vpack.c.b16 %v3783, %v3782
        %v3789 = vpack.c.b16 %v3785, %v3784
        %3794 = vmatpush.bf16.msra.mxu0 0
        %3795 = vmatpush.bf16.msra.mxu0 0
        %3796 = vmatpush.bf16.msra.mxu0 0
        %3797 = vmatpush.bf16.msra.mxu0 0
        %3798 = vmatpush.bf16.msra.mxu0 %v3789
        %3799 = vmatpush.bf16.msra.mxu0 %v3788
        %3800 = vmatpush.bf16.msra.mxu0 %v3787
        %3801 = vmatpush.bf16.msra.mxu0 %v3786
        %3802 = vmatmul.bf16.gmra.mxu0 %v649
        %v3803 = vpop.f32.mrf.mxu0
        %v3804 = vadd.f32 0.0, %v3803
        %v3805 = vpop.f32.mrf.mxu0
        %v3806 = vadd.f32 0.0, %v3805
        %3807 = vmatmul.bf16.gmra.mxu0 %v652
        %v3808 = vpop.f32.mrf.mxu0
        %v3809 = vadd.f32 0.0, %v3808
        %v3810 = vpop.f32.mrf.mxu0
        %v3811 = vadd.f32 0.0, %v3810
        %3812 = vmatmul.bf16.gmra.mxu0 %v655
        %v3813 = vpop.f32.mrf.mxu0
        %v3814 = vadd.f32 0.0, %v3813
        %v3815 = vpop.f32.mrf.mxu0
        %v3816 = vadd.f32 0.0, %v3815
        %3817 = vmatmul.bf16.gmra.mxu0 %v658
        %v3818 = vpop.f32.mrf.mxu0
        %v3819 = vadd.f32 0.0, %v3818
        %v3820 = vpop.f32.mrf.mxu0
        %v3821 = vadd.f32 0.0, %v3820
        %3822 = vdwg.mxu0
        %v3823 = vadd.f32 %v3754, %v3804
        %v3824 = vadd.f32 %v3755, %v3806
        %v3825 = vadd.f32 %v3756, %v3809
        %v3826 = vadd.f32 %v3757, %v3811
        %v3827 = vadd.f32 %v3758, %v3814
        %v3828 = vadd.f32 %v3759, %v3816
        %v3829 = vadd.f32 %v3760, %v3819
        %v3830 = vadd.f32 %v3761, %v3821
        %s3831 = scalar_lea.vmem %s250, 320
        %v3832 = vld [vmem:[%s3831] sm:$0xf]
        %v3833 = vld [vmem:[%s3831 + $0x4] sm:$0xf]
        %v3834 = vld [vmem:[%s3831 + $0x8] sm:$0xf]
        %v3835 = vld [vmem:[%s3831 + $0xc] sm:$0xf]
        %v3836 = vld [vmem:[%s3831 + $0x10] sm:$0xf]
        %v3837 = vld [vmem:[%s3831 + $0x14] sm:$0xf]
        %v3838 = vld [vmem:[%s3831 + $0x18] sm:$0xf]
        %v3839 = vld [vmem:[%s3831 + $0x1c] sm:$0xf]
        %v3848 = vunpack.c.l.b16 %v3832
        %v3849 = vunpack.c.l.b16 %v3833
        %v3850 = vunpack.c.l.b16 %v3834
        %v3851 = vunpack.c.l.b16 %v3835
        %v3852 = vunpack.c.l.b16 %v3836
        %v3853 = vunpack.c.l.b16 %v3837
        %v3854 = vunpack.c.l.b16 %v3838
        %v3855 = vunpack.c.l.b16 %v3839
        %v3856 = vpack.c.b16 %v3849, %v3848
        %v3857 = vpack.c.b16 %v3851, %v3850
        %v3858 = vpack.c.b16 %v3853, %v3852
        %v3859 = vpack.c.b16 %v3855, %v3854
        %3864 = vmatpush.bf16.msra.mxu0 0
        %3865 = vmatpush.bf16.msra.mxu0 0
        %3866 = vmatpush.bf16.msra.mxu0 0
        %3867 = vmatpush.bf16.msra.mxu0 0
        %3868 = vmatpush.bf16.msra.mxu0 %v3859
        %3869 = vmatpush.bf16.msra.mxu0 %v3858
        %3870 = vmatpush.bf16.msra.mxu0 %v3857
        %3871 = vmatpush.bf16.msra.mxu0 %v3856
        %3872 = vmatmul.bf16.gmra.mxu0 %v751
        %v3873 = vpop.f32.mrf.mxu0
        %v3874 = vadd.f32 0.0, %v3873
        %v3875 = vpop.f32.mrf.mxu0
        %v3876 = vadd.f32 0.0, %v3875
        %3877 = vmatmul.bf16.gmra.mxu0 %v754
        %v3878 = vpop.f32.mrf.mxu0
        %v3879 = vadd.f32 0.0, %v3878
        %v3880 = vpop.f32.mrf.mxu0
        %v3881 = vadd.f32 0.0, %v3880
        %3882 = vmatmul.bf16.gmra.mxu0 %v757
        %v3883 = vpop.f32.mrf.mxu0
        %v3884 = vadd.f32 0.0, %v3883
        %v3885 = vpop.f32.mrf.mxu0
        %v3886 = vadd.f32 0.0, %v3885
        %3887 = vmatmul.bf16.gmra.mxu0 %v760
        %v3888 = vpop.f32.mrf.mxu0
        %v3889 = vadd.f32 0.0, %v3888
        %v3890 = vpop.f32.mrf.mxu0
        %v3891 = vadd.f32 0.0, %v3890
        %3892 = vdwg.mxu0
        %v3893 = vadd.f32 %v3823, %v3874
        %v3894 = vadd.f32 %v3824, %v3876
        %v3895 = vadd.f32 %v3825, %v3879
        %v3896 = vadd.f32 %v3826, %v3881
        %v3897 = vadd.f32 %v3827, %v3884
        %v3898 = vadd.f32 %v3828, %v3886
        %v3899 = vadd.f32 %v3829, %v3889
        %v3900 = vadd.f32 %v3830, %v3891
        %3901 = vrot.lane.b32.xlu0 %v3893, 127
        %v3902 = vpop.permute.xlu0 %3901
        %3903 = vrot.lane.b32.xlu0 %v3894, 127
        %v3904 = vpop.permute.xlu0 %3903
        %3905 = vrot.lane.b32.xlu0 %v3895, 127
        %v3906 = vpop.permute.xlu0 %3905
        %3907 = vrot.lane.b32.xlu0 %v3896, 127
        %v3908 = vpop.permute.xlu0 %3907
        %3909 = vrot.lane.b32.xlu0 %v3897, 127
        %v3910 = vpop.permute.xlu0 %3909
        %3911 = vrot.lane.b32.xlu0 %v3898, 127
        %v3912 = vpop.permute.xlu0 %3911
        %3913 = vrot.lane.b32.xlu0 %v3899, 127
        %v3914 = vpop.permute.xlu0 %3913
        %3915 = vrot.lane.b32.xlu0 %v3900, 127
        %v3916 = vpop.permute.xlu0 %3915
        %v3917 = vmax.f32 %v3893, %v3902
        %v3918 = vmax.f32 %v3894, %v3904
        %v3919 = vmax.f32 %v3895, %v3906
        %v3920 = vmax.f32 %v3896, %v3908
        %v3921 = vmax.f32 %v3897, %v3910
        %v3922 = vmax.f32 %v3898, %v3912
        %v3923 = vmax.f32 %v3899, %v3914
        %v3924 = vmax.f32 %v3900, %v3916
        %3925 = vrot.lane.b32.xlu0 %v3893, 1
        %v3926 = vpop.permute.xlu0 %3925
        %3927 = vrot.lane.b32.xlu0 %v3894, 1
        %v3928 = vpop.permute.xlu0 %3927
        %3929 = vrot.lane.b32.xlu0 %v3895, 1
        %v3930 = vpop.permute.xlu0 %3929
        %3931 = vrot.lane.b32.xlu0 %v3896, 1
        %v3932 = vpop.permute.xlu0 %3931
        %3933 = vrot.lane.b32.xlu0 %v3897, 1
        %v3934 = vpop.permute.xlu0 %3933
        %3935 = vrot.lane.b32.xlu0 %v3898, 1
        %v3936 = vpop.permute.xlu0 %3935
        %3937 = vrot.lane.b32.xlu0 %v3899, 1
        %v3938 = vpop.permute.xlu0 %3937
        %3939 = vrot.lane.b32.xlu0 %v3900, 1
        %v3940 = vpop.permute.xlu0 %3939
        %v3941 = vadd.f32 %v3926, %v839
        %v3942 = vadd.f32 %v3928, %v839
        %v3943 = vadd.f32 %v3930, %v839
        %v3944 = vadd.f32 %v3932, %v839
        %v3945 = vadd.f32 %v3934, %v839
        %v3946 = vadd.f32 %v3936, %v839
        %v3947 = vadd.f32 %v3938, %v839
        %v3948 = vadd.f32 %v3940, %v839
        %v3949 = vmax.f32 %v3917, %v3941
        %v3950 = vmax.f32 %v3918, %v3942
        %v3951 = vmax.f32 %v3919, %v3943
        %v3952 = vmax.f32 %v3920, %v3944
        %v3953 = vmax.f32 %v3921, %v3945
        %v3954 = vmax.f32 %v3922, %v3946
        %v3955 = vmax.f32 %v3923, %v3947
        %v3956 = vmax.f32 %v3924, %v3948
        %3957 = vrot.lane.b32.xlu0 %v3949, 120
        %v3958 = vpop.permute.xlu0 %3957
        %3959 = vrot.lane.b32.xlu0 %v3950, 120
        %v3960 = vpop.permute.xlu0 %3959
        %3961 = vrot.lane.b32.xlu0 %v3951, 120
        %v3962 = vpop.permute.xlu0 %3961
        %3963 = vrot.lane.b32.xlu0 %v3952, 120
        %v3964 = vpop.permute.xlu0 %3963
        %3965 = vrot.lane.b32.xlu0 %v3953, 120
        %v3966 = vpop.permute.xlu0 %3965
        %3967 = vrot.lane.b32.xlu0 %v3954, 120
        %v3968 = vpop.permute.xlu0 %3967
        %3969 = vrot.lane.b32.xlu0 %v3955, 120
        %v3970 = vpop.permute.xlu0 %3969
        %3971 = vrot.lane.b32.xlu0 %v3956, 120
        %v3972 = vpop.permute.xlu0 %3971
        %v3973 = vmax.f32 %v3949, %v3958
        %v3974 = vmax.f32 %v3950, %v3960
        %v3975 = vmax.f32 %v3951, %v3962
        %v3976 = vmax.f32 %v3952, %v3964
        %v3977 = vmax.f32 %v3953, %v3966
        %v3978 = vmax.f32 %v3954, %v3968
        %v3979 = vmax.f32 %v3955, %v3970
        %v3980 = vmax.f32 %v3956, %v3972
        %3981 = vrot.lane.b32.xlu0 %v3949, 8
        %v3982 = vpop.permute.xlu0 %3981
        %3983 = vrot.lane.b32.xlu0 %v3950, 8
        %v3984 = vpop.permute.xlu0 %3983
        %3985 = vrot.lane.b32.xlu0 %v3951, 8
        %v3986 = vpop.permute.xlu0 %3985
        %3987 = vrot.lane.b32.xlu0 %v3952, 8
        %v3988 = vpop.permute.xlu0 %3987
        %3989 = vrot.lane.b32.xlu0 %v3953, 8
        %v3990 = vpop.permute.xlu0 %3989
        %3991 = vrot.lane.b32.xlu0 %v3954, 8
        %v3992 = vpop.permute.xlu0 %3991
        %3993 = vrot.lane.b32.xlu0 %v3955, 8
        %v3994 = vpop.permute.xlu0 %3993
        %3995 = vrot.lane.b32.xlu0 %v3956, 8
        %v3996 = vpop.permute.xlu0 %3995
        %v3997 = vadd.f32 %v3982, %v896
        %v3998 = vadd.f32 %v3984, %v896
        %v3999 = vadd.f32 %v3986, %v896
        %v4000 = vadd.f32 %v3988, %v896
        %v4001 = vadd.f32 %v3990, %v896
        %v4002 = vadd.f32 %v3992, %v896
        %v4003 = vadd.f32 %v3994, %v896
        %v4004 = vadd.f32 %v3996, %v896
        %v4005 = vmax.f32 %v3973, %v3997
        %v4006 = vmax.f32 %v3974, %v3998
        %v4007 = vmax.f32 %v3975, %v3999
        %v4008 = vmax.f32 %v3976, %v4000
        %v4009 = vmax.f32 %v3977, %v4001
        %v4010 = vmax.f32 %v3978, %v4002
        %v4011 = vmax.f32 %v3979, %v4003
        %v4012 = vmax.f32 %v3980, %v4004
        %v4013 = vadd.f32 %v4005, %v916
        %v4014 = vadd.f32 %v4006, %v921
        %v4015 = vadd.f32 %v4007, %v926
        %v4016 = vadd.f32 %v4008, %v931
        %v4017 = vadd.f32 %v4009, %v936
        %v4018 = vadd.f32 %v4010, %v941
        %v4019 = vadd.f32 %v4011, %v946
        %v4020 = vadd.f32 %v4012, %v951
        %v4021 = vmax.f32 %v4013, 0.0
        %v4022 = vmax.f32 %v4014, 0.0
        %v4023 = vmax.f32 %v4015, 0.0
        %v4024 = vmax.f32 %v4016, 0.0
        %v4025 = vmax.f32 %v4017, 0.0
        %v4026 = vmax.f32 %v4018, 0.0
        %v4027 = vmax.f32 %v4019, 0.0
        %v4028 = vmax.f32 %v4020, 0.0
        %v4029 = vmul.f32 %v4021, %v969
        %v4030 = vmul.f32 %v4022, %v969
        %v4031 = vmul.f32 %v4023, %v969
        %v4032 = vmul.f32 %v4024, %v969
        %v4033 = vmul.f32 %v4025, %v969
        %v4034 = vmul.f32 %v4026, %v969
        %v4035 = vmul.f32 %v4027, %v969
        %v4036 = vmul.f32 %v4028, %v969
        %4037 = vadd.xlane.f32.xlu0 %v4029
        %v4038 = vpop.xlane.xlu0 %4037
        %4039 = vadd.xlane.f32.xlu0 %v4030
        %v4040 = vpop.xlane.xlu0 %4039
        %4041 = vadd.xlane.f32.xlu0 %v4031
        %v4042 = vpop.xlane.xlu0 %4041
        %4043 = vadd.xlane.f32.xlu0 %v4032
        %v4044 = vpop.xlane.xlu0 %4043
        %4045 = vadd.xlane.f32.xlu0 %v4033
        %v4046 = vpop.xlane.xlu0 %4045
        %4047 = vadd.xlane.f32.xlu0 %v4034
        %v4048 = vpop.xlane.xlu0 %4047
        %4049 = vadd.xlane.f32.xlu0 %v4035
        %v4050 = vpop.xlane.xlu0 %4049
        %4051 = vadd.xlane.f32.xlu0 %v4036
        %v4052 = vpop.xlane.xlu0 %4051
        %v4061 = vperm.slane %v4038, %v1003
        %v4062 = vperm.slane %v4040, %v1005
        %v4063 = vsel %vm1007, %v4062, %v4061
        %v4064 = vperm.slane %v4042, %v1009
        %v4065 = vsel %vm1011, %v4064, %v4063
        %v4066 = vperm.slane %v4044, %v1013
        %v4067 = vsel %vm1015, %v4066, %v4065
        %v4068 = vperm.slane %v4046, %v1017
        %v4069 = vsel %vm1019, %v4068, %v4067
        %v4070 = vperm.slane %v4048, %v1021
        %v4071 = vsel %vm1023, %v4070, %v4069
        %v4072 = vperm.slane %v4050, %v1025
        %v4073 = vsel %vm1027, %v4072, %v4071
        %v4074 = vperm.slane %v4052, %v1029
        %v4075 = vsel %vm1031, %v4074, %v4073
        %4077 = vst.msk [vmem:[#allocation2 + $0x6] sm:$0x1] %vm1034, %v4075
        %v4078 = vld [vmem:[%s2310] sm:$0xf]
        %v4079 = vld [vmem:[%s2310 + $0x4] sm:$0xf]
        %v4080 = vld [vmem:[%s2310 + $0x8] sm:$0xf]
        %v4081 = vld [vmem:[%s2310 + $0xc] sm:$0xf]
        %v4082 = vld [vmem:[%s2310 + $0x10] sm:$0xf]
        %v4083 = vld [vmem:[%s2310 + $0x14] sm:$0xf]
        %v4084 = vld [vmem:[%s2310 + $0x18] sm:$0xf]
        %v4085 = vld [vmem:[%s2310 + $0x1c] sm:$0xf]
        %v4086 = vld [vmem:[%s2817] sm:$0xf]
        %v4087 = vld [vmem:[%s2817 + $0x4] sm:$0xf]
        %v4088 = vld [vmem:[%s2817 + $0x8] sm:$0xf]
        %v4089 = vld [vmem:[%s2817 + $0xc] sm:$0xf]
        %v4090 = vld [vmem:[%s2817 + $0x10] sm:$0xf]
        %v4091 = vld [vmem:[%s2817 + $0x14] sm:$0xf]
        %v4092 = vld [vmem:[%s2817 + $0x18] sm:$0xf]
        %v4093 = vld [vmem:[%s2817 + $0x1c] sm:$0xf]
        %v4102 = vunpack.c.l.b16 %v4086
        %v4103 = vunpack.c.l.b16 %v4087
        %v4104 = vunpack.c.l.b16 %v4088
        %v4105 = vunpack.c.l.b16 %v4089
        %v4106 = vunpack.c.l.b16 %v4090
        %v4107 = vunpack.c.l.b16 %v4091
        %v4108 = vunpack.c.l.b16 %v4092
        %v4109 = vunpack.c.l.b16 %v4093
        %v4110 = vpack.c.b16 %v4103, %v4102
        %v4111 = vpack.c.b16 %v4105, %v4104
        %v4112 = vpack.c.b16 %v4107, %v4106
        %v4113 = vpack.c.b16 %v4109, %v4108
        %4118 = vmatpush.bf16.msra.mxu0 0
        %4119 = vmatpush.bf16.msra.mxu0 0
        %4120 = vmatpush.bf16.msra.mxu0 0
        %4121 = vmatpush.bf16.msra.mxu0 0
        %4122 = vmatpush.bf16.msra.mxu0 %v4113
        %4123 = vmatpush.bf16.msra.mxu0 %v4112
        %4124 = vmatpush.bf16.msra.mxu0 %v4111
        %4125 = vmatpush.bf16.msra.mxu0 %v4110
        %4126 = vmatmul.bf16.gmra.mxu0 %v368
        %v4127 = vpop.f32.mrf.mxu0
        %v4128 = vadd.f32 0.0, %v4127
        %v4129 = vpop.f32.mrf.mxu0
        %v4130 = vadd.f32 0.0, %v4129
        %4131 = vmatmul.bf16.gmra.mxu0 %v371
        %v4132 = vpop.f32.mrf.mxu0
        %v4133 = vadd.f32 0.0, %v4132
        %v4134 = vpop.f32.mrf.mxu0
        %v4135 = vadd.f32 0.0, %v4134
        %4136 = vmatmul.bf16.gmra.mxu0 %v374
        %v4137 = vpop.f32.mrf.mxu0
        %v4138 = vadd.f32 0.0, %v4137
        %v4139 = vpop.f32.mrf.mxu0
        %v4140 = vadd.f32 0.0, %v4139
        %4141 = vmatmul.bf16.gmra.mxu0 %v377
        %v4142 = vpop.f32.mrf.mxu0
        %v4143 = vadd.f32 0.0, %v4142
        %v4144 = vpop.f32.mrf.mxu0
        %v4145 = vadd.f32 0.0, %v4144
        %4146 = vdwg.mxu0
        %v4155 = vunpack.c.l.b16 %v4078
        %v4156 = vunpack.c.l.b16 %v4079
        %v4157 = vunpack.c.l.b16 %v4080
        %v4158 = vunpack.c.l.b16 %v4081
        %v4159 = vunpack.c.l.b16 %v4082
        %v4160 = vunpack.c.l.b16 %v4083
        %v4161 = vunpack.c.l.b16 %v4084
        %v4162 = vunpack.c.l.b16 %v4085
        %v4163 = vpack.c.b16 %v4156, %v4155
        %v4164 = vpack.c.b16 %v4158, %v4157
        %v4165 = vpack.c.b16 %v4160, %v4159
        %v4166 = vpack.c.b16 %v4162, %v4161
        %4171 = vmatpush.bf16.msra.mxu0 0
        %4172 = vmatpush.bf16.msra.mxu0 0
        %4173 = vmatpush.bf16.msra.mxu0 0
        %4174 = vmatpush.bf16.msra.mxu0 0
        %4175 = vmatpush.bf16.msra.mxu0 %v4166
        %4176 = vmatpush.bf16.msra.mxu0 %v4165
        %4177 = vmatpush.bf16.msra.mxu0 %v4164
        %4178 = vmatpush.bf16.msra.mxu0 %v4163
        %4179 = vmatmul.bf16.gmra.mxu0 %v453
        %v4180 = vpop.f32.mrf.mxu0
        %v4181 = vadd.f32 %v4128, %v4180
        %v4182 = vpop.f32.mrf.mxu0
        %v4183 = vadd.f32 %v4130, %v4182
        %4184 = vmatmul.bf16.gmra.mxu0 %v456
        %v4185 = vpop.f32.mrf.mxu0
        %v4186 = vadd.f32 %v4133, %v4185
        %v4187 = vpop.f32.mrf.mxu0
        %v4188 = vadd.f32 %v4135, %v4187
        %4189 = vmatmul.bf16.gmra.mxu0 %v459
        %v4190 = vpop.f32.mrf.mxu0
        %v4191 = vadd.f32 %v4138, %v4190
        %v4192 = vpop.f32.mrf.mxu0
        %v4193 = vadd.f32 %v4140, %v4192
        %4194 = vmatmul.bf16.gmra.mxu0 %v462
        %v4195 = vpop.f32.mrf.mxu0
        %v4196 = vadd.f32 %v4143, %v4195
        %v4197 = vpop.f32.mrf.mxu0
        %v4198 = vadd.f32 %v4145, %v4197
        %4199 = vdwg.mxu0
        %v4200 = vld [vmem:[%s3324] sm:$0xf]
        %v4201 = vld [vmem:[%s3324 + $0x4] sm:$0xf]
        %v4202 = vld [vmem:[%s3324 + $0x8] sm:$0xf]
        %v4203 = vld [vmem:[%s3324 + $0xc] sm:$0xf]
        %v4204 = vld [vmem:[%s3324 + $0x10] sm:$0xf]
        %v4205 = vld [vmem:[%s3324 + $0x14] sm:$0xf]
        %v4206 = vld [vmem:[%s3324 + $0x18] sm:$0xf]
        %v4207 = vld [vmem:[%s3324 + $0x1c] sm:$0xf]
        %v4216 = vunpack.c.l.b16 %v4200
        %v4217 = vunpack.c.l.b16 %v4201
        %v4218 = vunpack.c.l.b16 %v4202
        %v4219 = vunpack.c.l.b16 %v4203
        %v4220 = vunpack.c.l.b16 %v4204
        %v4221 = vunpack.c.l.b16 %v4205
        %v4222 = vunpack.c.l.b16 %v4206
        %v4223 = vunpack.c.l.b16 %v4207
        %v4224 = vpack.c.b16 %v4217, %v4216
        %v4225 = vpack.c.b16 %v4219, %v4218
        %v4226 = vpack.c.b16 %v4221, %v4220
        %v4227 = vpack.c.b16 %v4223, %v4222
        %4232 = vmatpush.bf16.msra.mxu0 0
        %4233 = vmatpush.bf16.msra.mxu0 0
        %4234 = vmatpush.bf16.msra.mxu0 0
        %4235 = vmatpush.bf16.msra.mxu0 0
        %4236 = vmatpush.bf16.msra.mxu0 %v4227
        %4237 = vmatpush.bf16.msra.mxu0 %v4226
        %4238 = vmatpush.bf16.msra.mxu0 %v4225
        %4239 = vmatpush.bf16.msra.mxu0 %v4224
        %4240 = vmatmul.bf16.gmra.mxu0 %v547
        %v4241 = vpop.f32.mrf.mxu0
        %v4242 = vadd.f32 0.0, %v4241
        %v4243 = vpop.f32.mrf.mxu0
        %v4244 = vadd.f32 0.0, %v4243
        %4245 = vmatmul.bf16.gmra.mxu0 %v550
        %v4246 = vpop.f32.mrf.mxu0
        %v4247 = vadd.f32 0.0, %v4246
        %v4248 = vpop.f32.mrf.mxu0
        %v4249 = vadd.f32 0.0, %v4248
        %4250 = vmatmul.bf16.gmra.mxu0 %v553
        %v4251 = vpop.f32.mrf.mxu0
        %v4252 = vadd.f32 0.0, %v4251
        %v4253 = vpop.f32.mrf.mxu0
        %v4254 = vadd.f32 0.0, %v4253
        %4255 = vmatmul.bf16.gmra.mxu0 %v556
        %v4256 = vpop.f32.mrf.mxu0
        %v4257 = vadd.f32 0.0, %v4256
        %v4258 = vpop.f32.mrf.mxu0
        %v4259 = vadd.f32 0.0, %v4258
        %4260 = vdwg.mxu0
        %v4261 = vadd.f32 %v4181, %v4242
        %v4262 = vadd.f32 %v4183, %v4244
        %v4263 = vadd.f32 %v4186, %v4247
        %v4264 = vadd.f32 %v4188, %v4249
        %v4265 = vadd.f32 %v4191, %v4252
        %v4266 = vadd.f32 %v4193, %v4254
        %v4267 = vadd.f32 %v4196, %v4257
        %v4268 = vadd.f32 %v4198, %v4259
        %v4269 = vld [vmem:[%s3831] sm:$0xf]
        %v4270 = vld [vmem:[%s3831 + $0x4] sm:$0xf]
        %v4271 = vld [vmem:[%s3831 + $0x8] sm:$0xf]
        %v4272 = vld [vmem:[%s3831 + $0xc] sm:$0xf]
        %v4273 = vld [vmem:[%s3831 + $0x10] sm:$0xf]
        %v4274 = vld [vmem:[%s3831 + $0x14] sm:$0xf]
        %v4275 = vld [vmem:[%s3831 + $0x18] sm:$0xf]
        %v4276 = vld [vmem:[%s3831 + $0x1c] sm:$0xf]
        %v4285 = vunpack.c.l.b16 %v4269
        %v4286 = vunpack.c.l.b16 %v4270
        %v4287 = vunpack.c.l.b16 %v4271
        %v4288 = vunpack.c.l.b16 %v4272
        %v4289 = vunpack.c.l.b16 %v4273
        %v4290 = vunpack.c.l.b16 %v4274
        %v4291 = vunpack.c.l.b16 %v4275
        %v4292 = vunpack.c.l.b16 %v4276
        %v4293 = vpack.c.b16 %v4286, %v4285
        %v4294 = vpack.c.b16 %v4288, %v4287
        %v4295 = vpack.c.b16 %v4290, %v4289
        %v4296 = vpack.c.b16 %v4292, %v4291
        %4301 = vmatpush.bf16.msra.mxu0 0
        %4302 = vmatpush.bf16.msra.mxu0 0
        %4303 = vmatpush.bf16.msra.mxu0 0
        %4304 = vmatpush.bf16.msra.mxu0 0
        %4305 = vmatpush.bf16.msra.mxu0 %v4296
        %4306 = vmatpush.bf16.msra.mxu0 %v4295
        %4307 = vmatpush.bf16.msra.mxu0 %v4294
        %4308 = vmatpush.bf16.msra.mxu0 %v4293
        %4309 = vmatmul.bf16.gmra.mxu0 %v649
        %v4310 = vpop.f32.mrf.mxu0
        %v4311 = vadd.f32 0.0, %v4310
        %v4312 = vpop.f32.mrf.mxu0
        %v4313 = vadd.f32 0.0, %v4312
        %4314 = vmatmul.bf16.gmra.mxu0 %v652
        %v4315 = vpop.f32.mrf.mxu0
        %v4316 = vadd.f32 0.0, %v4315
        %v4317 = vpop.f32.mrf.mxu0
        %v4318 = vadd.f32 0.0, %v4317
        %4319 = vmatmul.bf16.gmra.mxu0 %v655
        %v4320 = vpop.f32.mrf.mxu0
        %v4321 = vadd.f32 0.0, %v4320
        %v4322 = vpop.f32.mrf.mxu0
        %v4323 = vadd.f32 0.0, %v4322
        %4324 = vmatmul.bf16.gmra.mxu0 %v658
        %v4325 = vpop.f32.mrf.mxu0
        %v4326 = vadd.f32 0.0, %v4325
        %v4327 = vpop.f32.mrf.mxu0
        %v4328 = vadd.f32 0.0, %v4327
        %4329 = vdwg.mxu0
        %v4330 = vadd.f32 %v4261, %v4311
        %v4331 = vadd.f32 %v4262, %v4313
        %v4332 = vadd.f32 %v4263, %v4316
        %v4333 = vadd.f32 %v4264, %v4318
        %v4334 = vadd.f32 %v4265, %v4321
        %v4335 = vadd.f32 %v4266, %v4323
        %v4336 = vadd.f32 %v4267, %v4326
        %v4337 = vadd.f32 %v4268, %v4328
        %s4338 = scalar_lea.vmem %s250, 352
        %v4339 = vld [vmem:[%s4338] sm:$0xf]
        %v4340 = vld [vmem:[%s4338 + $0x4] sm:$0xf]
        %v4341 = vld [vmem:[%s4338 + $0x8] sm:$0xf]
        %v4342 = vld [vmem:[%s4338 + $0xc] sm:$0xf]
        %v4343 = vld [vmem:[%s4338 + $0x10] sm:$0xf]
        %v4344 = vld [vmem:[%s4338 + $0x14] sm:$0xf]
        %v4345 = vld [vmem:[%s4338 + $0x18] sm:$0xf]
        %v4346 = vld [vmem:[%s4338 + $0x1c] sm:$0xf]
        %v4355 = vunpack.c.l.b16 %v4339
        %v4356 = vunpack.c.l.b16 %v4340
        %v4357 = vunpack.c.l.b16 %v4341
        %v4358 = vunpack.c.l.b16 %v4342
        %v4359 = vunpack.c.l.b16 %v4343
        %v4360 = vunpack.c.l.b16 %v4344
        %v4361 = vunpack.c.l.b16 %v4345
        %v4362 = vunpack.c.l.b16 %v4346
        %v4363 = vpack.c.b16 %v4356, %v4355
        %v4364 = vpack.c.b16 %v4358, %v4357
        %v4365 = vpack.c.b16 %v4360, %v4359
        %v4366 = vpack.c.b16 %v4362, %v4361
        %4371 = vmatpush.bf16.msra.mxu0 0
        %4372 = vmatpush.bf16.msra.mxu0 0
        %4373 = vmatpush.bf16.msra.mxu0 0
        %4374 = vmatpush.bf16.msra.mxu0 0
        %4375 = vmatpush.bf16.msra.mxu0 %v4366
        %4376 = vmatpush.bf16.msra.mxu0 %v4365
        %4377 = vmatpush.bf16.msra.mxu0 %v4364
        %4378 = vmatpush.bf16.msra.mxu0 %v4363
        %4379 = vmatmul.bf16.gmra.mxu0 %v751
        %v4380 = vpop.f32.mrf.mxu0
        %v4381 = vadd.f32 0.0, %v4380
        %v4382 = vpop.f32.mrf.mxu0
        %v4383 = vadd.f32 0.0, %v4382
        %4384 = vmatmul.bf16.gmra.mxu0 %v754
        %v4385 = vpop.f32.mrf.mxu0
        %v4386 = vadd.f32 0.0, %v4385
        %v4387 = vpop.f32.mrf.mxu0
        %v4388 = vadd.f32 0.0, %v4387
        %4389 = vmatmul.bf16.gmra.mxu0 %v757
        %v4390 = vpop.f32.mrf.mxu0
        %v4391 = vadd.f32 0.0, %v4390
        %v4392 = vpop.f32.mrf.mxu0
        %v4393 = vadd.f32 0.0, %v4392
        %4394 = vmatmul.bf16.gmra.mxu0 %v760
        %v4395 = vpop.f32.mrf.mxu0
        %v4396 = vadd.f32 0.0, %v4395
        %v4397 = vpop.f32.mrf.mxu0
        %v4398 = vadd.f32 0.0, %v4397
        %4399 = vdwg.mxu0
        %v4400 = vadd.f32 %v4330, %v4381
        %v4401 = vadd.f32 %v4331, %v4383
        %v4402 = vadd.f32 %v4332, %v4386
        %v4403 = vadd.f32 %v4333, %v4388
        %v4404 = vadd.f32 %v4334, %v4391
        %v4405 = vadd.f32 %v4335, %v4393
        %v4406 = vadd.f32 %v4336, %v4396
        %v4407 = vadd.f32 %v4337, %v4398
        %4408 = vrot.lane.b32.xlu0 %v4400, 127
        %v4409 = vpop.permute.xlu0 %4408
        %4410 = vrot.lane.b32.xlu0 %v4401, 127
        %v4411 = vpop.permute.xlu0 %4410
        %4412 = vrot.lane.b32.xlu0 %v4402, 127
        %v4413 = vpop.permute.xlu0 %4412
        %4414 = vrot.lane.b32.xlu0 %v4403, 127
        %v4415 = vpop.permute.xlu0 %4414
        %4416 = vrot.lane.b32.xlu0 %v4404, 127
        %v4417 = vpop.permute.xlu0 %4416
        %4418 = vrot.lane.b32.xlu0 %v4405, 127
        %v4419 = vpop.permute.xlu0 %4418
        %4420 = vrot.lane.b32.xlu0 %v4406, 127
        %v4421 = vpop.permute.xlu0 %4420
        %4422 = vrot.lane.b32.xlu0 %v4407, 127
        %v4423 = vpop.permute.xlu0 %4422
        %v4424 = vmax.f32 %v4400, %v4409
        %v4425 = vmax.f32 %v4401, %v4411
        %v4426 = vmax.f32 %v4402, %v4413
        %v4427 = vmax.f32 %v4403, %v4415
        %v4428 = vmax.f32 %v4404, %v4417
        %v4429 = vmax.f32 %v4405, %v4419
        %v4430 = vmax.f32 %v4406, %v4421
        %v4431 = vmax.f32 %v4407, %v4423
        %4432 = vrot.lane.b32.xlu0 %v4400, 1
        %v4433 = vpop.permute.xlu0 %4432
        %4434 = vrot.lane.b32.xlu0 %v4401, 1
        %v4435 = vpop.permute.xlu0 %4434
        %4436 = vrot.lane.b32.xlu0 %v4402, 1
        %v4437 = vpop.permute.xlu0 %4436
        %4438 = vrot.lane.b32.xlu0 %v4403, 1
        %v4439 = vpop.permute.xlu0 %4438
        %4440 = vrot.lane.b32.xlu0 %v4404, 1
        %v4441 = vpop.permute.xlu0 %4440
        %4442 = vrot.lane.b32.xlu0 %v4405, 1
        %v4443 = vpop.permute.xlu0 %4442
        %4444 = vrot.lane.b32.xlu0 %v4406, 1
        %v4445 = vpop.permute.xlu0 %4444
        %4446 = vrot.lane.b32.xlu0 %v4407, 1
        %v4447 = vpop.permute.xlu0 %4446
        %v4448 = vadd.f32 %v4433, %v839
        %v4449 = vadd.f32 %v4435, %v839
        %v4450 = vadd.f32 %v4437, %v839
        %v4451 = vadd.f32 %v4439, %v839
        %v4452 = vadd.f32 %v4441, %v839
        %v4453 = vadd.f32 %v4443, %v839
        %v4454 = vadd.f32 %v4445, %v839
        %v4455 = vadd.f32 %v4447, %v839
        %v4456 = vmax.f32 %v4424, %v4448
        %v4457 = vmax.f32 %v4425, %v4449
        %v4458 = vmax.f32 %v4426, %v4450
        %v4459 = vmax.f32 %v4427, %v4451
        %v4460 = vmax.f32 %v4428, %v4452
        %v4461 = vmax.f32 %v4429, %v4453
        %v4462 = vmax.f32 %v4430, %v4454
        %v4463 = vmax.f32 %v4431, %v4455
        %4464 = vrot.lane.b32.xlu0 %v4456, 120
        %v4465 = vpop.permute.xlu0 %4464
        %4466 = vrot.lane.b32.xlu0 %v4457, 120
        %v4467 = vpop.permute.xlu0 %4466
        %4468 = vrot.lane.b32.xlu0 %v4458, 120
        %v4469 = vpop.permute.xlu0 %4468
        %4470 = vrot.lane.b32.xlu0 %v4459, 120
        %v4471 = vpop.permute.xlu0 %4470
        %4472 = vrot.lane.b32.xlu0 %v4460, 120
        %v4473 = vpop.permute.xlu0 %4472
        %4474 = vrot.lane.b32.xlu0 %v4461, 120
        %v4475 = vpop.permute.xlu0 %4474
        %4476 = vrot.lane.b32.xlu0 %v4462, 120
        %v4477 = vpop.permute.xlu0 %4476
        %4478 = vrot.lane.b32.xlu0 %v4463, 120
        %v4479 = vpop.permute.xlu0 %4478
        %v4480 = vmax.f32 %v4456, %v4465
        %v4481 = vmax.f32 %v4457, %v4467
        %v4482 = vmax.f32 %v4458, %v4469
        %v4483 = vmax.f32 %v4459, %v4471
        %v4484 = vmax.f32 %v4460, %v4473
        %v4485 = vmax.f32 %v4461, %v4475
        %v4486 = vmax.f32 %v4462, %v4477
        %v4487 = vmax.f32 %v4463, %v4479
        %4488 = vrot.lane.b32.xlu0 %v4456, 8
        %v4489 = vpop.permute.xlu0 %4488
        %4490 = vrot.lane.b32.xlu0 %v4457, 8
        %v4491 = vpop.permute.xlu0 %4490
        %4492 = vrot.lane.b32.xlu0 %v4458, 8
        %v4493 = vpop.permute.xlu0 %4492
        %4494 = vrot.lane.b32.xlu0 %v4459, 8
        %v4495 = vpop.permute.xlu0 %4494
        %4496 = vrot.lane.b32.xlu0 %v4460, 8
        %v4497 = vpop.permute.xlu0 %4496
        %4498 = vrot.lane.b32.xlu0 %v4461, 8
        %v4499 = vpop.permute.xlu0 %4498
        %4500 = vrot.lane.b32.xlu0 %v4462, 8
        %v4501 = vpop.permute.xlu0 %4500
        %4502 = vrot.lane.b32.xlu0 %v4463, 8
        %v4503 = vpop.permute.xlu0 %4502
        %v4504 = vadd.f32 %v4489, %v896
        %v4505 = vadd.f32 %v4491, %v896
        %v4506 = vadd.f32 %v4493, %v896
        %v4507 = vadd.f32 %v4495, %v896
        %v4508 = vadd.f32 %v4497, %v896
        %v4509 = vadd.f32 %v4499, %v896
        %v4510 = vadd.f32 %v4501, %v896
        %v4511 = vadd.f32 %v4503, %v896
        %v4512 = vmax.f32 %v4480, %v4504
        %v4513 = vmax.f32 %v4481, %v4505
        %v4514 = vmax.f32 %v4482, %v4506
        %v4515 = vmax.f32 %v4483, %v4507
        %v4516 = vmax.f32 %v4484, %v4508
        %v4517 = vmax.f32 %v4485, %v4509
        %v4518 = vmax.f32 %v4486, %v4510
        %v4519 = vmax.f32 %v4487, %v4511
        %v4520 = vadd.f32 %v4512, %v916
        %v4521 = vadd.f32 %v4513, %v921
        %v4522 = vadd.f32 %v4514, %v926
        %v4523 = vadd.f32 %v4515, %v931
        %v4524 = vadd.f32 %v4516, %v936
        %v4525 = vadd.f32 %v4517, %v941
        %v4526 = vadd.f32 %v4518, %v946
        %v4527 = vadd.f32 %v4519, %v951
        %v4528 = vmax.f32 %v4520, 0.0
        %v4529 = vmax.f32 %v4521, 0.0
        %v4530 = vmax.f32 %v4522, 0.0
        %v4531 = vmax.f32 %v4523, 0.0
        %v4532 = vmax.f32 %v4524, 0.0
        %v4533 = vmax.f32 %v4525, 0.0
        %v4534 = vmax.f32 %v4526, 0.0
        %v4535 = vmax.f32 %v4527, 0.0
        %v4536 = vmul.f32 %v4528, %v969
        %v4537 = vmul.f32 %v4529, %v969
        %v4538 = vmul.f32 %v4530, %v969
        %v4539 = vmul.f32 %v4531, %v969
        %v4540 = vmul.f32 %v4532, %v969
        %v4541 = vmul.f32 %v4533, %v969
        %v4542 = vmul.f32 %v4534, %v969
        %v4543 = vmul.f32 %v4535, %v969
        %4544 = vadd.xlane.f32.xlu0 %v4536
        %v4545 = vpop.xlane.xlu0 %4544
        %4546 = vadd.xlane.f32.xlu0 %v4537
        %v4547 = vpop.xlane.xlu0 %4546
        %4548 = vadd.xlane.f32.xlu0 %v4538
        %v4549 = vpop.xlane.xlu0 %4548
        %4550 = vadd.xlane.f32.xlu0 %v4539
        %v4551 = vpop.xlane.xlu0 %4550
        %4552 = vadd.xlane.f32.xlu0 %v4540
        %v4553 = vpop.xlane.xlu0 %4552
        %4554 = vadd.xlane.f32.xlu0 %v4541
        %v4555 = vpop.xlane.xlu0 %4554
        %4556 = vadd.xlane.f32.xlu0 %v4542
        %v4557 = vpop.xlane.xlu0 %4556
        %4558 = vadd.xlane.f32.xlu0 %v4543
        %v4559 = vpop.xlane.xlu0 %4558
        %v4568 = vperm.slane %v4545, %v1003
        %v4569 = vperm.slane %v4547, %v1005
        %v4570 = vsel %vm1007, %v4569, %v4568
        %v4571 = vperm.slane %v4549, %v1009
        %v4572 = vsel %vm1011, %v4571, %v4570
        %v4573 = vperm.slane %v4551, %v1013
        %v4574 = vsel %vm1015, %v4573, %v4572
        %v4575 = vperm.slane %v4553, %v1017
        %v4576 = vsel %vm1019, %v4575, %v4574
        %v4577 = vperm.slane %v4555, %v1021
        %v4578 = vsel %vm1023, %v4577, %v4576
        %v4579 = vperm.slane %v4557, %v1025
        %v4580 = vsel %vm1027, %v4579, %v4578
        %v4581 = vperm.slane %v4559, %v1029
        %v4582 = vsel %vm1031, %v4581, %v4580
        %4584 = vst.msk [vmem:[#allocation2 + $0x7] sm:$0x1] %vm1034, %v4582
        %v4585 = vld [vmem:[#allocation2] sm:$0xff]
        %v4586 = vld [vmem:[%s2] sm:$0xff]
        %v4587 = vld [vmem:[%s2 + $0x8] sm:$0xff]
        %v4588 = vld [vmem:[%s2 + $0x10] sm:$0xff]
        %v4589 = vld [vmem:[%s2 + $0x18] sm:$0xff]
        %v4590 = vld [vmem:[%s2 + $0x20] sm:$0xff]
        %v4591 = vld [vmem:[%s2 + $0x28] sm:$0xff]
        %v4592 = vld [vmem:[%s2 + $0x30] sm:$0xff]
        %v4593 = vld [vmem:[%s2 + $0x38] sm:$0xff]
        %v4594 = vld [vmem:[%s2 + $0x40] sm:$0xff]
        %v4595 = vld [vmem:[%s2 + $0x48] sm:$0xff]
        %v4596 = vld [vmem:[%s2 + $0x50] sm:$0xff]
        %v4597 = vld [vmem:[%s2 + $0x58] sm:$0xff]
        %v4598 = vld [vmem:[%s2 + $0x60] sm:$0xff]
        %v4599 = vld [vmem:[%s2 + $0x68] sm:$0xff]
        %v4600 = vld [vmem:[%s2 + $0x70] sm:$0xff]
        %v4601 = vld [vmem:[%s2 + $0x78] sm:$0xff]
        %v4602 = vld [vmem:[%s2 + $0x80] sm:$0xff]
        %v4603 = vld [vmem:[%s2 + $0x88] sm:$0xff]
        %v4604 = vld [vmem:[%s2 + $0x90] sm:$0xff]
        %v4605 = vld [vmem:[%s2 + $0x98] sm:$0xff]
        %v4606 = vld [vmem:[%s2 + $0xa0] sm:$0xff]
        %v4607 = vld [vmem:[%s2 + $0xa8] sm:$0xff]
        %v4608 = vld [vmem:[%s2 + $0xb0] sm:$0xff]
        %v4609 = vld [vmem:[%s2 + $0xb8] sm:$0xff]
        %v4610 = vld [vmem:[%s2 + $0xc0] sm:$0xff]
        %v4611 = vld [vmem:[%s2 + $0xc8] sm:$0xff]
        %v4612 = vld [vmem:[%s2 + $0xd0] sm:$0xff]
        %v4613 = vld [vmem:[%s2 + $0xd8] sm:$0xff]
        %v4614 = vld [vmem:[%s2 + $0xe0] sm:$0xff]
        %v4615 = vld [vmem:[%s2 + $0xe8] sm:$0xff]
        %v4616 = vld [vmem:[%s2 + $0xf0] sm:$0xff]
        %v4617 = vld [vmem:[%s2 + $0xf8] sm:$0xff]
        %v4619 = vsel %vm366, %v4585, 0
        %4621 = vmatpush.msra.mxu0 0.0
        %4622 = vmatpush.msra.mxu0 0.0
        %4623 = vmatpush.msra.mxu0 0.0
        %4624 = vmatpush.msra.mxu0 0.0
        %4625 = vmatpush.msra.mxu0 0.0
        %4626 = vmatpush.msra.mxu0 0.0
        %4627 = vmatpush.msra.mxu0 0.0
        %4628 = vmatpush.msra.mxu0 0.0
        %4629 = vmatpush.msra.mxu0 %v4614
        %4630 = vmatpush.msra.mxu0 %v4610
        %4631 = vmatpush.msra.mxu0 %v4606
        %4632 = vmatpush.msra.mxu0 %v4602
        %4633 = vmatpush.msra.mxu0 %v4598
        %4634 = vmatpush.msra.mxu0 %v4594
        %4635 = vmatpush.msra.mxu0 %v4590
        %4636 = vmatpush.msra.mxu0 %v4586
        %4637 = vmatmul.f32.gmra.mxu0 %v4619
        %v4638 = vpop.f32.mrf.mxu0
        %v4639 = vadd.f32 0.0, %v4638
        %4640 = vdwg.mxu0
        %4641 = vmatpush.msra.mxu0 0.0
        %4642 = vmatpush.msra.mxu0 0.0
        %4643 = vmatpush.msra.mxu0 0.0
        %4644 = vmatpush.msra.mxu0 0.0
        %4645 = vmatpush.msra.mxu0 0.0
        %4646 = vmatpush.msra.mxu0 0.0
        %4647 = vmatpush.msra.mxu0 0.0
        %4648 = vmatpush.msra.mxu0 0.0
        %4649 = vmatpush.msra.mxu0 %v4615
        %4650 = vmatpush.msra.mxu0 %v4611
        %4651 = vmatpush.msra.mxu0 %v4607
        %4652 = vmatpush.msra.mxu0 %v4603
        %4653 = vmatpush.msra.mxu0 %v4599
        %4654 = vmatpush.msra.mxu0 %v4595
        %4655 = vmatpush.msra.mxu0 %v4591
        %4656 = vmatpush.msra.mxu0 %v4587
        %4657 = vmatmul.f32.gmra.mxu0 %v4619
        %v4658 = vpop.f32.mrf.mxu0
        %v4659 = vadd.f32 0.0, %v4658
        %4660 = vdwg.mxu0
        %4661 = vmatpush.msra.mxu0 0.0
        %4662 = vmatpush.msra.mxu0 0.0
        %4663 = vmatpush.msra.mxu0 0.0
        %4664 = vmatpush.msra.mxu0 0.0
        %4665 = vmatpush.msra.mxu0 0.0
        %4666 = vmatpush.msra.mxu0 0.0
        %4667 = vmatpush.msra.mxu0 0.0
        %4668 = vmatpush.msra.mxu0 0.0
        %4669 = vmatpush.msra.mxu0 %v4616
        %4670 = vmatpush.msra.mxu0 %v4612
        %4671 = vmatpush.msra.mxu0 %v4608
        %4672 = vmatpush.msra.mxu0 %v4604
        %4673 = vmatpush.msra.mxu0 %v4600
        %4674 = vmatpush.msra.mxu0 %v4596
        %4675 = vmatpush.msra.mxu0 %v4592
        %4676 = vmatpush.msra.mxu0 %v4588
        %4677 = vmatmul.f32.gmra.mxu0 %v4619
        %v4678 = vpop.f32.mrf.mxu0
        %v4679 = vadd.f32 0.0, %v4678
        %4680 = vdwg.mxu0
        %4681 = vmatpush.msra.mxu0 0.0
        %4682 = vmatpush.msra.mxu0 0.0
        %4683 = vmatpush.msra.mxu0 0.0
        %4684 = vmatpush.msra.mxu0 0.0
        %4685 = vmatpush.msra.mxu0 0.0
        %4686 = vmatpush.msra.mxu0 0.0
        %4687 = vmatpush.msra.mxu0 0.0
        %4688 = vmatpush.msra.mxu0 0.0
        %4689 = vmatpush.msra.mxu0 %v4617
        %4690 = vmatpush.msra.mxu0 %v4613
        %4691 = vmatpush.msra.mxu0 %v4609
        %4692 = vmatpush.msra.mxu0 %v4605
        %4693 = vmatpush.msra.mxu0 %v4601
        %4694 = vmatpush.msra.mxu0 %v4597
        %4695 = vmatpush.msra.mxu0 %v4593
        %4696 = vmatpush.msra.mxu0 %v4589
        %4697 = vmatmul.f32.gmra.mxu0 %v4619
        %v4698 = vpop.f32.mrf.mxu0
        %v4699 = vadd.f32 0.0, %v4698
        %4700 = vdwg.mxu0
        %4701 = vst [vmem:[%s241] sm:$0xff] %v4639
        %4702 = vst [vmem:[%s241 + $0x8] sm:$0xff] %v4659
        %4703 = vst [vmem:[%s241 + $0x10] sm:$0xff] %v4679
        %4704 = vst [vmem:[%s241 + $0x18] sm:$0xff] %v4699
        %s4705 = sand.u32 %s153, 1
        %s4706 = scalar_lea.sflag [#allocation4], %s4705
        %s4707 = sand.u32 %s153, 1
        %s4708 = smul.addr %s4707, 32
        %s4709 = scalar_lea.vmem [#allocation3], %s4708
        // Predicated region
        $region41: #{video_frontend.1} parent=39 // pred_check
          %p4710 = pneg %p163
        $region42: #{video_frontend.1} parent=39 // pred_check_branch
          %4712 = sbr.rel (%p4710) target = $region44
        $region43: #{video_frontend.1} parent=39 // pred_region
          %4714 = vsyncadd %s4706, 0
          %s4715 = smul.addr %s24, 4
          %s4716 = smul.addr %s23, 4
          %s4717 = sadd.s32 %s4715, %s4716
          %s4718 = smul.addr %s4717, 8
          %s4719 = scalar_lea.hbm %s5, %s4718
          %s4721 = sshll.u32 %s4709, 4
          %s4722 = int_to_ptr.vmem [resolvable:$true] %s4721
          %s4723 = sshll.u32 %s4719, 4
          %s4724 = int_to_ptr.hbm [resolvable:$true] %s4723
          %4726 = dma.vmem_to_hbm [thread:$0]  %s4722, 512, %s4724, %s4706
        $region44: #{video_frontend.1} parent=39 // pred_fallthru
          _
      $region40: #{video_frontend.1} parent=5 // pred_fallthru
        _
      %p4727 = scmp.le.s32.totalorder 2, %s14
      // Predicated region
      $region45: #{video_frontend.1} parent=5 // pred_check
        %p4728 = pneg %p4727
      $region46: #{video_frontend.1} parent=5 // pred_check_branch
        %4730 = sbr.rel (%p4728) target = $region48
      $region47: #{video_frontend.1} parent=5 // pred_region
        %s4731 = ssub.s32 %s14, 2
        // Predicated region
        $region49: #{video_frontend.1} parent=47 // pred_check
          %p4732 = pneg %p169
        $region50: #{video_frontend.1} parent=47 // pred_check_branch
          %4734 = sbr.rel (%p4732) target = $region52
        $region51: #{video_frontend.1} parent=47 // pred_region
          %s4735 = sand.u32 %s154, 1
          %s4736 = scalar_lea.sflag [#allocation4], %s4735
          %s4737 = sand.u32 %s154, 1
          %s4738 = smul.addr %s4737, 32
          %s4739 = scalar_lea.vmem [#allocation3], %s4738
          %4741 = dma.done %s4736, 512
        $region52: #{video_frontend.1} parent=47 // pred_fallthru
          _
      $region48: #{video_frontend.1} parent=5 // pred_fallthru
        _
    $region6: #{video_frontend.1} parent=1 // loop_footer
      %s18 = sadd.s32 1, %s14
    $region7: #{video_frontend.1} parent=1 // loop_footer_branch
      %13 = sbr.rel target = $region3
    $region8: #{video_frontend.1} parent=1 // loop_exit
      _
    %4742 = vsyncpa [#allocation4], 1
    %s4743 = scalar_lea.sflag [#allocation4], 1
    %4744 = vsyncpa %s4743, 1

</llo_original>
